<compile_context>
chip_gen: v7x
topology: tpu7x:2x2x1
jax: 0.10.0
libtpu: 0.0.40
codegen_flags: <defaults>
</compile_context>

<pallas_src>
import functools

import numpy as np
import jax
import jax.numpy as jnp
from jax.experimental import pallas as pl
from jax.experimental.pallas import tpu as pltpu


def _round_up(n, m):
    return ((n + m - 1) // m) * m


@functools.lru_cache(maxsize=1)
def _vmem_limit_bytes():
    # ~3/4 of physical VMEM, capped at 100 MiB (v5e/v6e: 128 MiB, v7x: 64 MiB).
    cap = 64 * 1024 * 1024
    try:
        info_fn = getattr(pltpu, "get_tpu_info", None)
        if info_fn is not None:
            cap = int(getattr(info_fn(), "vmem_capacity_bytes", cap))
    except Exception:
        pass
    return int(min((cap * 3) // 4, 100 * 1024 * 1024))


# ---------------------------------------------------------------------------
# Pass 1: fused conv (tap-accumulated matmuls over a VMEM-resident image)
# ---------------------------------------------------------------------------
def _fused_conv_kernel(*refs, tap_offsets, mout_p, add_bias, apply_lrelu,
                       need_stats, neg_slope):
    """One batch image per grid step.

    refs: x, w, [bias], [mask], y, [stats]
      x     (1, Mtot_p, Cs)  bf16 : flattened (padded / space-to-depth) image
      w     (T, Cs, Cop)     bf16 : VMEM-resident per-tap weights
      bias  (1, Cop)         f32
      mask  (Mout_p, 1)      f32  : 1.0 on valid output rows (for BN stats)
      y     (1, Mout_p, Cop)      : conv output rows (over-computed columns
                                    are sliced off by the wrapper)
      stats (1, 8, Cop)      f32  : row 0 = per-channel sum, row 1 = sum of sq
    """
    i = 0
    x_ref = refs[i]; i += 1
    w_ref = refs[i]; i += 1
    bias_ref = None
    if add_bias:
        bias_ref = refs[i]; i += 1
    mask_ref = None
    if need_stats:
        mask_ref = refs[i]; i += 1
    y_ref = refs[i]; i += 1
    stats_ref = refs[i] if need_stats else None

    # T shifted views of the same resident rows -> T MXU dots, f32 accumulate.
    acc = None
    for t, d in enumerate(tap_offsets):
        a = x_ref[0, pl.ds(d, mout_p), :]                    # (Mout_p, Cs)
        part = jnp.dot(a, w_ref[t], preferred_element_type=jnp.float32)
        acc = part if acc is None else acc + part

    y = acc
    if add_bias:
        y = y + bias_ref[...]
    if apply_lrelu:
        y = jnp.where(y >= 0.0, y, neg_slope * y)
    y_ref[0, :, :] = y.astype(y_ref.dtype)

    if need_stats:
        yv = acc * mask_ref[...]                             # zero invalid rows
        stats_ref[0, 0:1, :] = jnp.sum(yv, axis=0, keepdims=True)
        stats_ref[0, 1:2, :] = jnp.sum(yv * acc, axis=0, keepdims=True)


def _fused_conv(x_flat, w_taps, bias_row, mask_col, *, tap_offsets, mout_p,
                add_bias, apply_lrelu, need_stats, out_dtype, neg_slope=0.01):
    nb, mtot_p, cs = x_flat.shape
    tnum, cs_w, cop = w_taps.shape
    assert cs == cs_w and len(tap_offsets) == tnum

    kernel = functools.partial(
        _fused_conv_kernel, tap_offsets=tuple(int(d) for d in tap_offsets),
        mout_p=mout_p, add_bias=add_bias, apply_lrelu=apply_lrelu,
        need_stats=need_stats, neg_slope=neg_slope)

    in_specs = [
        pl.BlockSpec((1, mtot_p, cs), lambda i: (i, 0, 0)),
        pl.BlockSpec((tnum, cs, cop), lambda i: (0, 0, 0)),   # resident weight
    ]
    inputs = [x_flat, w_taps]
    if add_bias:
        in_specs.append(pl.BlockSpec((1, cop), lambda i: (0, 0)))
        inputs.append(bias_row)
    if need_stats:
        in_specs.append(pl.BlockSpec((mout_p, 1), lambda i: (0, 0)))
        inputs.append(mask_col)

    out_shapes = [jax.ShapeDtypeStruct((nb, mout_p, cop), out_dtype)]
    out_specs = [pl.BlockSpec((1, mout_p, cop), lambda i: (i, 0, 0))]
    if need_stats:
        out_shapes.append(jax.ShapeDtypeStruct((nb, 8, cop), jnp.float32))
        out_specs.append(pl.BlockSpec((1, 8, cop), lambda i: (i, 0, 0)))

    flops = 2 * nb * mout_p * cs * cop * tnum
    bytes_accessed = int(
        x_flat.size * x_flat.dtype.itemsize
        + w_taps.size * w_taps.dtype.itemsize
        + nb * mout_p * cop * jnp.dtype(out_dtype).itemsize
        + (nb * 8 * cop * 4 if need_stats else 0))
    cost = pl.CostEstimate(flops=int(flops), transcendentals=0,
                           bytes_accessed=bytes_accessed)

    # TODO(synk): add a K/Cout-tiled fallback (and optional fp8 weights on
    # v7x) for layers whose resident weight would exceed the VMEM budget;
    # all DCGAN-sized layers fit comfortably.
    return pl.pallas_call(
        kernel,
        out_shape=tuple(out_shapes) if need_stats else out_shapes[0],
        grid=(nb,),
        in_specs=in_specs,
        out_specs=tuple(out_specs) if need_stats else out_specs[0],
        compiler_params=pltpu.CompilerParams(
            dimension_semantics=("parallel",),   # batch -> both TCs on v7x
            vmem_limit_bytes=_vmem_limit_bytes()),
        cost_estimate=cost,
    )(*inputs)


# ---------------------------------------------------------------------------
# Pass 2 (BN layers only): fused scale/shift + LeakyReLU, large row tiles
# ---------------------------------------------------------------------------
def _bn_lrelu_kernel(y_ref, scale_ref, shift_ref, out_ref, *, neg_slope):
    y = y_ref[...].astype(jnp.float32) * scale_ref[...] + shift_ref[...]
    out_ref[...] = jnp.where(y >= 0.0, y, neg_slope * y).astype(out_ref.dtype)


def _bn_lrelu_apply(y2d, scale_row, shift_row, *, out_dtype, neg_slope=0.01):
    r, cop = y2d.shape
    # Memory-bound elementwise op: big tiles amortize per-grid-step overhead.
    if r <= 2048:
        tm = r
    else:
        tm = next(c for c in (2048, 1024, 512, 256, 128, 64, 32, 16, 8)
                  if r % c == 0)
    return pl.pallas_call(
        functools.partial(_bn_lrelu_kernel, neg_slope=neg_slope),
        out_shape=jax.ShapeDtypeStruct((r, cop), out_dtype),
        grid=(r // tm,),
        in_specs=[pl.BlockSpec((tm, cop), lambda i: (i, 0)),
                  pl.BlockSpec((1, cop), lambda i: (0, 0)),
                  pl.BlockSpec((1, cop), lambda i: (0, 0))],
        out_specs=pl.BlockSpec((tm, cop), lambda i: (i, 0)),
        compiler_params=pltpu.CompilerParams(
            dimension_semantics=("parallel",),
            vmem_limit_bytes=_vmem_limit_bytes()),
    )(y2d, scale_row, shift_row)


# ---------------------------------------------------------------------------
# Wrapper-side layout prep (one ~1x pass; no k*k patch blow-up)
# ---------------------------------------------------------------------------
def _prep_input(x_nhwc, *, pad, stride, kernel_size):
    """Spatial zero-pad, optional space-to-depth(2) (so a 4x4/stride-2 conv
    becomes a 2x2/stride-1 conv with 4x channels ordered (di, dj, c)),
    flatten (H, W) into rows, zero-pad the row count for the tap windows.
    # TODO(synk): fold this layout pass into the conv kernel with strided
    # VMEM loads to save one wrapper-side read+write of the activation.
    """
    if pad:
        x_nhwc = jnp.pad(x_nhwc, ((0, 0), (pad, pad), (pad, pad), (0, 0)))
    n, hp, wp, c = x_nhwc.shape
    if stride == 2:
        assert hp % 2 == 0 and wp % 2 == 0
        x = x_nhwc.reshape(n, hp // 2, 2, wp // 2, 2, c)
        x = jnp.transpose(x, (0, 1, 3, 2, 4, 5))
        x = x.reshape(n, hp // 2, wp // 2, 4 * c)
        hs, ws, cs = hp // 2, wp // 2, 4 * c
        keff = kernel_size // 2
    else:
        x = x_nhwc
        hs, ws, cs = hp, wp, c
        keff = kernel_size
    oh, ow = hs - keff + 1, ws - keff + 1
    mout = oh * ws                      # over-compute: columns [ow, ws) of each
                                        # flattened row are garbage, sliced later
    mout_p = _round_up(mout, 16)        # bf16-friendly sublane multiple
    d_max = (keff - 1) * ws + (keff - 1)
    mtot_p = _round_up(mout_p + d_max, 16)
    xf = x.reshape(n, hs * ws, cs)
    if mtot_p > hs * ws:
        xf = jnp.pad(xf, ((0, 0), (0, mtot_p - hs * ws), (0, 0)))
    taps = [pi * ws + pj for pi in range(keff) for pj in range(keff)]
    return xf, taps, dict(oh=oh, ow=ow, ws=ws, mout=mout, mout_p=mout_p)


def _valid_row_mask(mout, mout_p, ws, ow):
    m = np.zeros((mout_p, 1), np.float32)
    for r in range(mout):
        if (r % ws) < ow:
            m[r, 0] = 1.0
    return jnp.asarray(m)


# ---------------------------------------------------------------------------
# Model
# ---------------------------------------------------------------------------
class DCGANDiscriminatorPallas:
    LRELU_SLOPE = 0.01       # torch nn.LeakyReLU default
    BN_EPS = 1e-5

    def __init__(self, input_scale, output_scale, out_channels,
                 in_channels=3, base_channels=128, key=None):
        self.num_downsample = int(np.log2(input_scale // output_scale))
        self.in_channels = in_channels
        self.out_channels = out_channels
        key = jax.random.PRNGKey(0) if key is None else key

        def conv_init(k, cin, cout, ksz=4):
            k1, k2 = jax.random.split(k)
            fan_in = cin * ksz * ksz
            bound = 1.0 / np.sqrt(fan_in)
            w = jax.random.uniform(k1, (cout, cin, ksz, ksz), jnp.float32,
                                   -bound, bound)
            b = jax.random.uniform(k2, (cout,), jnp.float32, -bound, bound)
            return w, b

        def embed_cin(w, cin_eff):
            cout, cin, kh, kw = w.shape
            return (jnp.zeros((cout, cin_eff, kh, kw), jnp.float32)
                    .at[:, :cin].set(w))

        def prep_stride2(w, cin_eff):
            # OIHW -> (T=4 taps (pi,pj), 4*cin_eff channels (di,dj,c), Cop)
            # bf16, matching the space-to-depth layout of the activation.
            cout = w.shape[0]
            cop = _round_up(cout, 128)
            we = embed_cin(w, cin_eff).reshape(cout, cin_eff, 2, 2, 2, 2)
            we = jnp.transpose(we, (2, 4, 3, 5, 1, 0))   # (pi,pj,di,dj,c,co)
            we = we.reshape(4, 4 * cin_eff, cout)
            we = jnp.pad(we, ((0, 0), (0, 0), (0, cop - cout)))
            return we.astype(jnp.bfloat16), cop

        def prep_stride1(w, cin_eff):
            cout, _, kh, kw = w.shape
            cop = _round_up(cout, 128)
            we = embed_cin(w, cin_eff)
            we = jnp.transpose(we, (2, 3, 1, 0)).reshape(kh * kw, cin_eff, cout)
            we = jnp.pad(we, ((0, 0), (0, 0), (0, cop - cout)))
            return we.astype(jnp.bfloat16), cop

        self.cin0_p = _round_up(in_channels, 8)
        prev_cp = self.cin0_p           # channel count the activation carries
        curr_true = in_channels
        self.down = []
        for i in range(self.num_downsample):
            cout = base_channels * 2 ** i
            key, sub = jax.random.split(key)
            w, b = conv_init(sub, curr_true, cout)
            w_taps, cop = prep_stride2(w, prev_cp)
            self.down.append(dict(
                w=w, b=b, cout=cout, cop=cop, cin_eff=prev_cp,
                use_bn=(i != 0), w_taps=w_taps,
                bias_row=jnp.zeros((1, cop), jnp.float32).at[0, :cout].set(b),
                gamma=jnp.ones((cout,), jnp.float32),
                beta=jnp.zeros((cout,), jnp.float32),
                gamma_pad=jnp.zeros((cop,), jnp.float32).at[:cout].set(1.0),
                beta_pad=jnp.zeros((cop,), jnp.float32)))
            prev_cp = cop               # padded (zero) channels flow onward
            curr_true = cout

        key, sub = jax.random.split(key)
        w, b = conv_init(sub, curr_true, out_channels)
        w_taps, cop = prep_stride1(w, prev_cp)
        self.out_layer = dict(
            w=w, b=b, cout=out_channels, cop=cop, cin_eff=prev_cp,
            w_taps=w_taps,
            bias_row=(jnp.zeros((1, cop), jnp.float32)
                      .at[0, :out_channels].set(b)))

    def __call__(self, x_nchw):
        n = x_nchw.shape[0]
        x = jnp.transpose(x_nchw, (0, 2, 3, 1)).astype(jnp.bfloat16)   # NHWC
        if self.cin0_p > self.in_channels:
            x = jnp.pad(x, ((0, 0), (0, 0), (0, 0),
                            (0, self.cin0_p - self.in_channels)))

        slope = self.LRELU_SLOPE
        for p in self.down:
            xf, taps, meta = _prep_input(x, pad=1, stride=2, kernel_size=4)
            nb = xf.shape[0]
            oh, ow, ws = meta["oh"], meta["ow"], meta["ws"]
            mout, mout_p = meta["mout"], meta["mout_p"]
            if p["use_bn"]:
                # Pass 1: fused conv, bf16 y_pre + f32 per-image stats.
                # Bias skipped (exactly cancelled by the batch-mean).
                mask = _valid_row_mask(mout, mout_p, ws, ow)
                y_pre, stats = _fused_conv(
                    xf, p["w_taps"], None, mask, tap_offsets=taps,
                    mout_p=mout_p, add_bias=False, apply_lrelu=False,
                    need_stats=True, out_dtype=jnp.bfloat16)
                cnt = float(nb * oh * ow)
                s = jnp.sum(stats[:, 0, :], axis=0)
                ss = jnp.sum(stats[:, 1, :], axis=0)
                mean = s / cnt
                var = jnp.maximum(ss / cnt - mean * mean, 0.0)
                scale = p["gamma_pad"] * jax.lax.rsqrt(var + self.BN_EPS)
                shift = p["beta_pad"] - mean * scale
                # Pass 2: fused scale/shift + LeakyReLU.
                y2 = _bn_lrelu_apply(
                    y_pre.reshape(nb * mout_p, p["cop"]),
                    scale.reshape(1, -1), shift.reshape(1, -1),
                    out_dtype=jnp.bfloat16, neg_slope=slope)
                y = y2.reshape(nb, mout_p, p["cop"])
            else:
                y = _fused_conv(
                    xf, p["w_taps"], p["bias_row"], None, tap_offsets=taps,
                    mout_p=mout_p, add_bias=True, apply_lrelu=True,
                    need_stats=False, out_dtype=jnp.bfloat16, neg_slope=slope)
            # Strip over-computed columns; channels stay padded (exact zeros)
            # so no channel slicing is needed between layers.
            x = y[:, :mout].reshape(nb, oh, ws, p["cop"])[:, :, :ow, :]

        # Output conv: 4x4, stride 1, no padding, no activation.
        p = self.out_layer
        xf, taps, meta = _prep_input(x, pad=0, stride=1, kernel_size=4)
        nb = xf.shape[0]
        oh, ow, ws = meta["oh"], meta["ow"], meta["ws"]
        mout, mout_p = meta["mout"], meta["mout_p"]
        y = _fused_conv(xf, p["w_taps"], p["bias_row"], None, tap_offsets=taps,
                        mout_p=mout_p, add_bias=True, apply_lrelu=False,
                        need_stats=False, out_dtype=jnp.float32)
        y = y[:, :mout].reshape(nb, oh, ws, p["cop"])[:, :, :ow, :p["cout"]]
        y = jnp.transpose(y, (0, 3, 1, 2))          # NCHW to match torch view
        return y.reshape(n, -1)


# ---------------------------------------------------------------------------
# Pure-JAX reference (bf16 conv operands / f32 elementwise) for validation
# ---------------------------------------------------------------------------
def reference_forward(model, x_nchw):
    x = x_nchw.astype(jnp.float32)
    slope = model.LRELU_SLOPE
    for p in model.down:
        y = jax.lax.conv_general_dilated(
            x.astype(jnp.bfloat16), p["w"].astype(jnp.bfloat16),
            window_strides=(2, 2), padding=((1, 1), (1, 1)),
            dimension_numbers=("NCHW", "OIHW", "NCHW"),
            preferred_element_type=jnp.float32)
        y = y + p["b"][None, :, None, None]
        if p["use_bn"]:
            mean = jnp.mean(y, axis=(0, 2, 3), keepdims=True)
            var = jnp.mean(jnp.square(y - mean), axis=(0, 2, 3), keepdims=True)
            y = (y - mean) * jax.lax.rsqrt(var + model.BN_EPS)
            y = (y * p["gamma"][None, :, None, None]
                 + p["beta"][None, :, None, None])
        x = jnp.where(y >= 0, y, slope * y).astype(jnp.float32)
    p = model.out_layer
    y = jax.lax.conv_general_dilated(
        x.astype(jnp.bfloat16), p["w"].astype(jnp.bfloat16),
        window_strides=(1, 1), padding=((0, 0), (0, 0)),
        dimension_numbers=("NCHW", "OIHW", "NCHW"),
        preferred_element_type=jnp.float32)
    y = y + p["b"][None, :, None, None]
    return y.reshape(y.shape[0], -1)


if __name__ == "__main__":
    # Small shapes consistent with the module: input_scale=16, output_scale=4,
    # in_channels=3, base_channels=8, out_channels=1  ->  x: (2, 3, 16, 16)
    key = jax.random.PRNGKey(0)
    k_x, k_p = jax.random.split(key)
    x = jax.random.normal(k_x, (2, 3, 16, 16), jnp.float32)

    model = DCGANDiscriminatorPallas(input_scale=16, output_scale=4,
                                     out_channels=1, in_channels=3,
                                     base_channels=8, key=k_p)

    fwd = jax.jit(model.__call__)
    out = jax.block_until_ready(fwd(x))                      # (2, 1)
    ref = jax.block_until_ready(reference_forward(model, x))

    assert out.shape == (2, 1), out.shape
    # bf16 MXU operands / bf16 inter-layer activations -> bf16-level tolerance.
    np.testing.assert_allclose(np.asarray(out, dtype=np.float32),
                               np.asarray(ref, dtype=np.float32),
                               rtol=2e-2, atol=2e-2)
    print("KERNEL_OK")
</pallas_src>

<mosaic_0001>
module attributes {stable_mosaic.version = 11 : i64} {
  func.func @_fused_conv_kernel(%arg0: i32, %arg1: memref<1x96x32xbf16, #tpu.memory_space<vmem>>, %arg2: memref<4x32x128xbf16, #tpu.memory_space<vmem>>, %arg3: memref<1x128xf32, #tpu.memory_space<vmem>>, %arg4: memref<1x80x128xbf16, #tpu.memory_space<vmem>>) attributes {dimension_semantics = [#tpu.dimension_semantics<parallel>], iteration_bounds = array<i64: 2>, scalar_prefetch = 0 : i64, scratch_operands = 0 : i64, tpu.core_type = #tpu.core_type<tc>, window_params = [{transform_indices = @transform_0, window_bounds = array<i64: 1, 96, 32>}, {pipeline_mode = #tpu.pipeline_mode<synchronous>, transform_indices = @transform_1, window_bounds = array<i64: 4, 32, 128>}, {pipeline_mode = #tpu.pipeline_mode<synchronous>, transform_indices = @transform_2, window_bounds = array<i64: 1, 128>}, {transform_indices = @transform_3, window_bounds = array<i64: 1, 80, 128>}]} {
    %c0 = arith.constant 0 : index
    %c0_0 = arith.constant 0 : index
    %c0_1 = arith.constant 0 : index
    %0 = vector.load %arg1[%c0, %c0_0, %c0_1] : memref<1x96x32xbf16, #tpu.memory_space<vmem>>, vector<1x80x32xbf16>
    %1 = vector.shape_cast %0 : vector<1x80x32xbf16> to vector<80x32xbf16>
    %c0_2 = arith.constant 0 : index
    %c0_3 = arith.constant 0 : index
    %c0_4 = arith.constant 0 : index
    %2 = vector.load %arg2[%c0_2, %c0_3, %c0_4] : memref<4x32x128xbf16, #tpu.memory_space<vmem>>, vector<1x32x128xbf16>
    %3 = vector.shape_cast %2 : vector<1x32x128xbf16> to vector<32x128xbf16>
    %cst = arith.constant dense<0.000000e+00> : vector<80x128xf32>
    %4 = tpu.matmul %1, %3, %cst {dimension_numbers = #tpu.dot_dimension_numbers<[1], [0], [0], [1], [0, 0, 1, 1], [], []>} : vector<80x32xbf16>, vector<32x128xbf16>, vector<80x128xf32> -> vector<80x128xf32>
    %c0_5 = arith.constant 0 : index
    %c1 = arith.constant 1 : index
    %c0_6 = arith.constant 0 : index
    %5 = vector.load %arg1[%c0_5, %c1, %c0_6] : memref<1x96x32xbf16, #tpu.memory_space<vmem>>, vector<1x80x32xbf16>
    %6 = vector.shape_cast %5 : vector<1x80x32xbf16> to vector<80x32xbf16>
    %c1_7 = arith.constant 1 : index
    %c0_8 = arith.constant 0 : index
    %c0_9 = arith.constant 0 : index
    %7 = vector.load %arg2[%c1_7, %c0_8, %c0_9] : memref<4x32x128xbf16, #tpu.memory_space<vmem>>, vector<1x32x128xbf16>
    %8 = vector.shape_cast %7 : vector<1x32x128xbf16> to vector<32x128xbf16>
    %cst_10 = arith.constant dense<0.000000e+00> : vector<80x128xf32>
    %9 = tpu.matmul %6, %8, %cst_10 {dimension_numbers = #tpu.dot_dimension_numbers<[1], [0], [0], [1], [0, 0, 1, 1], [], []>} : vector<80x32xbf16>, vector<32x128xbf16>, vector<80x128xf32> -> vector<80x128xf32>
    %10 = arith.addf %4, %9 : vector<80x128xf32>
    %c0_11 = arith.constant 0 : index
    %c9 = arith.constant 9 : index
    %c0_12 = arith.constant 0 : index
    %11 = vector.load %arg1[%c0_11, %c9, %c0_12] : memref<1x96x32xbf16, #tpu.memory_space<vmem>>, vector<1x80x32xbf16>
    %12 = vector.shape_cast %11 : vector<1x80x32xbf16> to vector<80x32xbf16>
    %c2 = arith.constant 2 : index
    %c0_13 = arith.constant 0 : index
    %c0_14 = arith.constant 0 : index
    %13 = vector.load %arg2[%c2, %c0_13, %c0_14] : memref<4x32x128xbf16, #tpu.memory_space<vmem>>, vector<1x32x128xbf16>
    %14 = vector.shape_cast %13 : vector<1x32x128xbf16> to vector<32x128xbf16>
    %cst_15 = arith.constant dense<0.000000e+00> : vector<80x128xf32>
    %15 = tpu.matmul %12, %14, %cst_15 {dimension_numbers = #tpu.dot_dimension_numbers<[1], [0], [0], [1], [0, 0, 1, 1], [], []>} : vector<80x32xbf16>, vector<32x128xbf16>, vector<80x128xf32> -> vector<80x128xf32>
    %16 = arith.addf %10, %15 : vector<80x128xf32>
    %c0_16 = arith.constant 0 : index
    %c10 = arith.constant 10 : index
    %c0_17 = arith.constant 0 : index
    %17 = vector.load %arg1[%c0_16, %c10, %c0_17] : memref<1x96x32xbf16, #tpu.memory_space<vmem>>, vector<1x80x32xbf16>
    %18 = vector.shape_cast %17 : vector<1x80x32xbf16> to vector<80x32xbf16>
    %c3 = arith.constant 3 : index
    %c0_18 = arith.constant 0 : index
    %c0_19 = arith.constant 0 : index
    %19 = vector.load %arg2[%c3, %c0_18, %c0_19] : memref<4x32x128xbf16, #tpu.memory_space<vmem>>, vector<1x32x128xbf16>
    %20 = vector.shape_cast %19 : vector<1x32x128xbf16> to vector<32x128xbf16>
    %cst_20 = arith.constant dense<0.000000e+00> : vector<80x128xf32>
    %21 = tpu.matmul %18, %20, %cst_20 {dimension_numbers = #tpu.dot_dimension_numbers<[1], [0], [0], [1], [0, 0, 1, 1], [], []>} : vector<80x32xbf16>, vector<32x128xbf16>, vector<80x128xf32> -> vector<80x128xf32>
    %22 = arith.addf %16, %21 : vector<80x128xf32>
    %c0_21 = arith.constant 0 : index
    %c0_22 = arith.constant 0 : index
    %23 = vector.load %arg3[%c0_21, %c0_22] : memref<1x128xf32, #tpu.memory_space<vmem>>, vector<1x128xf32>
    %24 = vector.broadcast %23 : vector<1x128xf32> to vector<80x128xf32>
    %25 = arith.addf %22, %24 : vector<80x128xf32>
    %cst_23 = arith.constant 0.000000e+00 : f32
    %26 = vector.broadcast %cst_23 : f32 to vector<80x128xf32>
    %27 = arith.cmpf oge, %25, %26 : vector<80x128xf32>
    %cst_24 = arith.constant 0.00999999977 : f32
    %28 = vector.broadcast %cst_24 : f32 to vector<80x128xf32>
    %29 = arith.mulf %28, %25 : vector<80x128xf32>
    %30 = arith.select %27, %25, %29 : vector<80x128xi1>, vector<80x128xf32>
    %31 = arith.truncf %30 : vector<80x128xf32> to vector<80x128xbf16>
    %c0_25 = arith.constant 0 : index
    %c0_26 = arith.constant 0 : index
    %c0_27 = arith.constant 0 : index
    %32 = vector.load %arg4[%c0_25, %c0_26, %c0_27] : memref<1x80x128xbf16, #tpu.memory_space<vmem>>, vector<1x80x128xbf16>
    %33 = vector.shape_cast %32 : vector<1x80x128xbf16> to vector<80x128xbf16>
    %34 = vector.shape_cast %31 : vector<80x128xbf16> to vector<1x80x128xbf16>
    tpu.vector_store %arg4[%c0_25, %c0_26, %c0_27], %34 {strides = array<i32>} : memref<1x80x128xbf16, #tpu.memory_space<vmem>>, vector<1x80x128xbf16>,
    return
  }
  func.func @transform_0(%arg0: i32) -> (i32, i32, i32) {
    %c0_i32 = arith.constant 0 : i32
    %c0_i32_0 = arith.constant 0 : i32
    %c0_i32_1 = arith.constant 0 : i32
    return %arg0, %c0_i32, %c0_i32_0 : i32, i32, i32
  }
  func.func @transform_1(%arg0: i32) -> (i32, i32, i32) {
    %c0_i32 = arith.constant 0 : i32
    %c0_i32_0 = arith.constant 0 : i32
    %c0_i32_1 = arith.constant 0 : i32
    %c0_i32_2 = arith.constant 0 : i32
    return %c0_i32, %c0_i32_0, %c0_i32_1 : i32, i32, i32
  }
  func.func @transform_2(%arg0: i32) -> (i32, i32) {
    %c0_i32 = arith.constant 0 : i32
    %c0_i32_0 = arith.constant 0 : i32
    %c0_i32_1 = arith.constant 0 : i32
    return %c0_i32, %c0_i32_0 : i32, i32
  }
  func.func @transform_3(%arg0: i32) -> (i32, i32, i32) {
    %c0_i32 = arith.constant 0 : i32
    %c0_i32_0 = arith.constant 0 : i32
    %c0_i32_1 = arith.constant 0 : i32
    return %arg0, %c0_i32, %c0_i32_0 : i32, i32, i32
  }
}

module attributes {stable_mosaic.version = 11 : i64} {
  func.func @_fused_conv_kernel(%arg0: i32, %arg1: memref<1x48x512xbf16, #tpu.memory_space<vmem>>, %arg2: memref<4x512x128xbf16, #tpu.memory_space<vmem>>, %arg3: memref<32x1xf32, #tpu.memory_space<vmem>>, %arg4: memref<1x32x128xbf16, #tpu.memory_space<vmem>>, %arg5: memref<1x8x128xf32, #tpu.memory_space<vmem>>) attributes {dimension_semantics = [#tpu.dimension_semantics<parallel>], iteration_bounds = array<i64: 2>, scalar_prefetch = 0 : i64, scratch_operands = 0 : i64, tpu.core_type = #tpu.core_type<tc>, window_params = [{transform_indices = @transform_0, window_bounds = array<i64: 1, 48, 512>}, {pipeline_mode = #tpu.pipeline_mode<synchronous>, transform_indices = @transform_1, window_bounds = array<i64: 4, 512, 128>}, {pipeline_mode = #tpu.pipeline_mode<synchronous>, transform_indices = @transform_2, window_bounds = array<i64: 32, 1>}, {transform_indices = @transform_3, window_bounds = array<i64: 1, 32, 128>}, {transform_indices = @transform_4, window_bounds = array<i64: 1, 8, 128>}]} {
    %c0 = arith.constant 0 : index
    %c0_0 = arith.constant 0 : index
    %c0_1 = arith.constant 0 : index
    %0 = vector.load %arg1[%c0, %c0_0, %c0_1] : memref<1x48x512xbf16, #tpu.memory_space<vmem>>, vector<1x32x512xbf16>
    %1 = vector.shape_cast %0 : vector<1x32x512xbf16> to vector<32x512xbf16>
    %c0_2 = arith.constant 0 : index
    %c0_3 = arith.constant 0 : index
    %c0_4 = arith.constant 0 : index
    %2 = vector.load %arg2[%c0_2, %c0_3, %c0_4] : memref<4x512x128xbf16, #tpu.memory_space<vmem>>, vector<1x512x128xbf16>
    %3 = vector.shape_cast %2 : vector<1x512x128xbf16> to vector<512x128xbf16>
    %cst = arith.constant dense<0.000000e+00> : vector<32x128xf32>
    %4 = tpu.matmul %1, %3, %cst {dimension_numbers = #tpu.dot_dimension_numbers<[1], [0], [0], [1], [0, 0, 1, 1], [], []>} : vector<32x512xbf16>, vector<512x128xbf16>, vector<32x128xf32> -> vector<32x128xf32>
    %c0_5 = arith.constant 0 : index
    %c1 = arith.constant 1 : index
    %c0_6 = arith.constant 0 : index
    %5 = vector.load %arg1[%c0_5, %c1, %c0_6] : memref<1x48x512xbf16, #tpu.memory_space<vmem>>, vector<1x32x512xbf16>
    %6 = vector.shape_cast %5 : vector<1x32x512xbf16> to vector<32x512xbf16>
    %c1_7 = arith.constant 1 : index
    %c0_8 = arith.constant 0 : index
    %c0_9 = arith.constant 0 : index
    %7 = vector.load %arg2[%c1_7, %c0_8, %c0_9] : memref<4x512x128xbf16, #tpu.memory_space<vmem>>, vector<1x512x128xbf16>
    %8 = vector.shape_cast %7 : vector<1x512x128xbf16> to vector<512x128xbf16>
    %cst_10 = arith.constant dense<0.000000e+00> : vector<32x128xf32>
    %9 = tpu.matmul %6, %8, %cst_10 {dimension_numbers = #tpu.dot_dimension_numbers<[1], [0], [0], [1], [0, 0, 1, 1], [], []>} : vector<32x512xbf16>, vector<512x128xbf16>, vector<32x128xf32> -> vector<32x128xf32>
    %10 = arith.addf %4, %9 : vector<32x128xf32>
    %c0_11 = arith.constant 0 : index
    %c5 = arith.constant 5 : index
    %c0_12 = arith.constant 0 : index
    %11 = vector.load %arg1[%c0_11, %c5, %c0_12] : memref<1x48x512xbf16, #tpu.memory_space<vmem>>, vector<1x32x512xbf16>
    %12 = vector.shape_cast %11 : vector<1x32x512xbf16> to vector<32x512xbf16>
    %c2 = arith.constant 2 : index
    %c0_13 = arith.constant 0 : index
    %c0_14 = arith.constant 0 : index
    %13 = vector.load %arg2[%c2, %c0_13, %c0_14] : memref<4x512x128xbf16, #tpu.memory_space<vmem>>, vector<1x512x128xbf16>
    %14 = vector.shape_cast %13 : vector<1x512x128xbf16> to vector<512x128xbf16>
    %cst_15 = arith.constant dense<0.000000e+00> : vector<32x128xf32>
    %15 = tpu.matmul %12, %14, %cst_15 {dimension_numbers = #tpu.dot_dimension_numbers<[1], [0], [0], [1], [0, 0, 1, 1], [], []>} : vector<32x512xbf16>, vector<512x128xbf16>, vector<32x128xf32> -> vector<32x128xf32>
    %16 = arith.addf %10, %15 : vector<32x128xf32>
    %c0_16 = arith.constant 0 : index
    %c6 = arith.constant 6 : index
    %c0_17 = arith.constant 0 : index
    %17 = vector.load %arg1[%c0_16, %c6, %c0_17] : memref<1x48x512xbf16, #tpu.memory_space<vmem>>, vector<1x32x512xbf16>
    %18 = vector.shape_cast %17 : vector<1x32x512xbf16> to vector<32x512xbf16>
    %c3 = arith.constant 3 : index
    %c0_18 = arith.constant 0 : index
    %c0_19 = arith.constant 0 : index
    %19 = vector.load %arg2[%c3, %c0_18, %c0_19] : memref<4x512x128xbf16, #tpu.memory_space<vmem>>, vector<1x512x128xbf16>
    %20 = vector.shape_cast %19 : vector<1x512x128xbf16> to vector<512x128xbf16>
    %cst_20 = arith.constant dense<0.000000e+00> : vector<32x128xf32>
    %21 = tpu.matmul %18, %20, %cst_20 {dimension_numbers = #tpu.dot_dimension_numbers<[1], [0], [0], [1], [0, 0, 1, 1], [], []>} : vector<32x512xbf16>, vector<512x128xbf16>, vector<32x128xf32> -> vector<32x128xf32>
    %22 = arith.addf %16, %21 : vector<32x128xf32>
    %23 = arith.truncf %22 : vector<32x128xf32> to vector<32x128xbf16>
    %c0_21 = arith.constant 0 : index
    %c0_22 = arith.constant 0 : index
    %c0_23 = arith.constant 0 : index
    %24 = vector.load %arg4[%c0_21, %c0_22, %c0_23] : memref<1x32x128xbf16, #tpu.memory_space<vmem>>, vector<1x32x128xbf16>
    %25 = vector.shape_cast %24 : vector<1x32x128xbf16> to vector<32x128xbf16>
    %26 = vector.shape_cast %23 : vector<32x128xbf16> to vector<1x32x128xbf16>
    tpu.vector_store %arg4[%c0_21, %c0_22, %c0_23], %26 {strides = array<i32>} : memref<1x32x128xbf16, #tpu.memory_space<vmem>>, vector<1x32x128xbf16>,
    %c0_24 = arith.constant 0 : index
    %c0_25 = arith.constant 0 : index
    %27 = vector.load %arg3[%c0_24, %c0_25] : memref<32x1xf32, #tpu.memory_space<vmem>>, vector<32x1xf32>
    %28 = vector.broadcast %27 : vector<32x1xf32> to vector<32x128xf32>
    %29 = arith.mulf %22, %28 : vector<32x128xf32>
    %cst_26 = arith.constant dense<0.000000e+00> : vector<128xf32>
    %30 = vector.multi_reduction <add>, %29, %cst_26 [0] : vector<32x128xf32> to vector<128xf32>
    %31 = vector.shape_cast %30 : vector<128xf32> to vector<1x128xf32>
    %c0_27 = arith.constant 0 : index
    %c0_28 = arith.constant 0 : index
    %c0_29 = arith.constant 0 : index
    %32 = vector.load %arg5[%c0_27, %c0_28, %c0_29] : memref<1x8x128xf32, #tpu.memory_space<vmem>>, vector<1x1x128xf32>
    %33 = vector.shape_cast %32 : vector<1x1x128xf32> to vector<1x128xf32>
    %34 = vector.shape_cast %31 : vector<1x128xf32> to vector<1x1x128xf32>
    tpu.vector_store %arg5[%c0_27, %c0_28, %c0_29], %34 {strides = array<i32>} : memref<1x8x128xf32, #tpu.memory_space<vmem>>, vector<1x1x128xf32>,
    %35 = arith.mulf %29, %22 : vector<32x128xf32>
    %cst_30 = arith.constant dense<0.000000e+00> : vector<128xf32>
    %36 = vector.multi_reduction <add>, %35, %cst_30 [0] : vector<32x128xf32> to vector<128xf32>
    %37 = vector.shape_cast %36 : vector<128xf32> to vector<1x128xf32>
    %c0_31 = arith.constant 0 : index
    %c1_32 = arith.constant 1 : index
    %c0_33 = arith.constant 0 : index
    %38 = vector.load %arg5[%c0_31, %c1_32, %c0_33] : memref<1x8x128xf32, #tpu.memory_space<vmem>>, vector<1x1x128xf32>
    %39 = vector.shape_cast %38 : vector<1x1x128xf32> to vector<1x128xf32>
    %40 = vector.shape_cast %37 : vector<1x128xf32> to vector<1x1x128xf32>
    tpu.vector_store %arg5[%c0_31, %c1_32, %c0_33], %40 {strides = array<i32>} : memref<1x8x128xf32, #tpu.memory_space<vmem>>, vector<1x1x128xf32>,
    return
  }
  func.func @transform_0(%arg0: i32) -> (i32, i32, i32) {
    %c0_i32 = arith.constant 0 : i32
    %c0_i32_0 = arith.constant 0 : i32
    %c0_i32_1 = arith.constant 0 : i32
    return %arg0, %c0_i32, %c0_i32_0 : i32, i32, i32
  }
  func.func @transform_1(%arg0: i32) -> (i32, i32, i32) {
    %c0_i32 = arith.constant 0 : i32
    %c0_i32_0 = arith.constant 0 : i32
    %c0_i32_1 = arith.constant 0 : i32
    %c0_i32_2 = arith.constant 0 : i32
    return %c0_i32, %c0_i32_0, %c0_i32_1 : i32, i32, i32
  }
  func.func @transform_2(%arg0: i32) -> (i32, i32) {
    %c0_i32 = arith.constant 0 : i32
    %c0_i32_0 = arith.constant 0 : i32
    %c0_i32_1 = arith.constant 0 : i32
    return %c0_i32, %c0_i32_0 : i32, i32
  }
  func.func @transform_3(%arg0: i32) -> (i32, i32, i32) {
    %c0_i32 = arith.constant 0 : i32
    %c0_i32_0 = arith.constant 0 : i32
    %c0_i32_1 = arith.constant 0 : i32
    return %arg0, %c0_i32, %c0_i32_0 : i32, i32, i32
  }
  func.func @transform_4(%arg0: i32) -> (i32, i32, i32) {
    %c0_i32 = arith.constant 0 : i32
    %c0_i32_0 = arith.constant 0 : i32
    %c0_i32_1 = arith.constant 0 : i32
    return %arg0, %c0_i32, %c0_i32_0 : i32, i32, i32
  }
}

module attributes {stable_mosaic.version = 11 : i64} {
  func.func @_bn_lrelu_kernel(%arg0: i32, %arg1: memref<64x128xbf16, #tpu.memory_space<vmem>>, %arg2: memref<1x128xf32, #tpu.memory_space<vmem>>, %arg3: memref<1x128xf32, #tpu.memory_space<vmem>>, %arg4: memref<64x128xbf16, #tpu.memory_space<vmem>>) attributes {dimension_semantics = [#tpu.dimension_semantics<parallel>], iteration_bounds = array<i64: 1>, scalar_prefetch = 0 : i64, scratch_operands = 0 : i64, tpu.core_type = #tpu.core_type<tc>, window_params = [{transform_indices = @transform_0, window_bounds = array<i64: 64, 128>}, {pipeline_mode = #tpu.pipeline_mode<synchronous>, transform_indices = @transform_1, window_bounds = array<i64: 1, 128>}, {pipeline_mode = #tpu.pipeline_mode<synchronous>, transform_indices = @transform_2, window_bounds = array<i64: 1, 128>}, {transform_indices = @transform_3, window_bounds = array<i64: 64, 128>}]} {
    %c0 = arith.constant 0 : index
    %c0_0 = arith.constant 0 : index
    %0 = vector.load %arg1[%c0, %c0_0] : memref<64x128xbf16, #tpu.memory_space<vmem>>, vector<64x128xbf16>
    %1 = arith.extf %0 : vector<64x128xbf16> to vector<64x128xf32>
    %c0_1 = arith.constant 0 : index
    %c0_2 = arith.constant 0 : index
    %2 = vector.load %arg2[%c0_1, %c0_2] : memref<1x128xf32, #tpu.memory_space<vmem>>, vector<1x128xf32>
    %3 = vector.broadcast %2 : vector<1x128xf32> to vector<64x128xf32>
    %4 = arith.mulf %1, %3 : vector<64x128xf32>
    %c0_3 = arith.constant 0 : index
    %c0_4 = arith.constant 0 : index
    %5 = vector.load %arg3[%c0_3, %c0_4] : memref<1x128xf32, #tpu.memory_space<vmem>>, vector<1x128xf32>
    %6 = vector.broadcast %5 : vector<1x128xf32> to vector<64x128xf32>
    %7 = arith.addf %4, %6 : vector<64x128xf32>
    %cst = arith.constant 0.000000e+00 : f32
    %8 = vector.broadcast %cst : f32 to vector<64x128xf32>
    %9 = arith.cmpf oge, %7, %8 : vector<64x128xf32>
    %cst_5 = arith.constant 0.00999999977 : f32
    %10 = vector.broadcast %cst_5 : f32 to vector<64x128xf32>
    %11 = arith.mulf %10, %7 : vector<64x128xf32>
    %12 = arith.select %9, %7, %11 : vector<64x128xi1>, vector<64x128xf32>
    %13 = arith.truncf %12 : vector<64x128xf32> to vector<64x128xbf16>
    %c0_6 = arith.constant 0 : index
    %c0_7 = arith.constant 0 : index
    %14 = vector.load %arg4[%c0_6, %c0_7] : memref<64x128xbf16, #tpu.memory_space<vmem>>, vector<64x128xbf16>
    tpu.vector_store %arg4[%c0_6, %c0_7], %13 {strides = array<i32>} : memref<64x128xbf16, #tpu.memory_space<vmem>>, vector<64x128xbf16>,
    return
  }
  func.func @transform_0(%arg0: i32) -> (i32, i32) {
    %c0_i32 = arith.constant 0 : i32
    %c0_i32_0 = arith.constant 0 : i32
    return %arg0, %c0_i32 : i32, i32
  }
  func.func @transform_1(%arg0: i32) -> (i32, i32) {
    %c0_i32 = arith.constant 0 : i32
    %c0_i32_0 = arith.constant 0 : i32
    %c0_i32_1 = arith.constant 0 : i32
    return %c0_i32, %c0_i32_0 : i32, i32
  }
  func.func @transform_2(%arg0: i32) -> (i32, i32) {
    %c0_i32 = arith.constant 0 : i32
    %c0_i32_0 = arith.constant 0 : i32
    %c0_i32_1 = arith.constant 0 : i32
    return %c0_i32, %c0_i32_0 : i32, i32
  }
  func.func @transform_3(%arg0: i32) -> (i32, i32) {
    %c0_i32 = arith.constant 0 : i32
    %c0_i32_0 = arith.constant 0 : i32
    return %arg0, %c0_i32 : i32, i32
  }
}

module attributes {stable_mosaic.version = 11 : i64} {
  func.func @_fused_conv_kernel(%arg0: i32, %arg1: memref<1x32x128xbf16, #tpu.memory_space<vmem>>, %arg2: memref<16x128x128xbf16, #tpu.memory_space<vmem>>, %arg3: memref<1x128xf32, #tpu.memory_space<vmem>>, %arg4: memref<1x16x128xf32, #tpu.memory_space<vmem>>) attributes {dimension_semantics = [#tpu.dimension_semantics<parallel>], iteration_bounds = array<i64: 2>, scalar_prefetch = 0 : i64, scratch_operands = 0 : i64, tpu.core_type = #tpu.core_type<tc>, window_params = [{transform_indices = @transform_0, window_bounds = array<i64: 1, 32, 128>}, {pipeline_mode = #tpu.pipeline_mode<synchronous>, transform_indices = @transform_1, window_bounds = array<i64: 16, 128, 128>}, {pipeline_mode = #tpu.pipeline_mode<synchronous>, transform_indices = @transform_2, window_bounds = array<i64: 1, 128>}, {transform_indices = @transform_3, window_bounds = array<i64: 1, 16, 128>}]} {
    %c0 = arith.constant 0 : index
    %c0_0 = arith.constant 0 : index
    %c0_1 = arith.constant 0 : index
    %0 = vector.load %arg1[%c0, %c0_0, %c0_1] : memref<1x32x128xbf16, #tpu.memory_space<vmem>>, vector<1x16x128xbf16>
    %1 = vector.shape_cast %0 : vector<1x16x128xbf16> to vector<16x128xbf16>
    %c0_2 = arith.constant 0 : index
    %c0_3 = arith.constant 0 : index
    %c0_4 = arith.constant 0 : index
    %2 = vector.load %arg2[%c0_2, %c0_3, %c0_4] : memref<16x128x128xbf16, #tpu.memory_space<vmem>>, vector<1x128x128xbf16>
    %3 = vector.shape_cast %2 : vector<1x128x128xbf16> to vector<128x128xbf16>
    %cst = arith.constant dense<0.000000e+00> : vector<16x128xf32>
    %4 = tpu.matmul %1, %3, %cst {dimension_numbers = #tpu.dot_dimension_numbers<[1], [0], [0], [1], [0, 0, 1, 1], [], []>} : vector<16x128xbf16>, vector<128x128xbf16>, vector<16x128xf32> -> vector<16x128xf32>
    %c0_5 = arith.constant 0 : index
    %c1 = arith.constant 1 : index
    %c0_6 = arith.constant 0 : index
    %5 = vector.load %arg1[%c0_5, %c1, %c0_6] : memref<1x32x128xbf16, #tpu.memory_space<vmem>>, vector<1x16x128xbf16>
    %6 = vector.shape_cast %5 : vector<1x16x128xbf16> to vector<16x128xbf16>
    %c1_7 = arith.constant 1 : index
    %c0_8 = arith.constant 0 : index
    %c0_9 = arith.constant 0 : index
    %7 = vector.load %arg2[%c1_7, %c0_8, %c0_9] : memref<16x128x128xbf16, #tpu.memory_space<vmem>>, vector<1x128x128xbf16>
    %8 = vector.shape_cast %7 : vector<1x128x128xbf16> to vector<128x128xbf16>
    %cst_10 = arith.constant dense<0.000000e+00> : vector<16x128xf32>
    %9 = tpu.matmul %6, %8, %cst_10 {dimension_numbers = #tpu.dot_dimension_numbers<[1], [0], [0], [1], [0, 0, 1, 1], [], []>} : vector<16x128xbf16>, vector<128x128xbf16>, vector<16x128xf32> -> vector<16x128xf32>
    %10 = arith.addf %4, %9 : vector<16x128xf32>
    %c0_11 = arith.constant 0 : index
    %c2 = arith.constant 2 : index
    %c0_12 = arith.constant 0 : index
    %11 = vector.load %arg1[%c0_11, %c2, %c0_12] : memref<1x32x128xbf16, #tpu.memory_space<vmem>>, vector<1x16x128xbf16>
    %12 = vector.shape_cast %11 : vector<1x16x128xbf16> to vector<16x128xbf16>
    %c2_13 = arith.constant 2 : index
    %c0_14 = arith.constant 0 : index
    %c0_15 = arith.constant 0 : index
    %13 = vector.load %arg2[%c2_13, %c0_14, %c0_15] : memref<16x128x128xbf16, #tpu.memory_space<vmem>>, vector<1x128x128xbf16>
    %14 = vector.shape_cast %13 : vector<1x128x128xbf16> to vector<128x128xbf16>
    %cst_16 = arith.constant dense<0.000000e+00> : vector<16x128xf32>
    %15 = tpu.matmul %12, %14, %cst_16 {dimension_numbers = #tpu.dot_dimension_numbers<[1], [0], [0], [1], [0, 0, 1, 1], [], []>} : vector<16x128xbf16>, vector<128x128xbf16>, vector<16x128xf32> -> vector<16x128xf32>
    %16 = arith.addf %10, %15 : vector<16x128xf32>
    %c0_17 = arith.constant 0 : index
    %c3 = arith.constant 3 : index
    %c0_18 = arith.constant 0 : index
    %17 = vector.load %arg1[%c0_17, %c3, %c0_18] : memref<1x32x128xbf16, #tpu.memory_space<vmem>>, vector<1x16x128xbf16>
    %18 = vector.shape_cast %17 : vector<1x16x128xbf16> to vector<16x128xbf16>
    %c3_19 = arith.constant 3 : index
    %c0_20 = arith.constant 0 : index
    %c0_21 = arith.constant 0 : index
    %19 = vector.load %arg2[%c3_19, %c0_20, %c0_21] : memref<16x128x128xbf16, #tpu.memory_space<vmem>>, vector<1x128x128xbf16>
    %20 = vector.shape_cast %19 : vector<1x128x128xbf16> to vector<128x128xbf16>
    %cst_22 = arith.constant dense<0.000000e+00> : vector<16x128xf32>
    %21 = tpu.matmul %18, %20, %cst_22 {dimension_numbers = #tpu.dot_dimension_numbers<[1], [0], [0], [1], [0, 0, 1, 1], [], []>} : vector<16x128xbf16>, vector<128x128xbf16>, vector<16x128xf32> -> vector<16x128xf32>
    %22 = arith.addf %16, %21 : vector<16x128xf32>
    %c0_23 = arith.constant 0 : index
    %c4 = arith.constant 4 : index
    %c0_24 = arith.constant 0 : index
    %23 = vector.load %arg1[%c0_23, %c4, %c0_24] : memref<1x32x128xbf16, #tpu.memory_space<vmem>>, vector<1x16x128xbf16>
    %24 = vector.shape_cast %23 : vector<1x16x128xbf16> to vector<16x128xbf16>
    %c4_25 = arith.constant 4 : index
    %c0_26 = arith.constant 0 : index
    %c0_27 = arith.constant 0 : index
    %25 = vector.load %arg2[%c4_25, %c0_26, %c0_27] : memref<16x128x128xbf16, #tpu.memory_space<vmem>>, vector<1x128x128xbf16>
    %26 = vector.shape_cast %25 : vector<1x128x128xbf16> to vector<128x128xbf16>
    %cst_28 = arith.constant dense<0.000000e+00> : vector<16x128xf32>
    %27 = tpu.matmul %24, %26, %cst_28 {dimension_numbers = #tpu.dot_dimension_numbers<[1], [0], [0], [1], [0, 0, 1, 1], [], []>} : vector<16x128xbf16>, vector<128x128xbf16>, vector<16x128xf32> -> vector<16x128xf32>
    %28 = arith.addf %22, %27 : vector<16x128xf32>
    %c0_29 = arith.constant 0 : index
    %c5 = arith.constant 5 : index
    %c0_30 = arith.constant 0 : index
    %29 = vector.load %arg1[%c0_29, %c5, %c0_30] : memref<1x32x128xbf16, #tpu.memory_space<vmem>>, vector<1x16x128xbf16>
    %30 = vector.shape_cast %29 : vector<1x16x128xbf16> to vector<16x128xbf16>
    %c5_31 = arith.constant 5 : index
    %c0_32 = arith.constant 0 : index
    %c0_33 = arith.constant 0 : index
    %31 = vector.load %arg2[%c5_31, %c0_32, %c0_33] : memref<16x128x128xbf16, #tpu.memory_space<vmem>>, vector<1x128x128xbf16>
    %32 = vector.shape_cast %31 : vector<1x128x128xbf16> to vector<128x128xbf16>
    %cst_34 = arith.constant dense<0.000000e+00> : vector<16x128xf32>
    %33 = tpu.matmul %30, %32, %cst_34 {dimension_numbers = #tpu.dot_dimension_numbers<[1], [0], [0], [1], [0, 0, 1, 1], [], []>} : vector<16x128xbf16>, vector<128x128xbf16>, vector<16x128xf32> -> vector<16x128xf32>
    %34 = arith.addf %28, %33 : vector<16x128xf32>
    %c0_35 = arith.constant 0 : index
    %c6 = arith.constant 6 : index
    %c0_36 = arith.constant 0 : index
    %35 = vector.load %arg1[%c0_35, %c6, %c0_36] : memref<1x32x128xbf16, #tpu.memory_space<vmem>>, vector<1x16x128xbf16>
    %36 = vector.shape_cast %35 : vector<1x16x128xbf16> to vector<16x128xbf16>
    %c6_37 = arith.constant 6 : index
    %c0_38 = arith.constant 0 : index
    %c0_39 = arith.constant 0 : index
    %37 = vector.load %arg2[%c6_37, %c0_38, %c0_39] : memref<16x128x128xbf16, #tpu.memory_space<vmem>>, vector<1x128x128xbf16>
    %38 = vector.shape_cast %37 : vector<1x128x128xbf16> to vector<128x128xbf16>
    %cst_40 = arith.constant dense<0.000000e+00> : vector<16x128xf32>
    %39 = tpu.matmul %36, %38, %cst_40 {dimension_numbers = #tpu.dot_dimension_numbers<[1], [0], [0], [1], [0, 0, 1, 1], [], []>} : vector<16x128xbf16>, vector<128x128xbf16>, vector<16x128xf32> -> vector<16x128xf32>
    %40 = arith.addf %34, %39 : vector<16x128xf32>
    %c0_41 = arith.constant 0 : index
    %c7 = arith.constant 7 : index
    %c0_42 = arith.constant 0 : index
    %41 = vector.load %arg1[%c0_41, %c7, %c0_42] : memref<1x32x128xbf16, #tpu.memory_space<vmem>>, vector<1x16x128xbf16>
    %42 = vector.shape_cast %41 : vector<1x16x128xbf16> to vector<16x128xbf16>
    %c7_43 = arith.constant 7 : index
    %c0_44 = arith.constant 0 : index
    %c0_45 = arith.constant 0 : index
    %43 = vector.load %arg2[%c7_43, %c0_44, %c0_45] : memref<16x128x128xbf16, #tpu.memory_space<vmem>>, vector<1x128x128xbf16>
    %44 = vector.shape_cast %43 : vector<1x128x128xbf16> to vector<128x128xbf16>
    %cst_46 = arith.constant dense<0.000000e+00> : vector<16x128xf32>
    %45 = tpu.matmul %42, %44, %cst_46 {dimension_numbers = #tpu.dot_dimension_numbers<[1], [0], [0], [1], [0, 0, 1, 1], [], []>} : vector<16x128xbf16>, vector<128x128xbf16>, vector<16x128xf32> -> vector<16x128xf32>
    %46 = arith.addf %40, %45 : vector<16x128xf32>
    %c0_47 = arith.constant 0 : index
    %c8 = arith.constant 8 : index
    %c0_48 = arith.constant 0 : index
    %47 = vector.load %arg1[%c0_47, %c8, %c0_48] : memref<1x32x128xbf16, #tpu.memory_space<vmem>>, vector<1x16x128xbf16>
    %48 = vector.shape_cast %47 : vector<1x16x128xbf16> to vector<16x128xbf16>
    %c8_49 = arith.constant 8 : index
    %c0_50 = arith.constant 0 : index
    %c0_51 = arith.constant 0 : index
    %49 = vector.load %arg2[%c8_49, %c0_50, %c0_51] : memref<16x128x128xbf16, #tpu.memory_space<vmem>>, vector<1x128x128xbf16>
    %50 = vector.shape_cast %49 : vector<1x128x128xbf16> to vector<128x128xbf16>
    %cst_52 = arith.constant dense<0.000000e+00> : vector<16x128xf32>
    %51 = tpu.matmul %48, %50, %cst_52 {dimension_numbers = #tpu.dot_dimension_numbers<[1], [0], [0], [1], [0, 0, 1, 1], [], []>} : vector<16x128xbf16>, vector<128x128xbf16>, vector<16x128xf32> -> vector<16x128xf32>
    %52 = arith.addf %46, %51 : vector<16x128xf32>
    %c0_53 = arith.constant 0 : index
    %c9 = arith.constant 9 : index
    %c0_54 = arith.constant 0 : index
    %53 = vector.load %arg1[%c0_53, %c9, %c0_54] : memref<1x32x128xbf16, #tpu.memory_space<vmem>>, vector<1x16x128xbf16>
    %54 = vector.shape_cast %53 : vector<1x16x128xbf16> to vector<16x128xbf16>
    %c9_55 = arith.constant 9 : index
    %c0_56 = arith.constant 0 : index
    %c0_57 = arith.constant 0 : index
    %55 = vector.load %arg2[%c9_55, %c0_56, %c0_57] : memref<16x128x128xbf16, #tpu.memory_space<vmem>>, vector<1x128x128xbf16>
    %56 = vector.shape_cast %55 : vector<1x128x128xbf16> to vector<128x128xbf16>
    %cst_58 = arith.constant dense<0.000000e+00> : vector<16x128xf32>
    %57 = tpu.matmul %54, %56, %cst_58 {dimension_numbers = #tpu.dot_dimension_numbers<[1], [0], [0], [1], [0, 0, 1, 1], [], []>} : vector<16x128xbf16>, vector<128x128xbf16>, vector<16x128xf32> -> vector<16x128xf32>
    %58 = arith.addf %52, %57 : vector<16x128xf32>
    %c0_59 = arith.constant 0 : index
    %c10 = arith.constant 10 : index
    %c0_60 = arith.constant 0 : index
    %59 = vector.load %arg1[%c0_59, %c10, %c0_60] : memref<1x32x128xbf16, #tpu.memory_space<vmem>>, vector<1x16x128xbf16>
    %60 = vector.shape_cast %59 : vector<1x16x128xbf16> to vector<16x128xbf16>
    %c10_61 = arith.constant 10 : index
    %c0_62 = arith.constant 0 : index
    %c0_63 = arith.constant 0 : index
    %61 = vector.load %arg2[%c10_61, %c0_62, %c0_63] : memref<16x128x128xbf16, #tpu.memory_space<vmem>>, vector<1x128x128xbf16>
    %62 = vector.shape_cast %61 : vector<1x128x128xbf16> to vector<128x128xbf16>
    %cst_64 = arith.constant dense<0.000000e+00> : vector<16x128xf32>
    %63 = tpu.matmul %60, %62, %cst_64 {dimension_numbers = #tpu.dot_dimension_numbers<[1], [0], [0], [1], [0, 0, 1, 1], [], []>} : vector<16x128xbf16>, vector<128x128xbf16>, vector<16x128xf32> -> vector<16x128xf32>
    %64 = arith.addf %58, %63 : vector<16x128xf32>
    %c0_65 = arith.constant 0 : index
    %c11 = arith.constant 11 : index
    %c0_66 = arith.constant 0 : index
    %65 = vector.load %arg1[%c0_65, %c11, %c0_66] : memref<1x32x128xbf16, #tpu.memory_space<vmem>>, vector<1x16x128xbf16>
    %66 = vector.shape_cast %65 : vector<1x16x128xbf16> to vector<16x128xbf16>
    %c11_67 = arith.constant 11 : index
    %c0_68 = arith.constant 0 : index
    %c0_69 = arith.constant 0 : index
    %67 = vector.load %arg2[%c11_67, %c0_68, %c0_69] : memref<16x128x128xbf16, #tpu.memory_space<vmem>>, vector<1x128x128xbf16>
    %68 = vector.shape_cast %67 : vector<1x128x128xbf16> to vector<128x128xbf16>
    %cst_70 = arith.constant dense<0.000000e+00> : vector<16x128xf32>
    %69 = tpu.matmul %66, %68, %cst_70 {dimension_numbers = #tpu.dot_dimension_numbers<[1], [0], [0], [1], [0, 0, 1, 1], [], []>} : vector<16x128xbf16>, vector<128x128xbf16>, vector<16x128xf32> -> vector<16x128xf32>
    %70 = arith.addf %64, %69 : vector<16x128xf32>
    %c0_71 = arith.constant 0 : index
    %c12 = arith.constant 12 : index
    %c0_72 = arith.constant 0 : index
    %71 = vector.load %arg1[%c0_71, %c12, %c0_72] : memref<1x32x128xbf16, #tpu.memory_space<vmem>>, vector<1x16x128xbf16>
    %72 = vector.shape_cast %71 : vector<1x16x128xbf16> to vector<16x128xbf16>
    %c12_73 = arith.constant 12 : index
    %c0_74 = arith.constant 0 : index
    %c0_75 = arith.constant 0 : index
    %73 = vector.load %arg2[%c12_73, %c0_74, %c0_75] : memref<16x128x128xbf16, #tpu.memory_space<vmem>>, vector<1x128x128xbf16>
    %74 = vector.shape_cast %73 : vector<1x128x128xbf16> to vector<128x128xbf16>
    %cst_76 = arith.constant dense<0.000000e+00> : vector<16x128xf32>
    %75 = tpu.matmul %72, %74, %cst_76 {dimension_numbers = #tpu.dot_dimension_numbers<[1], [0], [0], [1], [0, 0, 1, 1], [], []>} : vector<16x128xbf16>, vector<128x128xbf16>, vector<16x128xf32> -> vector<16x128xf32>
    %76 = arith.addf %70, %75 : vector<16x128xf32>
    %c0_77 = arith.constant 0 : index
    %c13 = arith.constant 13 : index
    %c0_78 = arith.constant 0 : index
    %77 = vector.load %arg1[%c0_77, %c13, %c0_78] : memref<1x32x128xbf16, #tpu.memory_space<vmem>>, vector<1x16x128xbf16>
    %78 = vector.shape_cast %77 : vector<1x16x128xbf16> to vector<16x128xbf16>
    %c13_79 = arith.constant 13 : index
    %c0_80 = arith.constant 0 : index
    %c0_81 = arith.constant 0 : index
    %79 = vector.load %arg2[%c13_79, %c0_80, %c0_81] : memref<16x128x128xbf16, #tpu.memory_space<vmem>>, vector<1x128x128xbf16>
    %80 = vector.shape_cast %79 : vector<1x128x128xbf16> to vector<128x128xbf16>
    %cst_82 = arith.constant dense<0.000000e+00> : vector<16x128xf32>
    %81 = tpu.matmul %78, %80, %cst_82 {dimension_numbers = #tpu.dot_dimension_numbers<[1], [0], [0], [1], [0, 0, 1, 1], [], []>} : vector<16x128xbf16>, vector<128x128xbf16>, vector<16x128xf32> -> vector<16x128xf32>
    %82 = arith.addf %76, %81 : vector<16x128xf32>
    %c0_83 = arith.constant 0 : index
    %c14 = arith.constant 14 : index
    %c0_84 = arith.constant 0 : index
    %83 = vector.load %arg1[%c0_83, %c14, %c0_84] : memref<1x32x128xbf16, #tpu.memory_space<vmem>>, vector<1x16x128xbf16>
    %84 = vector.shape_cast %83 : vector<1x16x128xbf16> to vector<16x128xbf16>
    %c14_85 = arith.constant 14 : index
    %c0_86 = arith.constant 0 : index
    %c0_87 = arith.constant 0 : index
    %85 = vector.load %arg2[%c14_85, %c0_86, %c0_87] : memref<16x128x128xbf16, #tpu.memory_space<vmem>>, vector<1x128x128xbf16>
    %86 = vector.shape_cast %85 : vector<1x128x128xbf16> to vector<128x128xbf16>
    %cst_88 = arith.constant dense<0.000000e+00> : vector<16x128xf32>
    %87 = tpu.matmul %84, %86, %cst_88 {dimension_numbers = #tpu.dot_dimension_numbers<[1], [0], [0], [1], [0, 0, 1, 1], [], []>} : vector<16x128xbf16>, vector<128x128xbf16>, vector<16x128xf32> -> vector<16x128xf32>
    %88 = arith.addf %82, %87 : vector<16x128xf32>
    %c0_89 = arith.constant 0 : index
    %c15 = arith.constant 15 : index
    %c0_90 = arith.constant 0 : index
    %89 = vector.load %arg1[%c0_89, %c15, %c0_90] : memref<1x32x128xbf16, #tpu.memory_space<vmem>>, vector<1x16x128xbf16>
    %90 = vector.shape_cast %89 : vector<1x16x128xbf16> to vector<16x128xbf16>
    %c15_91 = arith.constant 15 : index
    %c0_92 = arith.constant 0 : index
    %c0_93 = arith.constant 0 : index
    %91 = vector.load %arg2[%c15_91, %c0_92, %c0_93] : memref<16x128x128xbf16, #tpu.memory_space<vmem>>, vector<1x128x128xbf16>
    %92 = vector.shape_cast %91 : vector<1x128x128xbf16> to vector<128x128xbf16>
    %cst_94 = arith.constant dense<0.000000e+00> : vector<16x128xf32>
    %93 = tpu.matmul %90, %92, %cst_94 {dimension_numbers = #tpu.dot_dimension_numbers<[1], [0], [0], [1], [0, 0, 1, 1], [], []>} : vector<16x128xbf16>, vector<128x128xbf16>, vector<16x128xf32> -> vector<16x128xf32>
    %94 = arith.addf %88, %93 : vector<16x128xf32>
    %c0_95 = arith.constant 0 : index
    %c0_96 = arith.constant 0 : index
    %95 = vector.load %arg3[%c0_95, %c0_96] : memref<1x128xf32, #tpu.memory_space<vmem>>, vector<1x128xf32>
    %96 = vector.broadcast %95 : vector<1x128xf32> to vector<16x128xf32>
    %97 = arith.addf %94, %96 : vector<16x128xf32>
    %c0_97 = arith.constant 0 : index
    %c0_98 = arith.constant 0 : index
    %c0_99 = arith.constant 0 : index
    %98 = vector.load %arg4[%c0_97, %c0_98, %c0_99] : memref<1x16x128xf32, #tpu.memory_space<vmem>>, vector<1x16x128xf32>
    %99 = vector.shape_cast %98 : vector<1x16x128xf32> to vector<16x128xf32>
    %100 = vector.shape_cast %97 : vector<16x128xf32> to vector<1x16x128xf32>
    tpu.vector_store %arg4[%c0_97, %c0_98, %c0_99], %100 {strides = array<i32>} : memref<1x16x128xf32, #tpu.memory_space<vmem>>, vector<1x16x128xf32>,
    return
  }
  func.func @transform_0(%arg0: i32) -> (i32, i32, i32) {
    %c0_i32 = arith.constant 0 : i32
    %c0_i32_0 = arith.constant 0 : i32
    %c0_i32_1 = arith.constant 0 : i32
    return %arg0, %c0_i32, %c0_i32_0 : i32, i32, i32
  }
  func.func @transform_1(%arg0: i32) -> (i32, i32, i32) {
    %c0_i32 = arith.constant 0 : i32
    %c0_i32_0 = arith.constant 0 : i32
    %c0_i32_1 = arith.constant 0 : i32
    %c0_i32_2 = arith.constant 0 : i32
    return %c0_i32, %c0_i32_0, %c0_i32_1 : i32, i32, i32
  }
  func.func @transform_2(%arg0: i32) -> (i32, i32) {
    %c0_i32 = arith.constant 0 : i32
    %c0_i32_0 = arith.constant 0 : i32
    %c0_i32_1 = arith.constant 0 : i32
    return %c0_i32, %c0_i32_0 : i32, i32
  }
  func.func @transform_3(%arg0: i32) -> (i32, i32, i32) {
    %c0_i32 = arith.constant 0 : i32
    %c0_i32_0 = arith.constant 0 : i32
    %c0_i32_1 = arith.constant 0 : i32
    return %arg0, %c0_i32, %c0_i32_0 : i32, i32, i32
  }
}

</mosaic_0001>

<llo_original>
// kernel: a_call__.4
$region0: #{a_call__.4}
  #allocation0 [shape = 'u32[]', space=smem, size = 0x4, offset = 0x4, fixed_abs, tag = 'smem constant byte address 0x4 - core index']
  #allocation1 [shape = 'u32[144,128]{1,0:T(1,128)}', space=vmem, size = 0x12000, scoped, tag = 'internal scratch']
  %s0 = inlined_call_operand.vmem [shape: bf16[2,96,32], index: 0, kind: input, shape index: {}]
  %s1 = inlined_call_operand.vmem [shape: bf16[4,32,128], index: 1, kind: input, shape index: {}]
  %s2 = inlined_call_operand.vmem [shape: f32[1,128], index: 2, kind: input, shape index: {}]
  %s3 = inlined_call_operand.vmem [shape: bf16[2,80,128], index: 3, kind: output, shape index: {}]
  %s4 = sld [smem:[#allocation0]]
  $region45: #{a_call__.4} parent=0
    _
  %s6 = ssub.s32 1, %s4
  %s7 = scalar_select 0, %s6, %s4
  loop: start=0, step=1, limit=4
  $region2: #{a_call__.4} parent=0 // loop_pre_header
    _
  $region3: #{a_call__.4} parent=0 // loop_header
    %s9 = sphi 0, %s13
    %p10 = scmp.ge.s32.totalorder %s9, 4
    %s19 = sphi 0, %s21
    %s22 = sphi 0, %s19
    %s23 = sphi 0, %s22
    %s39 = sphi 0, %s23
    %s43 = sphi 0, %s43
    %s45 = sphi 0, %s43
    %s46 = sphi 0, %s45
    %s60 = sphi 0, %s46
    %s64 = sphi 0, %s64
    %s66 = sphi 0, %s64
    %s67 = sphi 0, %s66
    %s81 = sphi 0, %s67
    %s87 = sphi 0, %s89
    %s90 = sphi 0, %s87
    %s91 = sphi 0, %s90
    %s107 = sphi 0, %s91
  $region4: #{a_call__.4} parent=0 // loop_header_branch
    %12 = sbr.rel (%p10) target = $region8
  $region5: #{a_call__.4} parent=0 // loop_body
    %s14 = ssub.s32 %s9, 1
    %s15 = ssub.s32 %s9, 2
    %s16 = sadd.s32 %s9, 1
    %s17 = ssub.s32 %s9, %s16
    %p18 = scmp.eq.s32.totalorder %s17, 0
    %s20 = sadd.s32 %s19, 1
    %s21 = scalar_select %p18, %s19, %s20
    %p24 = pneg %p18
    %p25 = scmp.eq.s32.totalorder %s9, 1
    %p26 = por %p24, %p25
    %p27 = scmp.ne.s32.totalorder %s19, %s22
    %p28 = scmp.eq.s32.totalorder %s9, 0
    %p29 = por %p27, %p28
    %p30 = scmp.ne.s32.totalorder %s19, %s22
    %p31 = scmp.eq.s32.totalorder %s14, 1
    %p32 = por %p30, %p31
    %p33 = scmp.ne.s32.totalorder %s22, %s23
    %p34 = scmp.eq.s32.totalorder %s14, 0
    %p35 = por %p33, %p34
    %p36 = scmp.ne.s32.totalorder %s22, %s23
    %p37 = scmp.eq.s32.totalorder %s15, 1
    %p38 = por %p36, %p37
    %p40 = scmp.ne.s32.totalorder %s23, %s39
    %p41 = scmp.eq.s32.totalorder %s15, 0
    %p42 = por %p40, %p41
    %s44 = sadd.s32 %s43, 1
    %p47 = scmp.eq.s32.totalorder %s9, 1
    %p48 = scmp.ne.s32.totalorder %s43, %s45
    %p49 = scmp.eq.s32.totalorder %s9, 0
    %p50 = por %p48, %p49
    %p51 = scmp.ne.s32.totalorder %s43, %s45
    %p52 = scmp.eq.s32.totalorder %s14, 1
    %p53 = por %p51, %p52
    %p54 = scmp.ne.s32.totalorder %s45, %s46
    %p55 = scmp.eq.s32.totalorder %s14, 0
    %p56 = por %p54, %p55
    %p57 = scmp.ne.s32.totalorder %s45, %s46
    %p58 = scmp.eq.s32.totalorder %s15, 1
    %p59 = por %p57, %p58
    %p61 = scmp.ne.s32.totalorder %s46, %s60
    %p62 = scmp.eq.s32.totalorder %s15, 0
    %p63 = por %p61, %p62
    %s65 = sadd.s32 %s64, 1
    %p68 = scmp.eq.s32.totalorder %s9, 1
    %p69 = scmp.ne.s32.totalorder %s64, %s66
    %p70 = scmp.eq.s32.totalorder %s9, 0
    %p71 = por %p69, %p70
    %p72 = scmp.ne.s32.totalorder %s64, %s66
    %p73 = scmp.eq.s32.totalorder %s14, 1
    %p74 = por %p72, %p73
    %p75 = scmp.ne.s32.totalorder %s66, %s67
    %p76 = scmp.eq.s32.totalorder %s14, 0
    %p77 = por %p75, %p76
    %p78 = scmp.ne.s32.totalorder %s66, %s67
    %p79 = scmp.eq.s32.totalorder %s15, 1
    %p80 = por %p78, %p79
    %p82 = scmp.ne.s32.totalorder %s67, %s81
    %p83 = scmp.eq.s32.totalorder %s15, 0
    %p84 = por %p82, %p83
    %s85 = ssub.s32 %s9, %s16
    %p86 = scmp.eq.s32.totalorder %s85, 0
    %s88 = sadd.s32 %s87, 1
    %s89 = scalar_select %p86, %s87, %s88
    %p92 = pneg %p86
    %p93 = scmp.eq.s32.totalorder %s9, 1
    %p94 = por %p92, %p93
    %p95 = scmp.ne.s32.totalorder %s87, %s90
    %p96 = scmp.eq.s32.totalorder %s9, 0
    %p97 = por %p95, %p96
    %p98 = scmp.ne.s32.totalorder %s87, %s90
    %p99 = scmp.eq.s32.totalorder %s14, 1
    %p100 = por %p98, %p99
    %p101 = scmp.ne.s32.totalorder %s90, %s91
    %p102 = scmp.eq.s32.totalorder %s14, 0
    %p103 = por %p101, %p102
    %p104 = scmp.ne.s32.totalorder %s90, %s91
    %p105 = scmp.eq.s32.totalorder %s15, 1
    %p106 = por %p104, %p105
    %p108 = scmp.ne.s32.totalorder %s91, %s107
    %p109 = scmp.eq.s32.totalorder %s15, 0
    %p110 = por %p108, %p109
    %p111 = scmp.le.s32.totalorder 1, %s9
    %p112 = scmp.lt.s32.totalorder %s9, 3
    %p113 = pnand %p111, %p112
    %p114 = pneg %p113
    // Predicated region
    $region9: #{a_call__.4} parent=5 // pred_check
      _
    $region10: #{a_call__.4} parent=5 // pred_check_branch
      %116 = sbr.rel (%p113) target = $region12
    $region11: #{a_call__.4} parent=5 // pred_region
      %s117 = ssub.s32 %s9, 1
      // Predicated region
      $region13: #{a_call__.4} parent=11 // pred_check
        %p118 = pneg %p56
      $region14: #{a_call__.4} parent=11 // pred_check_branch
        %120 = sbr.rel (%p118) target = $region16
      $region15: #{a_call__.4} parent=11 // pred_region
        _
      $region16: #{a_call__.4} parent=11 // pred_fallthru
        _
      // Predicated region
      $region17: #{a_call__.4} parent=11 // pred_check
        %p121 = pneg %p77
      $region18: #{a_call__.4} parent=11 // pred_check_branch
        %123 = sbr.rel (%p121) target = $region20
      $region19: #{a_call__.4} parent=11 // pred_region
        _
      $region20: #{a_call__.4} parent=11 // pred_fallthru
        _
    $region12: #{a_call__.4} parent=5 // pred_fallthru
      _
    %p124 = scmp.lt.s32.totalorder %s9, 2
    // Predicated region
    $region21: #{a_call__.4} parent=5 // pred_check
      %p125 = pneg %p124
    $region22: #{a_call__.4} parent=5 // pred_check_branch
      %127 = sbr.rel (%p125) target = $region24
    $region23: #{a_call__.4} parent=5 // pred_region
      // Predicated region
      $region25: #{a_call__.4} parent=23 // pred_check
        %p128 = pneg %p29
      $region26: #{a_call__.4} parent=23 // pred_check_branch
        %130 = sbr.rel (%p128) target = $region28
      $region27: #{a_call__.4} parent=23 // pred_region
        %p131 = scmp.lt.s32.totalorder %s9, 1
        %s132 = scalar_select %p131, %s9, 1
        %s133 = smul.addr %s132, 12
        %s134 = smul.addr %s133, 4
        %s135 = scalar_lea.vmem %s0, %s134
      $region28: #{a_call__.4} parent=23 // pred_fallthru
        _
    $region24: #{a_call__.4} parent=5 // pred_fallthru
      _
    %p136 = scmp.le.s32.totalorder 1, %s9
    %p137 = scmp.lt.s32.totalorder %s9, 3
    %p138 = pnand %p136, %p137
    %p139 = pneg %p138
    // Predicated region
    $region29: #{a_call__.4} parent=5 // pred_check
      _
    $region30: #{a_call__.4} parent=5 // pred_check_branch
      %141 = sbr.rel (%p138) target = $region32
    $region31: #{a_call__.4} parent=5 // pred_region
      %s142 = ssub.s32 %s9, 1
      %p143 = scmp.lt.s32.totalorder %s14, 1
      %s144 = scalar_select %p143, %s14, 1
      %s145 = smul.addr %s144, 12
      %s146 = smul.addr %s145, 4
      %s147 = scalar_lea.vmem %s0, %s146
      %p148 = pneg %p35
      %p149 = pneg %p32
      %p150 = pneg %p56
      %p151 = pneg %p53
      %p152 = pneg %p77
      %p153 = pneg %p74
      %p154 = pneg %p103
      %p155 = pneg %p100
      %p156 = scmp.lt.s32.totalorder %s14, 1
      %s157 = scalar_select %p156, %s14, 1
      %s158 = smul.addr %s157, 10
      %s159 = smul.addr %s158, 4
      %s160 = scalar_lea.vmem %s3, %s159
      %p161 = scmp.lt.s32.totalorder %s14, 1
      %s162 = scalar_select %p161, %s14, 1
      %s163 = smul.addr %s162, 12
      %s164 = smul.addr %s163, 4
      %s165 = scalar_lea.vmem %s0, %s164
      %p166 = scmp.lt.s32.totalorder %s14, 1
      %s167 = scalar_select %p166, %s14, 1
      %s168 = smul.addr %s167, 10
      %s169 = smul.addr %s168, 4
      %s170 = scalar_lea.vmem %s3, %s169
      %v172 = vld [vmem:[%s165] sm:$0xf]
      %v173 = vld [vmem:[%s165 + $0x4] sm:$0xf]
      %v174 = vld [vmem:[%s165 + $0x8] sm:$0xf]
      %v175 = vld [vmem:[%s165 + $0xc] sm:$0xf]
      %v176 = vld [vmem:[%s165 + $0x10] sm:$0xf]
      %v177 = vld [vmem:[%s165 + $0x14] sm:$0xf]
      %v178 = vld [vmem:[%s165 + $0x18] sm:$0xf]
      %v179 = vld [vmem:[%s165 + $0x1c] sm:$0xf]
      %v180 = vld [vmem:[%s165 + $0x20] sm:$0xf]
      %v181 = vld [vmem:[%s165 + $0x24] sm:$0xf]
      %v182 = vld [vmem:[%s1] sm:$0xf]
      %v183 = vld [vmem:[%s1 + $0x4] sm:$0xf]
      %v184 = vld [vmem:[%s1 + $0x8] sm:$0xf]
      %v185 = vld [vmem:[%s1 + $0xc] sm:$0xf]
      %v186 = vld [vmem:[%s165 + $0x28] sm:$0x1]
      %s187 = scalar_lea.vmem %s1, 16
      %v188 = vld [vmem:[%s187] sm:$0xf]
      %v189 = vld [vmem:[%s187 + $0x4] sm:$0xf]
      %v190 = vld [vmem:[%s187 + $0x8] sm:$0xf]
      %v191 = vld [vmem:[%s187 + $0xc] sm:$0xf]
      %v203 = vunpack.c.l.b16 %v172
      %v204 = vunpack.c.l.b16 %v173
      %v205 = vunpack.c.l.b16 %v174
      %v206 = vunpack.c.l.b16 %v175
      %v207 = vunpack.c.l.b16 %v176
      %v208 = vunpack.c.l.b16 %v177
      %v209 = vunpack.c.l.b16 %v178
      %v210 = vunpack.c.l.b16 %v179
      %v211 = vunpack.c.l.b16 %v180
      %v212 = vunpack.c.l.b16 %v181
      %v213 = vunpack.c.l.b16 %v186
      %v214 = vpack.c.b16 %v204, %v203
      %v215 = vpack.c.b16 %v206, %v205
      %v216 = vpack.c.b16 %v208, %v207
      %v217 = vpack.c.b16 %v210, %v209
      %v218 = vpack.c.b16 %v212, %v211
      %v219 = vpack.c.b16 %v213, %v213
      %vm220 = vsmask.f32 7424
      %v222 = vshrl.u32 %v214, 16
      %v224 = vshll.u32 %v214, 16
      %v226 = vrot.slane %v224, 1
      %v227 = vor.u32 %v222, %v226
      %v229 = vshll.u32 %v215, 16
      %v231 = vrot.slane %v229, 1
      %v232 = vsel %vm220, %v227, %v231
      %v233 = vshrl.u32 %v215, 16
      %v235 = vor.u32 %v233, %v231
      %v237 = vshll.u32 %v216, 16
      %v239 = vrot.slane %v237, 1
      %v240 = vsel %vm220, %v235, %v239
      %v241 = vshrl.u32 %v216, 16
      %v243 = vor.u32 %v241, %v239
      %v245 = vshll.u32 %v217, 16
      %v247 = vrot.slane %v245, 1
      %v248 = vsel %vm220, %v243, %v247
      %v249 = vshrl.u32 %v217, 16
      %v251 = vor.u32 %v249, %v247
      %v253 = vshll.u32 %v218, 16
      %v255 = vrot.slane %v253, 1
      %v256 = vsel %vm220, %v251, %v255
      %v257 = vshrl.u32 %v218, 16
      %v259 = vor.u32 %v257, %v255
      %v261 = vshll.u32 %v219, 16
      %v263 = vrot.slane %v261, 1
      %v264 = vsel %vm220, %v259, %v263
      %v269 = vunpack.c.l.b16 %v188
      %v270 = vunpack.c.l.b16 %v189
      %v271 = vunpack.c.l.b16 %v190
      %v272 = vunpack.c.l.b16 %v191
      %v273 = vpack.c.b16 %v270, %v269
      %v274 = vpack.c.b16 %v272, %v271
      %vm277 = vcmask 261120
      %v279 = vsel %vm277, %v232, 0
      %v282 = vsel %vm277, %v240, 0
      %v285 = vsel %vm277, %v248, 0
      %v288 = vsel %vm277, %v256, 0
      %v291 = vsel %vm277, %v264, 0
      %293 = vmatprep.subr.bf16.mxu0 0
      %294 = vmatpush1.bf16.msra.mxu0 %v273
      %295 = vmatprep.subr.bf16.mxu0 0
      %296 = vmatpush1.bf16.msra.mxu0 %v274
      %297 = vmatprep.subr.bf16.mxu0 0
      %298 = vmatpush1.bf16.msra.mxu0 0
      %299 = vmatprep.subr.bf16.mxu0 0
      %300 = vmatpush1.bf16.msra.mxu0 0
      %301 = vmatprep.subr.bf16.mxu0 0
      %302 = vmatpush1.bf16.msra.mxu0 0
      %303 = vmatprep.subr.bf16.mxu0 0
      %304 = vmatpush1.bf16.msra.mxu0 0
      %305 = vmatprep.subr.bf16.mxu0 0
      %306 = vmatpush1.bf16.msra.mxu0 0
      %307 = vmatprep.subr.bf16.mxu0 0
      %308 = vmatpush1.bf16.msra.mxu0 0
      %309 = vmatprep.subr.bf16.mxu0 0
      %310 = vmatpush1.bf16.msra.mxu0 0
      %311 = vmatprep.subr.bf16.mxu0 0
      %312 = vmatpush1.bf16.msra.mxu0 0
      %313 = vmatprep.subr.bf16.mxu0 0
      %314 = vmatpush1.bf16.msra.mxu0 0
      %315 = vmatprep.subr.bf16.mxu0 0
      %316 = vmatpush1.bf16.msra.mxu0 0
      %317 = vmatprep.subr.bf16.mxu0 0
      %318 = vmatpush1.bf16.msra.mxu0 0
      %319 = vmatprep.subr.bf16.mxu0 0
      %320 = vmatpush1.bf16.msra.mxu0 0
      %321 = vmatprep.subr.bf16.mxu0 0
      %322 = vmatpush1.bf16.msra.mxu0 0
      %323 = vmatprep.subr.bf16.mxu0 0
      %324 = vmatpush1.bf16.msra.mxu0 0
      %325 = vmatprep.mubr.bf16.mxu0 0
      %326 = vmatmul.mubr.bf16.gmra.mrb[0].mxu0 %v279
      %v327 = vpop.f32.mrb[0].mxu0
      %v328 = vadd.f32 0.0, %v327
      %v329 = vpop.f32.mrb[0].mxu0
      %v330 = vpop.f32.mrb[0].mxu0
      %v331 = vadd.f32 0.0, %v330
      %v332 = vpop.f32.mrb[0].mxu0
      %333 = vmatprep.mubr.bf16.mxu0 0
      %334 = vmatmul.mubr.bf16.gmra.mrb[0].mxu0 %v282
      %v335 = vpop.f32.mrb[0].mxu0
      %v336 = vadd.f32 0.0, %v335
      %v337 = vpop.f32.mrb[0].mxu0
      %v338 = vpop.f32.mrb[0].mxu0
      %v339 = vadd.f32 0.0, %v338
      %v340 = vpop.f32.mrb[0].mxu0
      %341 = vmatprep.mubr.bf16.mxu0 0
      %342 = vmatmul.mubr.bf16.gmra.mrb[0].mxu0 %v285
      %v343 = vpop.f32.mrb[0].mxu0
      %v344 = vadd.f32 0.0, %v343
      %v345 = vpop.f32.mrb[0].mxu0
      %v346 = vpop.f32.mrb[0].mxu0
      %v347 = vadd.f32 0.0, %v346
      %v348 = vpop.f32.mrb[0].mxu0
      %349 = vmatprep.mubr.bf16.mxu0 0
      %350 = vmatmul.mubr.bf16.gmra.mrb[0].mxu0 %v288
      %v351 = vpop.f32.mrb[0].mxu0
      %v352 = vadd.f32 0.0, %v351
      %v353 = vpop.f32.mrb[0].mxu0
      %v354 = vpop.f32.mrb[0].mxu0
      %v355 = vadd.f32 0.0, %v354
      %v356 = vpop.f32.mrb[0].mxu0
      %357 = vmatprep.mubr.bf16.mxu0 0
      %358 = vmatmul.mubr.bf16.gmra.mrb[0].mxu0 %v291
      %v359 = vpop.f32.mrb[0].mxu0
      %v360 = vadd.f32 0.0, %v359
      %v361 = vpop.f32.mrb[0].mxu0
      %v362 = vpop.f32.mrb[0].mxu0
      %v363 = vadd.f32 0.0, %v362
      %v364 = vpop.f32.mrb[0].mxu0
      %365 = vdwg.mxu0
      %v370 = vunpack.c.l.b16 %v182
      %v371 = vunpack.c.l.b16 %v183
      %v372 = vunpack.c.l.b16 %v184
      %v373 = vunpack.c.l.b16 %v185
      %v374 = vpack.c.b16 %v371, %v370
      %v375 = vpack.c.b16 %v373, %v372
      %v378 = vsel %vm277, %v214, 0
      %v380 = vsel %vm277, %v215, 0
      %v382 = vsel %vm277, %v216, 0
      %v384 = vsel %vm277, %v217, 0
      %v386 = vsel %vm277, %v218, 0
      %388 = vmatprep.subr.bf16.mxu0 0
      %389 = vmatpush1.bf16.msra.mxu0 %v374
      %390 = vmatprep.subr.bf16.mxu0 0
      %391 = vmatpush1.bf16.msra.mxu0 %v375
      %392 = vmatprep.subr.bf16.mxu0 0
      %393 = vmatpush1.bf16.msra.mxu0 0
      %394 = vmatprep.subr.bf16.mxu0 0
      %395 = vmatpush1.bf16.msra.mxu0 0
      %396 = vmatprep.subr.bf16.mxu0 0
      %397 = vmatpush1.bf16.msra.mxu0 0
      %398 = vmatprep.subr.bf16.mxu0 0
      %399 = vmatpush1.bf16.msra.mxu0 0
      %400 = vmatprep.subr.bf16.mxu0 0
      %401 = vmatpush1.bf16.msra.mxu0 0
      %402 = vmatprep.subr.bf16.mxu0 0
      %403 = vmatpush1.bf16.msra.mxu0 0
      %404 = vmatprep.subr.bf16.mxu0 0
      %405 = vmatpush1.bf16.msra.mxu0 0
      %406 = vmatprep.subr.bf16.mxu0 0
      %407 = vmatpush1.bf16.msra.mxu0 0
      %408 = vmatprep.subr.bf16.mxu0 0
      %409 = vmatpush1.bf16.msra.mxu0 0
      %410 = vmatprep.subr.bf16.mxu0 0
      %411 = vmatpush1.bf16.msra.mxu0 0
      %412 = vmatprep.subr.bf16.mxu0 0
      %413 = vmatpush1.bf16.msra.mxu0 0
      %414 = vmatprep.subr.bf16.mxu0 0
      %415 = vmatpush1.bf16.msra.mxu0 0
      %416 = vmatprep.subr.bf16.mxu0 0
      %417 = vmatpush1.bf16.msra.mxu0 0
      %418 = vmatprep.subr.bf16.mxu0 0
      %419 = vmatpush1.bf16.msra.mxu0 0
      %420 = vmatprep.mubr.bf16.mxu0 0
      %421 = vmatmul.mubr.bf16.gmra.mrb[0].mxu0 %v378
      %v422 = vpop.f32.mrb[0].mxu0
      %v423 = vadd.f32 %v328, %v422
      %v424 = vpop.f32.mrb[0].mxu0
      %v425 = vpop.f32.mrb[0].mxu0
      %v426 = vadd.f32 %v331, %v425
      %v427 = vpop.f32.mrb[0].mxu0
      %428 = vmatprep.mubr.bf16.mxu0 0
      %429 = vmatmul.mubr.bf16.gmra.mrb[0].mxu0 %v380
      %v430 = vpop.f32.mrb[0].mxu0
      %v431 = vadd.f32 %v336, %v430
      %v432 = vpop.f32.mrb[0].mxu0
      %v433 = vpop.f32.mrb[0].mxu0
      %v434 = vadd.f32 %v339, %v433
      %v435 = vpop.f32.mrb[0].mxu0
      %436 = vmatprep.mubr.bf16.mxu0 0
      %437 = vmatmul.mubr.bf16.gmra.mrb[0].mxu0 %v382
      %v438 = vpop.f32.mrb[0].mxu0
      %v439 = vadd.f32 %v344, %v438
      %v440 = vpop.f32.mrb[0].mxu0
      %v441 = vpop.f32.mrb[0].mxu0
      %v442 = vadd.f32 %v347, %v441
      %v443 = vpop.f32.mrb[0].mxu0
      %444 = vmatprep.mubr.bf16.mxu0 0
      %445 = vmatmul.mubr.bf16.gmra.mrb[0].mxu0 %v384
      %v446 = vpop.f32.mrb[0].mxu0
      %v447 = vadd.f32 %v352, %v446
      %v448 = vpop.f32.mrb[0].mxu0
      %v449 = vpop.f32.mrb[0].mxu0
      %v450 = vadd.f32 %v355, %v449
      %v451 = vpop.f32.mrb[0].mxu0
      %452 = vmatprep.mubr.bf16.mxu0 0
      %453 = vmatmul.mubr.bf16.gmra.mrb[0].mxu0 %v386
      %v454 = vpop.f32.mrb[0].mxu0
      %v455 = vadd.f32 %v360, %v454
      %v456 = vpop.f32.mrb[0].mxu0
      %v457 = vpop.f32.mrb[0].mxu0
      %v458 = vadd.f32 %v363, %v457
      %v459 = vpop.f32.mrb[0].mxu0
      %460 = vdwg.mxu0
      %v461 = vld [vmem:[%s165 + $0x4] sm:$0xf]
      %v462 = vld [vmem:[%s165 + $0x8] sm:$0xf]
      %v463 = vld [vmem:[%s165 + $0xc] sm:$0xf]
      %v464 = vld [vmem:[%s165 + $0x10] sm:$0xf]
      %v465 = vld [vmem:[%s165 + $0x14] sm:$0xf]
      %v466 = vld [vmem:[%s165 + $0x18] sm:$0xf]
      %v467 = vld [vmem:[%s165 + $0x1c] sm:$0xf]
      %v468 = vld [vmem:[%s165 + $0x20] sm:$0xf]
      %v469 = vld [vmem:[%s165 + $0x24] sm:$0xf]
      %v470 = vld [vmem:[%s165 + $0x28] sm:$0xf]
      %v471 = vld [vmem:[%s165 + $0x2c] sm:$0x1]
      %s472 = scalar_lea.vmem %s1, 32
      %v473 = vld [vmem:[%s472] sm:$0xf]
      %v474 = vld [vmem:[%s472 + $0x4] sm:$0xf]
      %v475 = vld [vmem:[%s472 + $0x8] sm:$0xf]
      %v476 = vld [vmem:[%s472 + $0xc] sm:$0xf]
      %v488 = vunpack.c.l.b16 %v461
      %v489 = vunpack.c.l.b16 %v462
      %v490 = vunpack.c.l.b16 %v463
      %v491 = vunpack.c.l.b16 %v464
      %v492 = vunpack.c.l.b16 %v465
      %v493 = vunpack.c.l.b16 %v466
      %v494 = vunpack.c.l.b16 %v467
      %v495 = vunpack.c.l.b16 %v468
      %v496 = vunpack.c.l.b16 %v469
      %v497 = vunpack.c.l.b16 %v470
      %v498 = vunpack.c.l.b16 %v471
      %v499 = vpack.c.b16 %v489, %v488
      %v500 = vpack.c.b16 %v491, %v490
      %v501 = vpack.c.b16 %v493, %v492
      %v502 = vpack.c.b16 %v495, %v494
      %v503 = vpack.c.b16 %v497, %v496
      %v504 = vpack.c.b16 %v498, %v498
      %v506 = vshrl.u32 %v499, 16
      %v508 = vshll.u32 %v499, 16
      %v510 = vrot.slane %v508, 1
      %v511 = vor.u32 %v506, %v510
      %v513 = vshll.u32 %v500, 16
      %v515 = vrot.slane %v513, 1
      %v516 = vsel %vm220, %v511, %v515
      %v517 = vshrl.u32 %v500, 16
      %v519 = vor.u32 %v517, %v515
      %v521 = vshll.u32 %v501, 16
      %v523 = vrot.slane %v521, 1
      %v524 = vsel %vm220, %v519, %v523
      %v525 = vshrl.u32 %v501, 16
      %v527 = vor.u32 %v525, %v523
      %v529 = vshll.u32 %v502, 16
      %v531 = vrot.slane %v529, 1
      %v532 = vsel %vm220, %v527, %v531
      %v533 = vshrl.u32 %v502, 16
      %v535 = vor.u32 %v533, %v531
      %v537 = vshll.u32 %v503, 16
      %v539 = vrot.slane %v537, 1
      %v540 = vsel %vm220, %v535, %v539
      %v541 = vshrl.u32 %v503, 16
      %v543 = vor.u32 %v541, %v539
      %v545 = vshll.u32 %v504, 16
      %v547 = vrot.slane %v545, 1
      %v548 = vsel %vm220, %v543, %v547
      %v553 = vunpack.c.l.b16 %v473
      %v554 = vunpack.c.l.b16 %v474
      %v555 = vunpack.c.l.b16 %v475
      %v556 = vunpack.c.l.b16 %v476
      %v557 = vpack.c.b16 %v554, %v553
      %v558 = vpack.c.b16 %v556, %v555
      %v562 = vsel %vm277, %v516, 0
      %v565 = vsel %vm277, %v524, 0
      %v568 = vsel %vm277, %v532, 0
      %v571 = vsel %vm277, %v540, 0
      %v574 = vsel %vm277, %v548, 0
      %576 = vmatprep.subr.bf16.mxu0 0
      %577 = vmatpush1.bf16.msra.mxu0 %v557
      %578 = vmatprep.subr.bf16.mxu0 0
      %579 = vmatpush1.bf16.msra.mxu0 %v558
      %580 = vmatprep.subr.bf16.mxu0 0
      %581 = vmatpush1.bf16.msra.mxu0 0
      %582 = vmatprep.subr.bf16.mxu0 0
      %583 = vmatpush1.bf16.msra.mxu0 0
      %584 = vmatprep.subr.bf16.mxu0 0
      %585 = vmatpush1.bf16.msra.mxu0 0
      %586 = vmatprep.subr.bf16.mxu0 0
      %587 = vmatpush1.bf16.msra.mxu0 0
      %588 = vmatprep.subr.bf16.mxu0 0
      %589 = vmatpush1.bf16.msra.mxu0 0
      %590 = vmatprep.subr.bf16.mxu0 0
      %591 = vmatpush1.bf16.msra.mxu0 0
      %592 = vmatprep.subr.bf16.mxu0 0
      %593 = vmatpush1.bf16.msra.mxu0 0
      %594 = vmatprep.subr.bf16.mxu0 0
      %595 = vmatpush1.bf16.msra.mxu0 0
      %596 = vmatprep.subr.bf16.mxu0 0
      %597 = vmatpush1.bf16.msra.mxu0 0
      %598 = vmatprep.subr.bf16.mxu0 0
      %599 = vmatpush1.bf16.msra.mxu0 0
      %600 = vmatprep.subr.bf16.mxu0 0
      %601 = vmatpush1.bf16.msra.mxu0 0
      %602 = vmatprep.subr.bf16.mxu0 0
      %603 = vmatpush1.bf16.msra.mxu0 0
      %604 = vmatprep.subr.bf16.mxu0 0
      %605 = vmatpush1.bf16.msra.mxu0 0
      %606 = vmatprep.subr.bf16.mxu0 0
      %607 = vmatpush1.bf16.msra.mxu0 0
      %608 = vmatprep.mubr.bf16.mxu0 0
      %609 = vmatmul.mubr.bf16.gmra.mrb[0].mxu0 %v562
      %v610 = vpop.f32.mrb[0].mxu0
      %v611 = vadd.f32 0.0, %v610
      %v612 = vpop.f32.mrb[0].mxu0
      %v613 = vpop.f32.mrb[0].mxu0
      %v614 = vadd.f32 0.0, %v613
      %v615 = vpop.f32.mrb[0].mxu0
      %616 = vmatprep.mubr.bf16.mxu0 0
      %617 = vmatmul.mubr.bf16.gmra.mrb[0].mxu0 %v565
      %v618 = vpop.f32.mrb[0].mxu0
      %v619 = vadd.f32 0.0, %v618
      %v620 = vpop.f32.mrb[0].mxu0
      %v621 = vpop.f32.mrb[0].mxu0
      %v622 = vadd.f32 0.0, %v621
      %v623 = vpop.f32.mrb[0].mxu0
      %624 = vmatprep.mubr.bf16.mxu0 0
      %625 = vmatmul.mubr.bf16.gmra.mrb[0].mxu0 %v568
      %v626 = vpop.f32.mrb[0].mxu0
      %v627 = vadd.f32 0.0, %v626
      %v628 = vpop.f32.mrb[0].mxu0
      %v629 = vpop.f32.mrb[0].mxu0
      %v630 = vadd.f32 0.0, %v629
      %v631 = vpop.f32.mrb[0].mxu0
      %632 = vmatprep.mubr.bf16.mxu0 0
      %633 = vmatmul.mubr.bf16.gmra.mrb[0].mxu0 %v571
      %v634 = vpop.f32.mrb[0].mxu0
      %v635 = vadd.f32 0.0, %v634
      %v636 = vpop.f32.mrb[0].mxu0
      %v637 = vpop.f32.mrb[0].mxu0
      %v638 = vadd.f32 0.0, %v637
      %v639 = vpop.f32.mrb[0].mxu0
      %640 = vmatprep.mubr.bf16.mxu0 0
      %641 = vmatmul.mubr.bf16.gmra.mrb[0].mxu0 %v574
      %v642 = vpop.f32.mrb[0].mxu0
      %v643 = vadd.f32 0.0, %v642
      %v644 = vpop.f32.mrb[0].mxu0
      %v645 = vpop.f32.mrb[0].mxu0
      %v646 = vadd.f32 0.0, %v645
      %v647 = vpop.f32.mrb[0].mxu0
      %648 = vdwg.mxu0
      %v649 = vadd.f32 %v423, %v611
      %v650 = vadd.f32 %v426, %v614
      %v651 = vadd.f32 %v431, %v619
      %v652 = vadd.f32 %v434, %v622
      %v653 = vadd.f32 %v439, %v627
      %v654 = vadd.f32 %v442, %v630
      %v655 = vadd.f32 %v447, %v635
      %v656 = vadd.f32 %v450, %v638
      %v657 = vadd.f32 %v455, %v643
      %v658 = vadd.f32 %v458, %v646
      %v659 = vld [vmem:[%s165 + $0x4] sm:$0xe]
      %s660 = scalar_lea.vmem %s1, 48
      %v661 = vld [vmem:[%s660] sm:$0xf]
      %v662 = vld [vmem:[%s660 + $0x4] sm:$0xf]
      %v663 = vld [vmem:[%s660 + $0x8] sm:$0xf]
      %v664 = vld [vmem:[%s660 + $0xc] sm:$0xf]
      %v666 = vunpack.c.l.b16 %v659
      %v667 = vpack.c.b16 %v489, %v666
      %vm668 = vcmask 1046528
      %v669 = vrot.slane %v667, 1
      %v670 = vrot.slane %v500, 1
      %v671 = vsel %vm668, %v669, %v670
      %v672 = vrot.slane %v501, 1
      %v673 = vsel %vm668, %v670, %v672
      %v674 = vrot.slane %v502, 1
      %v675 = vsel %vm668, %v672, %v674
      %v676 = vrot.slane %v503, 1
      %v677 = vsel %vm668, %v674, %v676
      %v678 = vrot.slane %v504, 1
      %v679 = vsel %vm668, %v676, %v678
      %v684 = vunpack.c.l.b16 %v661
      %v685 = vunpack.c.l.b16 %v662
      %v686 = vunpack.c.l.b16 %v663
      %v687 = vunpack.c.l.b16 %v664
      %v688 = vpack.c.b16 %v685, %v684
      %v689 = vpack.c.b16 %v687, %v686
      %v693 = vsel %vm277, %v671, 0
      %v696 = vsel %vm277, %v673, 0
      %v699 = vsel %vm277, %v675, 0
      %v702 = vsel %vm277, %v677, 0
      %v705 = vsel %vm277, %v679, 0
      %707 = vmatprep.subr.bf16.mxu0 0
      %708 = vmatpush1.bf16.msra.mxu0 %v688
      %709 = vmatprep.subr.bf16.mxu0 0
      %710 = vmatpush1.bf16.msra.mxu0 %v689
      %711 = vmatprep.subr.bf16.mxu0 0
      %712 = vmatpush1.bf16.msra.mxu0 0
      %713 = vmatprep.subr.bf16.mxu0 0
      %714 = vmatpush1.bf16.msra.mxu0 0
      %715 = vmatprep.subr.bf16.mxu0 0
      %716 = vmatpush1.bf16.msra.mxu0 0
      %717 = vmatprep.subr.bf16.mxu0 0
      %718 = vmatpush1.bf16.msra.mxu0 0
      %719 = vmatprep.subr.bf16.mxu0 0
      %720 = vmatpush1.bf16.msra.mxu0 0
      %721 = vmatprep.subr.bf16.mxu0 0
      %722 = vmatpush1.bf16.msra.mxu0 0
      %723 = vmatprep.subr.bf16.mxu0 0
      %724 = vmatpush1.bf16.msra.mxu0 0
      %725 = vmatprep.subr.bf16.mxu0 0
      %726 = vmatpush1.bf16.msra.mxu0 0
      %727 = vmatprep.subr.bf16.mxu0 0
      %728 = vmatpush1.bf16.msra.mxu0 0
      %729 = vmatprep.subr.bf16.mxu0 0
      %730 = vmatpush1.bf16.msra.mxu0 0
      %731 = vmatprep.subr.bf16.mxu0 0
      %732 = vmatpush1.bf16.msra.mxu0 0
      %733 = vmatprep.subr.bf16.mxu0 0
      %734 = vmatpush1.bf16.msra.mxu0 0
      %735 = vmatprep.subr.bf16.mxu0 0
      %736 = vmatpush1.bf16.msra.mxu0 0
      %737 = vmatprep.subr.bf16.mxu0 0
      %738 = vmatpush1.bf16.msra.mxu0 0
      %739 = vmatprep.mubr.bf16.mxu0 0
      %740 = vmatmul.mubr.bf16.gmra.mrb[0].mxu0 %v693
      %v741 = vpop.f32.mrb[0].mxu0
      %v742 = vadd.f32 0.0, %v741
      %v743 = vpop.f32.mrb[0].mxu0
      %v744 = vpop.f32.mrb[0].mxu0
      %v745 = vadd.f32 0.0, %v744
      %v746 = vpop.f32.mrb[0].mxu0
      %747 = vmatprep.mubr.bf16.mxu0 0
      %748 = vmatmul.mubr.bf16.gmra.mrb[0].mxu0 %v696
      %v749 = vpop.f32.mrb[0].mxu0
      %v750 = vadd.f32 0.0, %v749
      %v751 = vpop.f32.mrb[0].mxu0
      %v752 = vpop.f32.mrb[0].mxu0
      %v753 = vadd.f32 0.0, %v752
      %v754 = vpop.f32.mrb[0].mxu0
      %755 = vmatprep.mubr.bf16.mxu0 0
      %756 = vmatmul.mubr.bf16.gmra.mrb[0].mxu0 %v699
      %v757 = vpop.f32.mrb[0].mxu0
      %v758 = vadd.f32 0.0, %v757
      %v759 = vpop.f32.mrb[0].mxu0
      %v760 = vpop.f32.mrb[0].mxu0
      %v761 = vadd.f32 0.0, %v760
      %v762 = vpop.f32.mrb[0].mxu0
      %763 = vmatprep.mubr.bf16.mxu0 0
      %764 = vmatmul.mubr.bf16.gmra.mrb[0].mxu0 %v702
      %v765 = vpop.f32.mrb[0].mxu0
      %v766 = vadd.f32 0.0, %v765
      %v767 = vpop.f32.mrb[0].mxu0
      %v768 = vpop.f32.mrb[0].mxu0
      %v769 = vadd.f32 0.0, %v768
      %v770 = vpop.f32.mrb[0].mxu0
      %771 = vmatprep.mubr.bf16.mxu0 0
      %772 = vmatmul.mubr.bf16.gmra.mrb[0].mxu0 %v705
      %v773 = vpop.f32.mrb[0].mxu0
      %v774 = vadd.f32 0.0, %v773
      %v775 = vpop.f32.mrb[0].mxu0
      %v776 = vpop.f32.mrb[0].mxu0
      %v777 = vadd.f32 0.0, %v776
      %v778 = vpop.f32.mrb[0].mxu0
      %779 = vdwg.mxu0
      %v780 = vadd.f32 %v649, %v742
      %v781 = vadd.f32 %v650, %v745
      %v782 = vadd.f32 %v651, %v750
      %v783 = vadd.f32 %v652, %v753
      %v784 = vadd.f32 %v653, %v758
      %v785 = vadd.f32 %v654, %v761
      %v786 = vadd.f32 %v655, %v766
      %v787 = vadd.f32 %v656, %v769
      %v788 = vadd.f32 %v657, %v774
      %v789 = vadd.f32 %v658, %v777
      %v790 = vld [vmem:[%s2] sm:$0x1]
      %v792 = vlaneseq
      %v793 = vshrl.u32 %v792, 7
      %v794 = vsub.s32 0, %v793
      %v795 = vrot.slane %v790, %v794
      %v797 = vadd.f32 %v780, %v795
      %v798 = vadd.f32 %v781, %v795
      %v799 = vadd.f32 %v782, %v795
      %v800 = vadd.f32 %v783, %v795
      %v801 = vadd.f32 %v784, %v795
      %v802 = vadd.f32 %v785, %v795
      %v803 = vadd.f32 %v786, %v795
      %v804 = vadd.f32 %v787, %v795
      %v805 = vadd.f32 %v788, %v795
      %v806 = vadd.f32 %v789, %v795
      %vm807 = vcmp.ge.f32.partialorder %v797, 0.0
      %vm808 = vcmp.ge.f32.partialorder %v798, 0.0
      %vm809 = vcmp.ge.f32.partialorder %v799, 0.0
      %vm810 = vcmp.ge.f32.partialorder %v800, 0.0
      %vm811 = vcmp.ge.f32.partialorder %v801, 0.0
      %vm812 = vcmp.ge.f32.partialorder %v802, 0.0
      %vm813 = vcmp.ge.f32.partialorder %v803, 0.0
      %vm814 = vcmp.ge.f32.partialorder %v804, 0.0
      %vm815 = vcmp.ge.f32.partialorder %v805, 0.0
      %vm816 = vcmp.ge.f32.partialorder %v806, 0.0
      %v817 = vmul.f32 %v797, 0.01
      %v818 = vmul.f32 %v798, 0.01
      %v819 = vmul.f32 %v799, 0.01
      %v820 = vmul.f32 %v800, 0.01
      %v821 = vmul.f32 %v801, 0.01
      %v822 = vmul.f32 %v802, 0.01
      %v823 = vmul.f32 %v803, 0.01
      %v824 = vmul.f32 %v804, 0.01
      %v825 = vmul.f32 %v805, 0.01
      %v826 = vmul.f32 %v806, 0.01
      %v827 = vsel %vm807, %v797, %v817
      %v828 = vsel %vm808, %v798, %v818
      %v829 = vsel %vm809, %v799, %v819
      %v830 = vsel %vm810, %v800, %v820
      %v831 = vsel %vm811, %v801, %v821
      %v832 = vsel %vm812, %v802, %v822
      %v833 = vsel %vm813, %v803, %v823
      %v834 = vsel %vm814, %v804, %v824
      %v835 = vsel %vm815, %v805, %v825
      %v836 = vsel %vm816, %v806, %v826
      %v837 = vpack.c.bf16 %v828, %v827
      %v838 = vpack.c.bf16 %v830, %v829
      %v839 = vpack.c.bf16 %v832, %v831
      %v840 = vpack.c.bf16 %v834, %v833
      %v841 = vpack.c.bf16 %v836, %v835
      %v847 = vunpack.c.l.b16 %v837
      %v848 = vunpack.c.h.b16 %v837
      %v849 = vunpack.c.l.b16 %v838
      %v850 = vunpack.c.h.b16 %v838
      %v851 = vunpack.c.l.b16 %v839
      %v852 = vunpack.c.h.b16 %v839
      %v853 = vunpack.c.l.b16 %v840
      %v854 = vunpack.c.h.b16 %v840
      %v855 = vunpack.c.l.b16 %v841
      %v856 = vunpack.c.h.b16 %v841
      %v857 = vpack.c.b16 %v847, %v847
      %v858 = vpack.c.b16 %v848, %v848
      %v859 = vpack.c.b16 %v849, %v849
      %v860 = vpack.c.b16 %v850, %v850
      %v861 = vpack.c.b16 %v851, %v851
      %v862 = vpack.c.b16 %v852, %v852
      %v863 = vpack.c.b16 %v853, %v853
      %v864 = vpack.c.b16 %v854, %v854
      %v865 = vpack.c.b16 %v855, %v855
      %v866 = vpack.c.b16 %v856, %v856
      %877 = vst [vmem:[%s170] sm:$0xf] %v857
      %878 = vst [vmem:[%s170 + $0x4] sm:$0xf] %v858
      %879 = vst [vmem:[%s170 + $0x8] sm:$0xf] %v859
      %880 = vst [vmem:[%s170 + $0xc] sm:$0xf] %v860
      %881 = vst [vmem:[%s170 + $0x10] sm:$0xf] %v861
      %882 = vst [vmem:[%s170 + $0x14] sm:$0xf] %v862
      %883 = vst [vmem:[%s170 + $0x18] sm:$0xf] %v863
      %884 = vst [vmem:[%s170 + $0x1c] sm:$0xf] %v864
      %885 = vst [vmem:[%s170 + $0x20] sm:$0xf] %v865
      %886 = vst [vmem:[%s170 + $0x24] sm:$0xf] %v866
      %p887 = scmp.lt.s32.totalorder %s14, 1
      %s888 = scalar_select %p887, %s14, 1
      %s889 = smul.addr %s888, 10
      %s890 = smul.addr %s889, 4
      %s891 = scalar_lea.vmem %s3, %s890
      // Predicated region
      $region33: #{a_call__.4} parent=31 // pred_check
        %p892 = pneg %p100
      $region34: #{a_call__.4} parent=31 // pred_check_branch
        %894 = sbr.rel (%p892) target = $region36
      $region35: #{a_call__.4} parent=31 // pred_region
        _
      $region36: #{a_call__.4} parent=31 // pred_fallthru
        _
    $region32: #{a_call__.4} parent=5 // pred_fallthru
      _
    %p895 = scmp.le.s32.totalorder 2, %s9
    // Predicated region
    $region37: #{a_call__.4} parent=5 // pred_check
      %p896 = pneg %p895
    $region38: #{a_call__.4} parent=5 // pred_check_branch
      %898 = sbr.rel (%p896) target = $region40
    $region39: #{a_call__.4} parent=5 // pred_region
      %s899 = ssub.s32 %s9, 2
      // Predicated region
      $region41: #{a_call__.4} parent=39 // pred_check
        %p900 = pneg %p106
      $region42: #{a_call__.4} parent=39 // pred_check_branch
        %902 = sbr.rel (%p900) target = $region44
      $region43: #{a_call__.4} parent=39 // pred_region
        %p903 = scmp.lt.s32.totalorder %s15, 1
        %s904 = scalar_select %p903, %s15, 1
        %s905 = smul.addr %s904, 10
        %s906 = smul.addr %s905, 4
        %s907 = scalar_lea.vmem %s3, %s906
      $region44: #{a_call__.4} parent=39 // pred_fallthru
        _
    $region40: #{a_call__.4} parent=5 // pred_fallthru
      _
  $region6: #{a_call__.4} parent=0 // loop_footer
    %s13 = sadd.s32 1, %s9
  $region7: #{a_call__.4} parent=0 // loop_footer_branch
    %8 = sbr.rel target = $region3
  $region8: #{a_call__.4} parent=0 // loop_exit
    _

// kernel: a_call__.6
$region0: #{a_call__.6}
  #allocation0 [shape = 'u32[]', space=smem, size = 0x4, offset = 0x4, fixed_abs, tag = 'smem constant byte address 0x4 - core index']
  #allocation1 [shape = 'u32[144,128]{1,0:T(1,128)}', space=vmem, size = 0x12000, scoped, tag = 'internal scratch']
  %s0 = inlined_call_operand.vmem [shape: bf16[64,128], index: 0, kind: input, shape index: {}]
  %s1 = inlined_call_operand.vmem [shape: f32[1,128], index: 1, kind: input, shape index: {}]
  %s2 = inlined_call_operand.vmem [shape: f32[1,128], index: 2, kind: input, shape index: {}]
  %s3 = inlined_call_operand.vmem [shape: bf16[64,128], index: 3, kind: output, shape index: {}]
  %s4 = sld [smem:[#allocation0]]
  $region22: #{a_call__.6} parent=0
    _
  %s6 = ssub.s32 1, %s4
  %s7 = scalar_select 0, %s6, %s4
  // Predicated region
  $region2: #{a_call__.6} parent=0 // pred_check
    _
  $region3: #{a_call__.6} parent=0 // pred_check_branch
    %9 = sbr.rel (0) target = $region5
  $region4: #{a_call__.6} parent=0 // pred_region
    _
  $region5: #{a_call__.6} parent=0 // pred_fallthru
    _
  // Predicated region
  $region6: #{a_call__.6} parent=0 // pred_check
    _
  $region7: #{a_call__.6} parent=0 // pred_check_branch
    %11 = sbr.rel (0) target = $region9
  $region8: #{a_call__.6} parent=0 // pred_region
    _
  $region9: #{a_call__.6} parent=0 // pred_fallthru
    _
  // Predicated region
  $region10: #{a_call__.6} parent=0 // pred_check
    _
  $region11: #{a_call__.6} parent=0 // pred_check_branch
    %13 = sbr.rel (0) target = $region13
  $region12: #{a_call__.6} parent=0 // pred_region
    _
  $region13: #{a_call__.6} parent=0 // pred_fallthru
    _
  %v14 = vld [vmem:[%s0] sm:$0xf]
  %v15 = vld [vmem:[%s0 + $0x4] sm:$0xf]
  %v16 = vld [vmem:[%s0 + $0x8] sm:$0xf]
  %v17 = vld [vmem:[%s0 + $0xc] sm:$0xf]
  %v18 = vld [vmem:[%s0 + $0x10] sm:$0xf]
  %v19 = vld [vmem:[%s0 + $0x14] sm:$0xf]
  %v20 = vld [vmem:[%s0 + $0x18] sm:$0xf]
  %v21 = vld [vmem:[%s0 + $0x1c] sm:$0xf]
  %v22 = vunpack.c.l.bf16 %v14
  %v23 = vunpack.c.l.bf16 %v15
  %v24 = vunpack.c.l.bf16 %v16
  %v25 = vunpack.c.l.bf16 %v17
  %v26 = vunpack.c.l.bf16 %v18
  %v27 = vunpack.c.l.bf16 %v19
  %v28 = vunpack.c.l.bf16 %v20
  %v29 = vunpack.c.l.bf16 %v21
  %v30 = vld [vmem:[%s1] sm:$0x1]
  %v32 = vlaneseq
  %v33 = vshrl.u32 %v32, 7
  %v34 = vsub.s32 0, %v33
  %v35 = vrot.slane %v30, %v34
  %v37 = vmul.f32 %v22, %v35
  %v38 = vmul.f32 %v23, %v35
  %v39 = vmul.f32 %v24, %v35
  %v40 = vmul.f32 %v25, %v35
  %v41 = vmul.f32 %v26, %v35
  %v42 = vmul.f32 %v27, %v35
  %v43 = vmul.f32 %v28, %v35
  %v44 = vmul.f32 %v29, %v35
  %v45 = vld [vmem:[%s2] sm:$0x1]
  %v47 = vlaneseq
  %v48 = vshrl.u32 %v47, 7
  %v49 = vsub.s32 0, %v48
  %v50 = vrot.slane %v45, %v49
  %v52 = vadd.f32 %v37, %v50
  %v53 = vadd.f32 %v38, %v50
  %v54 = vadd.f32 %v39, %v50
  %v55 = vadd.f32 %v40, %v50
  %v56 = vadd.f32 %v41, %v50
  %v57 = vadd.f32 %v42, %v50
  %v58 = vadd.f32 %v43, %v50
  %v59 = vadd.f32 %v44, %v50
  %vm60 = vcmp.ge.f32.partialorder %v52, 0.0
  %vm61 = vcmp.ge.f32.partialorder %v53, 0.0
  %vm62 = vcmp.ge.f32.partialorder %v54, 0.0
  %vm63 = vcmp.ge.f32.partialorder %v55, 0.0
  %vm64 = vcmp.ge.f32.partialorder %v56, 0.0
  %vm65 = vcmp.ge.f32.partialorder %v57, 0.0
  %vm66 = vcmp.ge.f32.partialorder %v58, 0.0
  %vm67 = vcmp.ge.f32.partialorder %v59, 0.0
  %v68 = vmul.f32 %v52, 0.01
  %v69 = vmul.f32 %v53, 0.01
  %v70 = vmul.f32 %v54, 0.01
  %v71 = vmul.f32 %v55, 0.01
  %v72 = vmul.f32 %v56, 0.01
  %v73 = vmul.f32 %v57, 0.01
  %v74 = vmul.f32 %v58, 0.01
  %v75 = vmul.f32 %v59, 0.01
  %v76 = vsel %vm60, %v52, %v68
  %v77 = vsel %vm61, %v53, %v69
  %v78 = vsel %vm62, %v54, %v70
  %v79 = vsel %vm63, %v55, %v71
  %v80 = vsel %vm64, %v56, %v72
  %v81 = vsel %vm65, %v57, %v73
  %v82 = vsel %vm66, %v58, %v74
  %v83 = vsel %vm67, %v59, %v75
  %v84 = vpack.c.bf16 %v77, %v76
  %v85 = vpack.c.bf16 %v79, %v78
  %v86 = vpack.c.bf16 %v81, %v80
  %v87 = vpack.c.bf16 %v83, %v82
  %v92 = vunpack.c.l.b16 %v84
  %v93 = vunpack.c.h.b16 %v84
  %v94 = vunpack.c.l.b16 %v85
  %v95 = vunpack.c.h.b16 %v85
  %v96 = vunpack.c.l.b16 %v86
  %v97 = vunpack.c.h.b16 %v86
  %v98 = vunpack.c.l.b16 %v87
  %v99 = vunpack.c.h.b16 %v87
  %v100 = vpack.c.b16 %v92, %v92
  %v101 = vpack.c.b16 %v93, %v93
  %v102 = vpack.c.b16 %v94, %v94
  %v103 = vpack.c.b16 %v95, %v95
  %v104 = vpack.c.b16 %v96, %v96
  %v105 = vpack.c.b16 %v97, %v97
  %v106 = vpack.c.b16 %v98, %v98
  %v107 = vpack.c.b16 %v99, %v99
  %116 = vst [vmem:[%s3] sm:$0xf] %v100
  %117 = vst [vmem:[%s3 + $0x4] sm:$0xf] %v101
  %118 = vst [vmem:[%s3 + $0x8] sm:$0xf] %v102
  %119 = vst [vmem:[%s3 + $0xc] sm:$0xf] %v103
  %120 = vst [vmem:[%s3 + $0x10] sm:$0xf] %v104
  %121 = vst [vmem:[%s3 + $0x14] sm:$0xf] %v105
  %122 = vst [vmem:[%s3 + $0x18] sm:$0xf] %v106
  %123 = vst [vmem:[%s3 + $0x1c] sm:$0xf] %v107
  // Predicated region
  $region14: #{a_call__.6} parent=0 // pred_check
    _
  $region15: #{a_call__.6} parent=0 // pred_check_branch
    %125 = sbr.rel (0) target = $region17
  $region16: #{a_call__.6} parent=0 // pred_region
    _
  $region17: #{a_call__.6} parent=0 // pred_fallthru
    _
  // Predicated region
  $region18: #{a_call__.6} parent=0 // pred_check
    _
  $region19: #{a_call__.6} parent=0 // pred_check_branch
    %127 = sbr.rel (0) target = $region21
  $region20: #{a_call__.6} parent=0 // pred_region
    _
  $region21: #{a_call__.6} parent=0 // pred_fallthru
    _

// kernel: a_call__.5
$region0: #{a_call__.5}
  #allocation0 [shape = 'u32[]', space=smem, size = 0x4, offset = 0x4, fixed_abs, tag = 'smem constant byte address 0x4 - core index']
  #allocation1 [shape = 'u32[144,128]{1,0:T(1,128)}', space=vmem, size = 0x12000, scoped, tag = 'internal scratch']
  %s0 = inlined_call_operand.vmem [shape: bf16[2,48,512], index: 0, kind: input, shape index: {}]
  %s1 = inlined_call_operand.vmem [shape: bf16[4,512,128], index: 1, kind: input, shape index: {}]
  %s2 = inlined_call_operand.vmem [shape: f32[32,1], index: 2, kind: input, shape index: {}]
  %s3 = inlined_call_operand.vmem [shape: bf16[2,32,128], index: 3, kind: output, shape index: {0}]
  %s4 = inlined_call_operand.vmem [shape: f32[2,8,128], index: 4, kind: output, shape index: {1}]
  %5 = xla_tuple %s3, %s4
  %s6 = sld [smem:[#allocation0]]
  $region53: #{a_call__.5} parent=0
    _
  %s8 = ssub.s32 1, %s6
  %s9 = scalar_select 0, %s8, %s6
  loop: start=0, step=1, limit=4
  $region2: #{a_call__.5} parent=0 // loop_pre_header
    _
  $region3: #{a_call__.5} parent=0 // loop_header
    %s11 = sphi 0, %s15
    %p12 = scmp.ge.s32.totalorder %s11, 4
    %s21 = sphi 0, %s23
    %s24 = sphi 0, %s21
    %s25 = sphi 0, %s24
    %s41 = sphi 0, %s25
    %s45 = sphi 0, %s45
    %s47 = sphi 0, %s45
    %s48 = sphi 0, %s47
    %s62 = sphi 0, %s48
    %s66 = sphi 0, %s66
    %s68 = sphi 0, %s66
    %s69 = sphi 0, %s68
    %s83 = sphi 0, %s69
    %s89 = sphi 0, %s91
    %s92 = sphi 0, %s89
    %s93 = sphi 0, %s92
    %s109 = sphi 0, %s93
    %s115 = sphi 0, %s117
    %s118 = sphi 0, %s115
    %s119 = sphi 0, %s118
    %s135 = sphi 0, %s119
  $region4: #{a_call__.5} parent=0 // loop_header_branch
    %14 = sbr.rel (%p12) target = $region8
  $region5: #{a_call__.5} parent=0 // loop_body
    %s16 = ssub.s32 %s11, 1
    %s17 = ssub.s32 %s11, 2
    %s18 = sadd.s32 %s11, 1
    %s19 = ssub.s32 %s11, %s18
    %p20 = scmp.eq.s32.totalorder %s19, 0
    %s22 = sadd.s32 %s21, 1
    %s23 = scalar_select %p20, %s21, %s22
    %p26 = pneg %p20
    %p27 = scmp.eq.s32.totalorder %s11, 1
    %p28 = por %p26, %p27
    %p29 = scmp.ne.s32.totalorder %s21, %s24
    %p30 = scmp.eq.s32.totalorder %s11, 0
    %p31 = por %p29, %p30
    %p32 = scmp.ne.s32.totalorder %s21, %s24
    %p33 = scmp.eq.s32.totalorder %s16, 1
    %p34 = por %p32, %p33
    %p35 = scmp.ne.s32.totalorder %s24, %s25
    %p36 = scmp.eq.s32.totalorder %s16, 0
    %p37 = por %p35, %p36
    %p38 = scmp.ne.s32.totalorder %s24, %s25
    %p39 = scmp.eq.s32.totalorder %s17, 1
    %p40 = por %p38, %p39
    %p42 = scmp.ne.s32.totalorder %s25, %s41
    %p43 = scmp.eq.s32.totalorder %s17, 0
    %p44 = por %p42, %p43
    %s46 = sadd.s32 %s45, 1
    %p49 = scmp.eq.s32.totalorder %s11, 1
    %p50 = scmp.ne.s32.totalorder %s45, %s47
    %p51 = scmp.eq.s32.totalorder %s11, 0
    %p52 = por %p50, %p51
    %p53 = scmp.ne.s32.totalorder %s45, %s47
    %p54 = scmp.eq.s32.totalorder %s16, 1
    %p55 = por %p53, %p54
    %p56 = scmp.ne.s32.totalorder %s47, %s48
    %p57 = scmp.eq.s32.totalorder %s16, 0
    %p58 = por %p56, %p57
    %p59 = scmp.ne.s32.totalorder %s47, %s48
    %p60 = scmp.eq.s32.totalorder %s17, 1
    %p61 = por %p59, %p60
    %p63 = scmp.ne.s32.totalorder %s48, %s62
    %p64 = scmp.eq.s32.totalorder %s17, 0
    %p65 = por %p63, %p64
    %s67 = sadd.s32 %s66, 1
    %p70 = scmp.eq.s32.totalorder %s11, 1
    %p71 = scmp.ne.s32.totalorder %s66, %s68
    %p72 = scmp.eq.s32.totalorder %s11, 0
    %p73 = por %p71, %p72
    %p74 = scmp.ne.s32.totalorder %s66, %s68
    %p75 = scmp.eq.s32.totalorder %s16, 1
    %p76 = por %p74, %p75
    %p77 = scmp.ne.s32.totalorder %s68, %s69
    %p78 = scmp.eq.s32.totalorder %s16, 0
    %p79 = por %p77, %p78
    %p80 = scmp.ne.s32.totalorder %s68, %s69
    %p81 = scmp.eq.s32.totalorder %s17, 1
    %p82 = por %p80, %p81
    %p84 = scmp.ne.s32.totalorder %s69, %s83
    %p85 = scmp.eq.s32.totalorder %s17, 0
    %p86 = por %p84, %p85
    %s87 = ssub.s32 %s11, %s18
    %p88 = scmp.eq.s32.totalorder %s87, 0
    %s90 = sadd.s32 %s89, 1
    %s91 = scalar_select %p88, %s89, %s90
    %p94 = pneg %p88
    %p95 = scmp.eq.s32.totalorder %s11, 1
    %p96 = por %p94, %p95
    %p97 = scmp.ne.s32.totalorder %s89, %s92
    %p98 = scmp.eq.s32.totalorder %s11, 0
    %p99 = por %p97, %p98
    %p100 = scmp.ne.s32.totalorder %s89, %s92
    %p101 = scmp.eq.s32.totalorder %s16, 1
    %p102 = por %p100, %p101
    %p103 = scmp.ne.s32.totalorder %s92, %s93
    %p104 = scmp.eq.s32.totalorder %s16, 0
    %p105 = por %p103, %p104
    %p106 = scmp.ne.s32.totalorder %s92, %s93
    %p107 = scmp.eq.s32.totalorder %s17, 1
    %p108 = por %p106, %p107
    %p110 = scmp.ne.s32.totalorder %s93, %s109
    %p111 = scmp.eq.s32.totalorder %s17, 0
    %p112 = por %p110, %p111
    %s113 = ssub.s32 %s11, %s18
    %p114 = scmp.eq.s32.totalorder %s113, 0
    %s116 = sadd.s32 %s115, 1
    %s117 = scalar_select %p114, %s115, %s116
    %p120 = pneg %p114
    %p121 = scmp.eq.s32.totalorder %s11, 1
    %p122 = por %p120, %p121
    %p123 = scmp.ne.s32.totalorder %s115, %s118
    %p124 = scmp.eq.s32.totalorder %s11, 0
    %p125 = por %p123, %p124
    %p126 = scmp.ne.s32.totalorder %s115, %s118
    %p127 = scmp.eq.s32.totalorder %s16, 1
    %p128 = por %p126, %p127
    %p129 = scmp.ne.s32.totalorder %s118, %s119
    %p130 = scmp.eq.s32.totalorder %s16, 0
    %p131 = por %p129, %p130
    %p132 = scmp.ne.s32.totalorder %s118, %s119
    %p133 = scmp.eq.s32.totalorder %s17, 1
    %p134 = por %p132, %p133
    %p136 = scmp.ne.s32.totalorder %s119, %s135
    %p137 = scmp.eq.s32.totalorder %s17, 0
    %p138 = por %p136, %p137
    %p139 = scmp.le.s32.totalorder 1, %s11
    %p140 = scmp.lt.s32.totalorder %s11, 3
    %p141 = pnand %p139, %p140
    %p142 = pneg %p141
    // Predicated region
    $region9: #{a_call__.5} parent=5 // pred_check
      _
    $region10: #{a_call__.5} parent=5 // pred_check_branch
      %144 = sbr.rel (%p141) target = $region12
    $region11: #{a_call__.5} parent=5 // pred_region
      %s145 = ssub.s32 %s11, 1
      // Predicated region
      $region13: #{a_call__.5} parent=11 // pred_check
        %p146 = pneg %p58
      $region14: #{a_call__.5} parent=11 // pred_check_branch
        %148 = sbr.rel (%p146) target = $region16
      $region15: #{a_call__.5} parent=11 // pred_region
        _
      $region16: #{a_call__.5} parent=11 // pred_fallthru
        _
      // Predicated region
      $region17: #{a_call__.5} parent=11 // pred_check
        %p149 = pneg %p79
      $region18: #{a_call__.5} parent=11 // pred_check_branch
        %151 = sbr.rel (%p149) target = $region20
      $region19: #{a_call__.5} parent=11 // pred_region
        _
      $region20: #{a_call__.5} parent=11 // pred_fallthru
        _
    $region12: #{a_call__.5} parent=5 // pred_fallthru
      _
    %p152 = scmp.lt.s32.totalorder %s11, 2
    // Predicated region
    $region21: #{a_call__.5} parent=5 // pred_check
      %p153 = pneg %p152
    $region22: #{a_call__.5} parent=5 // pred_check_branch
      %155 = sbr.rel (%p153) target = $region24
    $region23: #{a_call__.5} parent=5 // pred_region
      // Predicated region
      $region25: #{a_call__.5} parent=23 // pred_check
        %p156 = pneg %p31
      $region26: #{a_call__.5} parent=23 // pred_check_branch
        %158 = sbr.rel (%p156) target = $region28
      $region27: #{a_call__.5} parent=23 // pred_region
        %p159 = scmp.lt.s32.totalorder %s11, 1
        %s160 = scalar_select %p159, %s11, 1
        %s161 = smul.addr %s160, 24
        %s162 = smul.addr %s161, 4
        %s163 = scalar_lea.vmem %s0, %s162
      $region28: #{a_call__.5} parent=23 // pred_fallthru
        _
    $region24: #{a_call__.5} parent=5 // pred_fallthru
      _
    %p164 = scmp.le.s32.totalorder 1, %s11
    %p165 = scmp.lt.s32.totalorder %s11, 3
    %p166 = pnand %p164, %p165
    %p167 = pneg %p166
    // Predicated region
    $region29: #{a_call__.5} parent=5 // pred_check
      _
    $region30: #{a_call__.5} parent=5 // pred_check_branch
      %169 = sbr.rel (%p166) target = $region32
    $region31: #{a_call__.5} parent=5 // pred_region
      %s170 = ssub.s32 %s11, 1
      %p171 = scmp.lt.s32.totalorder %s16, 1
      %s172 = scalar_select %p171, %s16, 1
      %s173 = smul.addr %s172, 24
      %s174 = smul.addr %s173, 4
      %s175 = scalar_lea.vmem %s0, %s174
      %p176 = pneg %p37
      %p177 = pneg %p34
      %p178 = pneg %p58
      %p179 = pneg %p55
      %p180 = pneg %p79
      %p181 = pneg %p76
      %p182 = pneg %p105
      %p183 = pneg %p102
      %p184 = scmp.lt.s32.totalorder %s16, 1
      %s185 = scalar_select %p184, %s16, 1
      %s186 = smul.addr %s185, 4
      %s187 = smul.addr %s186, 4
      %s188 = scalar_lea.vmem %s3, %s187
      %p189 = pneg %p131
      %p190 = pneg %p128
      %p191 = scmp.lt.s32.totalorder %s16, 1
      %s192 = scalar_select %p191, %s16, 1
      %s193 = smul.addr %s192, 8
      %s194 = scalar_lea.vmem %s4, %s193
      %p195 = scmp.lt.s32.totalorder %s16, 1
      %s196 = scalar_select %p195, %s16, 1
      %s197 = smul.addr %s196, 24
      %s198 = smul.addr %s197, 4
      %s199 = scalar_lea.vmem %s0, %s198
      %p200 = scmp.lt.s32.totalorder %s16, 1
      %s201 = scalar_select %p200, %s16, 1
      %s202 = smul.addr %s201, 4
      %s203 = smul.addr %s202, 4
      %s204 = scalar_lea.vmem %s3, %s203
      %p205 = scmp.lt.s32.totalorder %s16, 1
      %s206 = scalar_select %p205, %s16, 1
      %s207 = smul.addr %s206, 8
      %s208 = scalar_lea.vmem %s4, %s207
      %v210 = vld [vmem:[%s199] sm:$0xff]
      %v211 = vld [vmem:[%s199 + $0x8] sm:$0xff]
      %v212 = vld [vmem:[%s199 + $0x10] sm:$0xff]
      %v213 = vld [vmem:[%s199 + $0x18] sm:$0xff]
      %v214 = vld [vmem:[%s199 + $0x20] sm:$0xff]
      %v215 = vld [vmem:[%s199 + $0x28] sm:$0xff]
      %v216 = vld [vmem:[%s199 + $0x30] sm:$0xff]
      %v217 = vld [vmem:[%s199 + $0x38] sm:$0xff]
      %v218 = vld [vmem:[%s1] sm:$0xf]
      %v219 = vld [vmem:[%s1 + $0x4] sm:$0xf]
      %v220 = vld [vmem:[%s1 + $0x8] sm:$0xf]
      %v221 = vld [vmem:[%s1 + $0xc] sm:$0xf]
      %v222 = vld [vmem:[%s1 + $0x10] sm:$0xf]
      %v223 = vld [vmem:[%s1 + $0x14] sm:$0xf]
      %v224 = vld [vmem:[%s1 + $0x18] sm:$0xf]
      %v225 = vld [vmem:[%s1 + $0x1c] sm:$0xf]
      %v226 = vld [vmem:[%s1 + $0x20] sm:$0xf]
      %v227 = vld [vmem:[%s1 + $0x24] sm:$0xf]
      %v228 = vld [vmem:[%s1 + $0x28] sm:$0xf]
      %v229 = vld [vmem:[%s1 + $0x2c] sm:$0xf]
      %v230 = vld [vmem:[%s1 + $0x30] sm:$0xf]
      %v231 = vld [vmem:[%s1 + $0x34] sm:$0xf]
      %v232 = vld [vmem:[%s1 + $0x38] sm:$0xf]
      %v233 = vld [vmem:[%s1 + $0x3c] sm:$0xf]
      %v234 = vld [vmem:[%s1 + $0x40] sm:$0xf]
      %v235 = vld [vmem:[%s1 + $0x44] sm:$0xf]
      %v236 = vld [vmem:[%s1 + $0x48] sm:$0xf]
      %v237 = vld [vmem:[%s1 + $0x4c] sm:$0xf]
      %v238 = vld [vmem:[%s1 + $0x50] sm:$0xf]
      %v239 = vld [vmem:[%s1 + $0x54] sm:$0xf]
      %v240 = vld [vmem:[%s1 + $0x58] sm:$0xf]
      %v241 = vld [vmem:[%s1 + $0x5c] sm:$0xf]
      %v242 = vld [vmem:[%s1 + $0x60] sm:$0xf]
      %v243 = vld [vmem:[%s1 + $0x64] sm:$0xf]
      %v244 = vld [vmem:[%s1 + $0x68] sm:$0xf]
      %v245 = vld [vmem:[%s1 + $0x6c] sm:$0xf]
      %v246 = vld [vmem:[%s1 + $0x70] sm:$0xf]
      %v247 = vld [vmem:[%s1 + $0x74] sm:$0xf]
      %v248 = vld [vmem:[%s1 + $0x78] sm:$0xf]
      %v249 = vld [vmem:[%s1 + $0x7c] sm:$0xf]
      %v250 = vld [vmem:[%s1 + $0x80] sm:$0xf]
      %v251 = vld [vmem:[%s1 + $0x84] sm:$0xf]
      %v252 = vld [vmem:[%s1 + $0x88] sm:$0xf]
      %v253 = vld [vmem:[%s1 + $0x8c] sm:$0xf]
      %v254 = vld [vmem:[%s1 + $0x90] sm:$0xf]
      %v255 = vld [vmem:[%s1 + $0x94] sm:$0xf]
      %v256 = vld [vmem:[%s1 + $0x98] sm:$0xf]
      %v257 = vld [vmem:[%s1 + $0x9c] sm:$0xf]
      %v258 = vld [vmem:[%s1 + $0xa0] sm:$0xf]
      %v259 = vld [vmem:[%s1 + $0xa4] sm:$0xf]
      %v260 = vld [vmem:[%s1 + $0xa8] sm:$0xf]
      %v261 = vld [vmem:[%s1 + $0xac] sm:$0xf]
      %v262 = vld [vmem:[%s1 + $0xb0] sm:$0xf]
      %v263 = vld [vmem:[%s1 + $0xb4] sm:$0xf]
      %v264 = vld [vmem:[%s1 + $0xb8] sm:$0xf]
      %v265 = vld [vmem:[%s1 + $0xbc] sm:$0xf]
      %v266 = vld [vmem:[%s1 + $0xc0] sm:$0xf]
      %v267 = vld [vmem:[%s1 + $0xc4] sm:$0xf]
      %v268 = vld [vmem:[%s1 + $0xc8] sm:$0xf]
      %v269 = vld [vmem:[%s1 + $0xcc] sm:$0xf]
      %v270 = vld [vmem:[%s1 + $0xd0] sm:$0xf]
      %v271 = vld [vmem:[%s1 + $0xd4] sm:$0xf]
      %v272 = vld [vmem:[%s1 + $0xd8] sm:$0xf]
      %v273 = vld [vmem:[%s1 + $0xdc] sm:$0xf]
      %v274 = vld [vmem:[%s1 + $0xe0] sm:$0xf]
      %v275 = vld [vmem:[%s1 + $0xe4] sm:$0xf]
      %v276 = vld [vmem:[%s1 + $0xe8] sm:$0xf]
      %v277 = vld [vmem:[%s1 + $0xec] sm:$0xf]
      %v278 = vld [vmem:[%s1 + $0xf0] sm:$0xf]
      %v279 = vld [vmem:[%s1 + $0xf4] sm:$0xf]
      %v280 = vld [vmem:[%s1 + $0xf8] sm:$0xf]
      %v281 = vld [vmem:[%s1 + $0xfc] sm:$0xf]
      %v282 = vld [vmem:[%s199 + $0x40] sm:$0x11]
      %v283 = vld [vmem:[%s199 + $0x48] sm:$0x11]
      %s284 = scalar_lea.vmem %s1, 256
      %v285 = vld [vmem:[%s284] sm:$0xf]
      %v286 = vld [vmem:[%s284 + $0x4] sm:$0xf]
      %v287 = vld [vmem:[%s284 + $0x8] sm:$0xf]
      %v288 = vld [vmem:[%s284 + $0xc] sm:$0xf]
      %v289 = vld [vmem:[%s284 + $0x10] sm:$0xf]
      %v290 = vld [vmem:[%s284 + $0x14] sm:$0xf]
      %v291 = vld [vmem:[%s284 + $0x18] sm:$0xf]
      %v292 = vld [vmem:[%s284 + $0x1c] sm:$0xf]
      %v293 = vld [vmem:[%s284 + $0x20] sm:$0xf]
      %v294 = vld [vmem:[%s284 + $0x24] sm:$0xf]
      %v295 = vld [vmem:[%s284 + $0x28] sm:$0xf]
      %v296 = vld [vmem:[%s284 + $0x2c] sm:$0xf]
      %v297 = vld [vmem:[%s284 + $0x30] sm:$0xf]
      %v298 = vld [vmem:[%s284 + $0x34] sm:$0xf]
      %v299 = vld [vmem:[%s284 + $0x38] sm:$0xf]
      %v300 = vld [vmem:[%s284 + $0x3c] sm:$0xf]
      %v301 = vld [vmem:[%s284 + $0x40] sm:$0xf]
      %v302 = vld [vmem:[%s284 + $0x44] sm:$0xf]
      %v303 = vld [vmem:[%s284 + $0x48] sm:$0xf]
      %v304 = vld [vmem:[%s284 + $0x4c] sm:$0xf]
      %v305 = vld [vmem:[%s284 + $0x50] sm:$0xf]
      %v306 = vld [vmem:[%s284 + $0x54] sm:$0xf]
      %v307 = vld [vmem:[%s284 + $0x58] sm:$0xf]
      %v308 = vld [vmem:[%s284 + $0x5c] sm:$0xf]
      %v309 = vld [vmem:[%s284 + $0x60] sm:$0xf]
      %v310 = vld [vmem:[%s284 + $0x64] sm:$0xf]
      %v311 = vld [vmem:[%s284 + $0x68] sm:$0xf]
      %v312 = vld [vmem:[%s284 + $0x6c] sm:$0xf]
      %v313 = vld [vmem:[%s284 + $0x70] sm:$0xf]
      %v314 = vld [vmem:[%s284 + $0x74] sm:$0xf]
      %v315 = vld [vmem:[%s284 + $0x78] sm:$0xf]
      %v316 = vld [vmem:[%s284 + $0x7c] sm:$0xf]
      %v317 = vld [vmem:[%s284 + $0x80] sm:$0xf]
      %v318 = vld [vmem:[%s284 + $0x84] sm:$0xf]
      %v319 = vld [vmem:[%s284 + $0x88] sm:$0xf]
      %v320 = vld [vmem:[%s284 + $0x8c] sm:$0xf]
      %v321 = vld [vmem:[%s284 + $0x90] sm:$0xf]
      %v322 = vld [vmem:[%s284 + $0x94] sm:$0xf]
      %v323 = vld [vmem:[%s284 + $0x98] sm:$0xf]
      %v324 = vld [vmem:[%s284 + $0x9c] sm:$0xf]
      %v325 = vld [vmem:[%s284 + $0xa0] sm:$0xf]
      %v326 = vld [vmem:[%s284 + $0xa4] sm:$0xf]
      %v327 = vld [vmem:[%s284 + $0xa8] sm:$0xf]
      %v328 = vld [vmem:[%s284 + $0xac] sm:$0xf]
      %v329 = vld [vmem:[%s284 + $0xb0] sm:$0xf]
      %v330 = vld [vmem:[%s284 + $0xb4] sm:$0xf]
      %v331 = vld [vmem:[%s284 + $0xb8] sm:$0xf]
      %v332 = vld [vmem:[%s284 + $0xbc] sm:$0xf]
      %v333 = vld [vmem:[%s284 + $0xc0] sm:$0xf]
      %v334 = vld [vmem:[%s284 + $0xc4] sm:$0xf]
      %v335 = vld [vmem:[%s284 + $0xc8] sm:$0xf]
      %v336 = vld [vmem:[%s284 + $0xcc] sm:$0xf]
      %v337 = vld [vmem:[%s284 + $0xd0] sm:$0xf]
      %v338 = vld [vmem:[%s284 + $0xd4] sm:$0xf]
      %v339 = vld [vmem:[%s284 + $0xd8] sm:$0xf]
      %v340 = vld [vmem:[%s284 + $0xdc] sm:$0xf]
      %v341 = vld [vmem:[%s284 + $0xe0] sm:$0xf]
      %v342 = vld [vmem:[%s284 + $0xe4] sm:$0xf]
      %v343 = vld [vmem:[%s284 + $0xe8] sm:$0xf]
      %v344 = vld [vmem:[%s284 + $0xec] sm:$0xf]
      %v345 = vld [vmem:[%s284 + $0xf0] sm:$0xf]
      %v346 = vld [vmem:[%s284 + $0xf4] sm:$0xf]
      %v347 = vld [vmem:[%s284 + $0xf8] sm:$0xf]
      %v348 = vld [vmem:[%s284 + $0xfc] sm:$0xf]
      %v359 = vunpack.c.l.b16 %v210
      %v360 = vunpack.c.h.b16 %v210
      %v361 = vunpack.c.l.b16 %v211
      %v362 = vunpack.c.h.b16 %v211
      %v363 = vunpack.c.l.b16 %v212
      %v364 = vunpack.c.h.b16 %v212
      %v365 = vunpack.c.l.b16 %v213
      %v366 = vunpack.c.h.b16 %v213
      %v367 = vunpack.c.l.b16 %v214
      %v368 = vunpack.c.h.b16 %v214
      %v369 = vunpack.c.l.b16 %v215
      %v370 = vunpack.c.h.b16 %v215
      %v371 = vunpack.c.l.b16 %v216
      %v372 = vunpack.c.h.b16 %v216
      %v373 = vunpack.c.l.b16 %v217
      %v374 = vunpack.c.h.b16 %v217
      %v375 = vunpack.c.l.b16 %v282
      %v376 = vunpack.c.h.b16 %v282
      %v377 = vunpack.c.l.b16 %v283
      %v378 = vunpack.c.h.b16 %v283
      %v379 = vpack.c.b16 %v363, %v359
      %v380 = vpack.c.b16 %v364, %v360
      %v381 = vpack.c.b16 %v365, %v361
      %v382 = vpack.c.b16 %v366, %v362
      %v383 = vpack.c.b16 %v371, %v367
      %v384 = vpack.c.b16 %v372, %v368
      %v385 = vpack.c.b16 %v373, %v369
      %v386 = vpack.c.b16 %v374, %v370
      %v387 = vpack.c.b16 %v375, %v375
      %v388 = vpack.c.b16 %v376, %v376
      %v389 = vpack.c.b16 %v377, %v377
      %v390 = vpack.c.b16 %v378, %v378
      %vm391 = vsmask.f32 7424
      %v393 = vshrl.u32 %v379, 16
      %v395 = vshll.u32 %v379, 16
      %v397 = vrot.slane %v395, 1
      %v398 = vor.u32 %v393, %v397
      %v400 = vshll.u32 %v383, 16
      %v402 = vrot.slane %v400, 1
      %v403 = vsel %vm391, %v398, %v402
      %v405 = vshrl.u32 %v380, 16
      %v407 = vshll.u32 %v380, 16
      %v409 = vrot.slane %v407, 1
      %v410 = vor.u32 %v405, %v409
      %v412 = vshll.u32 %v384, 16
      %v414 = vrot.slane %v412, 1
      %v415 = vsel %vm391, %v410, %v414
      %v417 = vshrl.u32 %v381, 16
      %v419 = vshll.u32 %v381, 16
      %v421 = vrot.slane %v419, 1
      %v422 = vor.u32 %v417, %v421
      %v424 = vshll.u32 %v385, 16
      %v426 = vrot.slane %v424, 1
      %v427 = vsel %vm391, %v422, %v426
      %v429 = vshrl.u32 %v382, 16
      %v431 = vshll.u32 %v382, 16
      %v433 = vrot.slane %v431, 1
      %v434 = vor.u32 %v429, %v433
      %v436 = vshll.u32 %v386, 16
      %v438 = vrot.slane %v436, 1
      %v439 = vsel %vm391, %v434, %v438
      %v440 = vshrl.u32 %v383, 16
      %v442 = vor.u32 %v440, %v402
      %v444 = vshll.u32 %v387, 16
      %v446 = vrot.slane %v444, 1
      %v447 = vsel %vm391, %v442, %v446
      %v448 = vshrl.u32 %v384, 16
      %v450 = vor.u32 %v448, %v414
      %v452 = vshll.u32 %v388, 16
      %v454 = vrot.slane %v452, 1
      %v455 = vsel %vm391, %v450, %v454
      %v456 = vshrl.u32 %v385, 16
      %v458 = vor.u32 %v456, %v426
      %v460 = vshll.u32 %v389, 16
      %v462 = vrot.slane %v460, 1
      %v463 = vsel %vm391, %v458, %v462
      %v464 = vshrl.u32 %v386, 16
      %v466 = vor.u32 %v464, %v438
      %v468 = vshll.u32 %v390, 16
      %v470 = vrot.slane %v468, 1
      %v471 = vsel %vm391, %v466, %v470
      %v544 = vunpack.c.l.b16 %v285
      %v545 = vunpack.c.l.b16 %v286
      %v546 = vunpack.c.l.b16 %v287
      %v547 = vunpack.c.l.b16 %v288
      %v548 = vunpack.c.l.b16 %v289
      %v549 = vunpack.c.l.b16 %v290
      %v550 = vunpack.c.l.b16 %v291
      %v551 = vunpack.c.l.b16 %v292
      %v552 = vunpack.c.l.b16 %v293
      %v553 = vunpack.c.l.b16 %v294
      %v554 = vunpack.c.l.b16 %v295
      %v555 = vunpack.c.l.b16 %v296
      %v556 = vunpack.c.l.b16 %v297
      %v557 = vunpack.c.l.b16 %v298
      %v558 = vunpack.c.l.b16 %v299
      %v559 = vunpack.c.l.b16 %v300
      %v560 = vunpack.c.l.b16 %v301
      %v561 = vunpack.c.l.b16 %v302
      %v562 = vunpack.c.l.b16 %v303
      %v563 = vunpack.c.l.b16 %v304
      %v564 = vunpack.c.l.b16 %v305
      %v565 = vunpack.c.l.b16 %v306
      %v566 = vunpack.c.l.b16 %v307
      %v567 = vunpack.c.l.b16 %v308
      %v568 = vunpack.c.l.b16 %v309
      %v569 = vunpack.c.l.b16 %v310
      %v570 = vunpack.c.l.b16 %v311
      %v571 = vunpack.c.l.b16 %v312
      %v572 = vunpack.c.l.b16 %v313
      %v573 = vunpack.c.l.b16 %v314
      %v574 = vunpack.c.l.b16 %v315
      %v575 = vunpack.c.l.b16 %v316
      %v576 = vunpack.c.l.b16 %v317
      %v577 = vunpack.c.l.b16 %v318
      %v578 = vunpack.c.l.b16 %v319
      %v579 = vunpack.c.l.b16 %v320
      %v580 = vunpack.c.l.b16 %v321
      %v581 = vunpack.c.l.b16 %v322
      %v582 = vunpack.c.l.b16 %v323
      %v583 = vunpack.c.l.b16 %v324
      %v584 = vunpack.c.l.b16 %v325
      %v585 = vunpack.c.l.b16 %v326
      %v586 = vunpack.c.l.b16 %v327
      %v587 = vunpack.c.l.b16 %v328
      %v588 = vunpack.c.l.b16 %v329
      %v589 = vunpack.c.l.b16 %v330
      %v590 = vunpack.c.l.b16 %v331
      %v591 = vunpack.c.l.b16 %v332
      %v592 = vunpack.c.l.b16 %v333
      %v593 = vunpack.c.l.b16 %v334
      %v594 = vunpack.c.l.b16 %v335
      %v595 = vunpack.c.l.b16 %v336
      %v596 = vunpack.c.l.b16 %v337
      %v597 = vunpack.c.l.b16 %v338
      %v598 = vunpack.c.l.b16 %v339
      %v599 = vunpack.c.l.b16 %v340
      %v600 = vunpack.c.l.b16 %v341
      %v601 = vunpack.c.l.b16 %v342
      %v602 = vunpack.c.l.b16 %v343
      %v603 = vunpack.c.l.b16 %v344
      %v604 = vunpack.c.l.b16 %v345
      %v605 = vunpack.c.l.b16 %v346
      %v606 = vunpack.c.l.b16 %v347
      %v607 = vunpack.c.l.b16 %v348
      %v608 = vpack.c.b16 %v545, %v544
      %v609 = vpack.c.b16 %v547, %v546
      %v610 = vpack.c.b16 %v549, %v548
      %v611 = vpack.c.b16 %v551, %v550
      %v612 = vpack.c.b16 %v553, %v552
      %v613 = vpack.c.b16 %v555, %v554
      %v614 = vpack.c.b16 %v557, %v556
      %v615 = vpack.c.b16 %v559, %v558
      %v616 = vpack.c.b16 %v561, %v560
      %v617 = vpack.c.b16 %v563, %v562
      %v618 = vpack.c.b16 %v565, %v564
      %v619 = vpack.c.b16 %v567, %v566
      %v620 = vpack.c.b16 %v569, %v568
      %v621 = vpack.c.b16 %v571, %v570
      %v622 = vpack.c.b16 %v573, %v572
      %v623 = vpack.c.b16 %v575, %v574
      %v624 = vpack.c.b16 %v577, %v576
      %v625 = vpack.c.b16 %v579, %v578
      %v626 = vpack.c.b16 %v581, %v580
      %v627 = vpack.c.b16 %v583, %v582
      %v628 = vpack.c.b16 %v585, %v584
      %v629 = vpack.c.b16 %v587, %v586
      %v630 = vpack.c.b16 %v589, %v588
      %v631 = vpack.c.b16 %v591, %v590
      %v632 = vpack.c.b16 %v593, %v592
      %v633 = vpack.c.b16 %v595, %v594
      %v634 = vpack.c.b16 %v597, %v596
      %v635 = vpack.c.b16 %v599, %v598
      %v636 = vpack.c.b16 %v601, %v600
      %v637 = vpack.c.b16 %v603, %v602
      %v638 = vpack.c.b16 %v605, %v604
      %v639 = vpack.c.b16 %v607, %v606
      %672 = vmatprep.subr.bf16.mxu0 0
      %673 = vmatpush1.bf16.msra.mxu0 %v608
      %674 = vmatprep.subr.bf16.mxu0 0
      %675 = vmatpush1.bf16.msra.mxu0 %v609
      %676 = vmatprep.subr.bf16.mxu0 0
      %677 = vmatpush1.bf16.msra.mxu0 %v610
      %678 = vmatprep.subr.bf16.mxu0 0
      %679 = vmatpush1.bf16.msra.mxu0 %v611
      %680 = vmatprep.subr.bf16.mxu0 0
      %681 = vmatpush1.bf16.msra.mxu0 %v612
      %682 = vmatprep.subr.bf16.mxu0 0
      %683 = vmatpush1.bf16.msra.mxu0 %v613
      %684 = vmatprep.subr.bf16.mxu0 0
      %685 = vmatpush1.bf16.msra.mxu0 %v614
      %686 = vmatprep.subr.bf16.mxu0 0
      %687 = vmatpush1.bf16.msra.mxu0 %v615
      %688 = vmatprep.subr.bf16.mxu0 0
      %689 = vmatpush1.bf16.msra.mxu0 %v616
      %690 = vmatprep.subr.bf16.mxu0 0
      %691 = vmatpush1.bf16.msra.mxu0 %v617
      %692 = vmatprep.subr.bf16.mxu0 0
      %693 = vmatpush1.bf16.msra.mxu0 %v618
      %694 = vmatprep.subr.bf16.mxu0 0
      %695 = vmatpush1.bf16.msra.mxu0 %v619
      %696 = vmatprep.subr.bf16.mxu0 0
      %697 = vmatpush1.bf16.msra.mxu0 %v620
      %698 = vmatprep.subr.bf16.mxu0 0
      %699 = vmatpush1.bf16.msra.mxu0 %v621
      %700 = vmatprep.subr.bf16.mxu0 0
      %701 = vmatpush1.bf16.msra.mxu0 %v622
      %702 = vmatprep.subr.bf16.mxu0 0
      %703 = vmatpush1.bf16.msra.mxu0 %v623
      %704 = vmatprep.mubr.bf16.mxu0 %v415
      %705 = vmatmul.mubr.bf16.gmra.mrb[0].mxu0 %v403
      %v706 = vpop.f32.mrb[0].mxu0
      %v707 = vadd.f32 0.0, %v706
      %v708 = vpop.f32.mrb[0].mxu0
      %v709 = vpop.f32.mrb[0].mxu0
      %v710 = vadd.f32 0.0, %v709
      %v711 = vpop.f32.mrb[0].mxu0
      %712 = vmatprep.mubr.bf16.mxu0 %v455
      %713 = vmatmul.mubr.bf16.gmra.mrb[0].mxu0 %v447
      %v714 = vpop.f32.mrb[0].mxu0
      %v715 = vadd.f32 0.0, %v714
      %v716 = vpop.f32.mrb[0].mxu0
      %v717 = vpop.f32.mrb[0].mxu0
      %v718 = vadd.f32 0.0, %v717
      %v719 = vpop.f32.mrb[0].mxu0
      %720 = vdwg.mxu0
      %721 = vmatprep.subr.bf16.mxu0 0
      %722 = vmatpush1.bf16.msra.mxu0 %v624
      %723 = vmatprep.subr.bf16.mxu0 0
      %724 = vmatpush1.bf16.msra.mxu0 %v625
      %725 = vmatprep.subr.bf16.mxu0 0
      %726 = vmatpush1.bf16.msra.mxu0 %v626
      %727 = vmatprep.subr.bf16.mxu0 0
      %728 = vmatpush1.bf16.msra.mxu0 %v627
      %729 = vmatprep.subr.bf16.mxu0 0
      %730 = vmatpush1.bf16.msra.mxu0 %v628
      %731 = vmatprep.subr.bf16.mxu0 0
      %732 = vmatpush1.bf16.msra.mxu0 %v629
      %733 = vmatprep.subr.bf16.mxu0 0
      %734 = vmatpush1.bf16.msra.mxu0 %v630
      %735 = vmatprep.subr.bf16.mxu0 0
      %736 = vmatpush1.bf16.msra.mxu0 %v631
      %737 = vmatprep.subr.bf16.mxu0 0
      %738 = vmatpush1.bf16.msra.mxu0 %v632
      %739 = vmatprep.subr.bf16.mxu0 0
      %740 = vmatpush1.bf16.msra.mxu0 %v633
      %741 = vmatprep.subr.bf16.mxu0 0
      %742 = vmatpush1.bf16.msra.mxu0 %v634
      %743 = vmatprep.subr.bf16.mxu0 0
      %744 = vmatpush1.bf16.msra.mxu0 %v635
      %745 = vmatprep.subr.bf16.mxu0 0
      %746 = vmatpush1.bf16.msra.mxu0 %v636
      %747 = vmatprep.subr.bf16.mxu0 0
      %748 = vmatpush1.bf16.msra.mxu0 %v637
      %749 = vmatprep.subr.bf16.mxu0 0
      %750 = vmatpush1.bf16.msra.mxu0 %v638
      %751 = vmatprep.subr.bf16.mxu0 0
      %752 = vmatpush1.bf16.msra.mxu0 %v639
      %753 = vmatprep.mubr.bf16.mxu0 %v439
      %754 = vmatmul.mubr.bf16.gmra.mrb[0].mxu0 %v427
      %v755 = vpop.f32.mrb[0].mxu0
      %v756 = vadd.f32 %v707, %v755
      %v757 = vpop.f32.mrb[0].mxu0
      %v758 = vpop.f32.mrb[0].mxu0
      %v759 = vadd.f32 %v710, %v758
      %v760 = vpop.f32.mrb[0].mxu0
      %761 = vmatprep.mubr.bf16.mxu0 %v471
      %762 = vmatmul.mubr.bf16.gmra.mrb[0].mxu0 %v463
      %v763 = vpop.f32.mrb[0].mxu0
      %v764 = vadd.f32 %v715, %v763
      %v765 = vpop.f32.mrb[0].mxu0
      %v766 = vpop.f32.mrb[0].mxu0
      %v767 = vadd.f32 %v718, %v766
      %v768 = vpop.f32.mrb[0].mxu0
      %769 = vdwg.mxu0
      %v842 = vunpack.c.l.b16 %v218
      %v843 = vunpack.c.l.b16 %v219
      %v844 = vunpack.c.l.b16 %v220
      %v845 = vunpack.c.l.b16 %v221
      %v846 = vunpack.c.l.b16 %v222
      %v847 = vunpack.c.l.b16 %v223
      %v848 = vunpack.c.l.b16 %v224
      %v849 = vunpack.c.l.b16 %v225
      %v850 = vunpack.c.l.b16 %v226
      %v851 = vunpack.c.l.b16 %v227
      %v852 = vunpack.c.l.b16 %v228
      %v853 = vunpack.c.l.b16 %v229
      %v854 = vunpack.c.l.b16 %v230
      %v855 = vunpack.c.l.b16 %v231
      %v856 = vunpack.c.l.b16 %v232
      %v857 = vunpack.c.l.b16 %v233
      %v858 = vunpack.c.l.b16 %v234
      %v859 = vunpack.c.l.b16 %v235
      %v860 = vunpack.c.l.b16 %v236
      %v861 = vunpack.c.l.b16 %v237
      %v862 = vunpack.c.l.b16 %v238
      %v863 = vunpack.c.l.b16 %v239
      %v864 = vunpack.c.l.b16 %v240
      %v865 = vunpack.c.l.b16 %v241
      %v866 = vunpack.c.l.b16 %v242
      %v867 = vunpack.c.l.b16 %v243
      %v868 = vunpack.c.l.b16 %v244
      %v869 = vunpack.c.l.b16 %v245
      %v870 = vunpack.c.l.b16 %v246
      %v871 = vunpack.c.l.b16 %v247
      %v872 = vunpack.c.l.b16 %v248
      %v873 = vunpack.c.l.b16 %v249
      %v874 = vunpack.c.l.b16 %v250
      %v875 = vunpack.c.l.b16 %v251
      %v876 = vunpack.c.l.b16 %v252
      %v877 = vunpack.c.l.b16 %v253
      %v878 = vunpack.c.l.b16 %v254
      %v879 = vunpack.c.l.b16 %v255
      %v880 = vunpack.c.l.b16 %v256
      %v881 = vunpack.c.l.b16 %v257
      %v882 = vunpack.c.l.b16 %v258
      %v883 = vunpack.c.l.b16 %v259
      %v884 = vunpack.c.l.b16 %v260
      %v885 = vunpack.c.l.b16 %v261
      %v886 = vunpack.c.l.b16 %v262
      %v887 = vunpack.c.l.b16 %v263
      %v888 = vunpack.c.l.b16 %v264
      %v889 = vunpack.c.l.b16 %v265
      %v890 = vunpack.c.l.b16 %v266
      %v891 = vunpack.c.l.b16 %v267
      %v892 = vunpack.c.l.b16 %v268
      %v893 = vunpack.c.l.b16 %v269
      %v894 = vunpack.c.l.b16 %v270
      %v895 = vunpack.c.l.b16 %v271
      %v896 = vunpack.c.l.b16 %v272
      %v897 = vunpack.c.l.b16 %v273
      %v898 = vunpack.c.l.b16 %v274
      %v899 = vunpack.c.l.b16 %v275
      %v900 = vunpack.c.l.b16 %v276
      %v901 = vunpack.c.l.b16 %v277
      %v902 = vunpack.c.l.b16 %v278
      %v903 = vunpack.c.l.b16 %v279
      %v904 = vunpack.c.l.b16 %v280
      %v905 = vunpack.c.l.b16 %v281
      %v906 = vpack.c.b16 %v843, %v842
      %v907 = vpack.c.b16 %v845, %v844
      %v908 = vpack.c.b16 %v847, %v846
      %v909 = vpack.c.b16 %v849, %v848
      %v910 = vpack.c.b16 %v851, %v850
      %v911 = vpack.c.b16 %v853, %v852
      %v912 = vpack.c.b16 %v855, %v854
      %v913 = vpack.c.b16 %v857, %v856
      %v914 = vpack.c.b16 %v859, %v858
      %v915 = vpack.c.b16 %v861, %v860
      %v916 = vpack.c.b16 %v863, %v862
      %v917 = vpack.c.b16 %v865, %v864
      %v918 = vpack.c.b16 %v867, %v866
      %v919 = vpack.c.b16 %v869, %v868
      %v920 = vpack.c.b16 %v871, %v870
      %v921 = vpack.c.b16 %v873, %v872
      %v922 = vpack.c.b16 %v875, %v874
      %v923 = vpack.c.b16 %v877, %v876
      %v924 = vpack.c.b16 %v879, %v878
      %v925 = vpack.c.b16 %v881, %v880
      %v926 = vpack.c.b16 %v883, %v882
      %v927 = vpack.c.b16 %v885, %v884
      %v928 = vpack.c.b16 %v887, %v886
      %v929 = vpack.c.b16 %v889, %v888
      %v930 = vpack.c.b16 %v891, %v890
      %v931 = vpack.c.b16 %v893, %v892
      %v932 = vpack.c.b16 %v895, %v894
      %v933 = vpack.c.b16 %v897, %v896
      %v934 = vpack.c.b16 %v899, %v898
      %v935 = vpack.c.b16 %v901, %v900
      %v936 = vpack.c.b16 %v903, %v902
      %v937 = vpack.c.b16 %v905, %v904
      %970 = vmatprep.subr.bf16.mxu0 0
      %971 = vmatpush1.bf16.msra.mxu0 %v906
      %972 = vmatprep.subr.bf16.mxu0 0
      %973 = vmatpush1.bf16.msra.mxu0 %v907
      %974 = vmatprep.subr.bf16.mxu0 0
      %975 = vmatpush1.bf16.msra.mxu0 %v908
      %976 = vmatprep.subr.bf16.mxu0 0
      %977 = vmatpush1.bf16.msra.mxu0 %v909
      %978 = vmatprep.subr.bf16.mxu0 0
      %979 = vmatpush1.bf16.msra.mxu0 %v910
      %980 = vmatprep.subr.bf16.mxu0 0
      %981 = vmatpush1.bf16.msra.mxu0 %v911
      %982 = vmatprep.subr.bf16.mxu0 0
      %983 = vmatpush1.bf16.msra.mxu0 %v912
      %984 = vmatprep.subr.bf16.mxu0 0
      %985 = vmatpush1.bf16.msra.mxu0 %v913
      %986 = vmatprep.subr.bf16.mxu0 0
      %987 = vmatpush1.bf16.msra.mxu0 %v914
      %988 = vmatprep.subr.bf16.mxu0 0
      %989 = vmatpush1.bf16.msra.mxu0 %v915
      %990 = vmatprep.subr.bf16.mxu0 0
      %991 = vmatpush1.bf16.msra.mxu0 %v916
      %992 = vmatprep.subr.bf16.mxu0 0
      %993 = vmatpush1.bf16.msra.mxu0 %v917
      %994 = vmatprep.subr.bf16.mxu0 0
      %995 = vmatpush1.bf16.msra.mxu0 %v918
      %996 = vmatprep.subr.bf16.mxu0 0
      %997 = vmatpush1.bf16.msra.mxu0 %v919
      %998 = vmatprep.subr.bf16.mxu0 0
      %999 = vmatpush1.bf16.msra.mxu0 %v920
      %1000 = vmatprep.subr.bf16.mxu0 0
      %1001 = vmatpush1.bf16.msra.mxu0 %v921
      %1002 = vmatprep.mubr.bf16.mxu0 %v380
      %1003 = vmatmul.mubr.bf16.gmra.mrb[0].mxu0 %v379
      %v1004 = vpop.f32.mrb[0].mxu0
      %v1005 = vadd.f32 %v756, %v1004
      %v1006 = vpop.f32.mrb[0].mxu0
      %v1007 = vpop.f32.mrb[0].mxu0
      %v1008 = vadd.f32 %v759, %v1007
      %v1009 = vpop.f32.mrb[0].mxu0
      %1010 = vmatprep.mubr.bf16.mxu0 %v384
      %1011 = vmatmul.mubr.bf16.gmra.mrb[0].mxu0 %v383
      %v1012 = vpop.f32.mrb[0].mxu0
      %v1013 = vadd.f32 %v764, %v1012
      %v1014 = vpop.f32.mrb[0].mxu0
      %v1015 = vpop.f32.mrb[0].mxu0
      %v1016 = vadd.f32 %v767, %v1015
      %v1017 = vpop.f32.mrb[0].mxu0
      %1018 = vdwg.mxu0
      %1019 = vmatprep.subr.bf16.mxu0 0
      %1020 = vmatpush1.bf16.msra.mxu0 %v922
      %1021 = vmatprep.subr.bf16.mxu0 0
      %1022 = vmatpush1.bf16.msra.mxu0 %v923
      %1023 = vmatprep.subr.bf16.mxu0 0
      %1024 = vmatpush1.bf16.msra.mxu0 %v924
      %1025 = vmatprep.subr.bf16.mxu0 0
      %1026 = vmatpush1.bf16.msra.mxu0 %v925
      %1027 = vmatprep.subr.bf16.mxu0 0
      %1028 = vmatpush1.bf16.msra.mxu0 %v926
      %1029 = vmatprep.subr.bf16.mxu0 0
      %1030 = vmatpush1.bf16.msra.mxu0 %v927
      %1031 = vmatprep.subr.bf16.mxu0 0
      %1032 = vmatpush1.bf16.msra.mxu0 %v928
      %1033 = vmatprep.subr.bf16.mxu0 0
      %1034 = vmatpush1.bf16.msra.mxu0 %v929
      %1035 = vmatprep.subr.bf16.mxu0 0
      %1036 = vmatpush1.bf16.msra.mxu0 %v930
      %1037 = vmatprep.subr.bf16.mxu0 0
      %1038 = vmatpush1.bf16.msra.mxu0 %v931
      %1039 = vmatprep.subr.bf16.mxu0 0
      %1040 = vmatpush1.bf16.msra.mxu0 %v932
      %1041 = vmatprep.subr.bf16.mxu0 0
      %1042 = vmatpush1.bf16.msra.mxu0 %v933
      %1043 = vmatprep.subr.bf16.mxu0 0
      %1044 = vmatpush1.bf16.msra.mxu0 %v934
      %1045 = vmatprep.subr.bf16.mxu0 0
      %1046 = vmatpush1.bf16.msra.mxu0 %v935
      %1047 = vmatprep.subr.bf16.mxu0 0
      %1048 = vmatpush1.bf16.msra.mxu0 %v936
      %1049 = vmatprep.subr.bf16.mxu0 0
      %1050 = vmatpush1.bf16.msra.mxu0 %v937
      %1051 = vmatprep.mubr.bf16.mxu0 %v382
      %1052 = vmatmul.mubr.bf16.gmra.mrb[0].mxu0 %v381
      %v1053 = vpop.f32.mrb[0].mxu0
      %v1054 = vadd.f32 %v1005, %v1053
      %v1055 = vpop.f32.mrb[0].mxu0
      %v1056 = vpop.f32.mrb[0].mxu0
      %v1057 = vadd.f32 %v1008, %v1056
      %v1058 = vpop.f32.mrb[0].mxu0
      %1059 = vmatprep.mubr.bf16.mxu0 %v386
      %1060 = vmatmul.mubr.bf16.gmra.mrb[0].mxu0 %v385
      %v1061 = vpop.f32.mrb[0].mxu0
      %v1062 = vadd.f32 %v1013, %v1061
      %v1063 = vpop.f32.mrb[0].mxu0
      %v1064 = vpop.f32.mrb[0].mxu0
      %v1065 = vadd.f32 %v1016, %v1064
      %v1066 = vpop.f32.mrb[0].mxu0
      %1067 = vdwg.mxu0
      %v1068 = vld [vmem:[%s199] sm:$0xcc]
      %v1069 = vld [vmem:[%s199 + $0x8] sm:$0xcc]
      %v1070 = vld [vmem:[%s199 + $0x40] sm:$0x77]
      %v1071 = vld [vmem:[%s199 + $0x48] sm:$0x77]
      %s1072 = scalar_lea.vmem %s1, 512
      %v1073 = vld [vmem:[%s1072] sm:$0xf]
      %v1074 = vld [vmem:[%s1072 + $0x4] sm:$0xf]
      %v1075 = vld [vmem:[%s1072 + $0x8] sm:$0xf]
      %v1076 = vld [vmem:[%s1072 + $0xc] sm:$0xf]
      %v1077 = vld [vmem:[%s1072 + $0x10] sm:$0xf]
      %v1078 = vld [vmem:[%s1072 + $0x14] sm:$0xf]
      %v1079 = vld [vmem:[%s1072 + $0x18] sm:$0xf]
      %v1080 = vld [vmem:[%s1072 + $0x1c] sm:$0xf]
      %v1081 = vld [vmem:[%s1072 + $0x20] sm:$0xf]
      %v1082 = vld [vmem:[%s1072 + $0x24] sm:$0xf]
      %v1083 = vld [vmem:[%s1072 + $0x28] sm:$0xf]
      %v1084 = vld [vmem:[%s1072 + $0x2c] sm:$0xf]
      %v1085 = vld [vmem:[%s1072 + $0x30] sm:$0xf]
      %v1086 = vld [vmem:[%s1072 + $0x34] sm:$0xf]
      %v1087 = vld [vmem:[%s1072 + $0x38] sm:$0xf]
      %v1088 = vld [vmem:[%s1072 + $0x3c] sm:$0xf]
      %v1089 = vld [vmem:[%s1072 + $0x40] sm:$0xf]
      %v1090 = vld [vmem:[%s1072 + $0x44] sm:$0xf]
      %v1091 = vld [vmem:[%s1072 + $0x48] sm:$0xf]
      %v1092 = vld [vmem:[%s1072 + $0x4c] sm:$0xf]
      %v1093 = vld [vmem:[%s1072 + $0x50] sm:$0xf]
      %v1094 = vld [vmem:[%s1072 + $0x54] sm:$0xf]
      %v1095 = vld [vmem:[%s1072 + $0x58] sm:$0xf]
      %v1096 = vld [vmem:[%s1072 + $0x5c] sm:$0xf]
      %v1097 = vld [vmem:[%s1072 + $0x60] sm:$0xf]
      %v1098 = vld [vmem:[%s1072 + $0x64] sm:$0xf]
      %v1099 = vld [vmem:[%s1072 + $0x68] sm:$0xf]
      %v1100 = vld [vmem:[%s1072 + $0x6c] sm:$0xf]
      %v1101 = vld [vmem:[%s1072 + $0x70] sm:$0xf]
      %v1102 = vld [vmem:[%s1072 + $0x74] sm:$0xf]
      %v1103 = vld [vmem:[%s1072 + $0x78] sm:$0xf]
      %v1104 = vld [vmem:[%s1072 + $0x7c] sm:$0xf]
      %v1105 = vld [vmem:[%s1072 + $0x80] sm:$0xf]
      %v1106 = vld [vmem:[%s1072 + $0x84] sm:$0xf]
      %v1107 = vld [vmem:[%s1072 + $0x88] sm:$0xf]
      %v1108 = vld [vmem:[%s1072 + $0x8c] sm:$0xf]
      %v1109 = vld [vmem:[%s1072 + $0x90] sm:$0xf]
      %v1110 = vld [vmem:[%s1072 + $0x94] sm:$0xf]
      %v1111 = vld [vmem:[%s1072 + $0x98] sm:$0xf]
      %v1112 = vld [vmem:[%s1072 + $0x9c] sm:$0xf]
      %v1113 = vld [vmem:[%s1072 + $0xa0] sm:$0xf]
      %v1114 = vld [vmem:[%s1072 + $0xa4] sm:$0xf]
      %v1115 = vld [vmem:[%s1072 + $0xa8] sm:$0xf]
      %v1116 = vld [vmem:[%s1072 + $0xac] sm:$0xf]
      %v1117 = vld [vmem:[%s1072 + $0xb0] sm:$0xf]
      %v1118 = vld [vmem:[%s1072 + $0xb4] sm:$0xf]
      %v1119 = vld [vmem:[%s1072 + $0xb8] sm:$0xf]
      %v1120 = vld [vmem:[%s1072 + $0xbc] sm:$0xf]
      %v1121 = vld [vmem:[%s1072 + $0xc0] sm:$0xf]
      %v1122 = vld [vmem:[%s1072 + $0xc4] sm:$0xf]
      %v1123 = vld [vmem:[%s1072 + $0xc8] sm:$0xf]
      %v1124 = vld [vmem:[%s1072 + $0xcc] sm:$0xf]
      %v1125 = vld [vmem:[%s1072 + $0xd0] sm:$0xf]
      %v1126 = vld [vmem:[%s1072 + $0xd4] sm:$0xf]
      %v1127 = vld [vmem:[%s1072 + $0xd8] sm:$0xf]
      %v1128 = vld [vmem:[%s1072 + $0xdc] sm:$0xf]
      %v1129 = vld [vmem:[%s1072 + $0xe0] sm:$0xf]
      %v1130 = vld [vmem:[%s1072 + $0xe4] sm:$0xf]
      %v1131 = vld [vmem:[%s1072 + $0xe8] sm:$0xf]
      %v1132 = vld [vmem:[%s1072 + $0xec] sm:$0xf]
      %v1133 = vld [vmem:[%s1072 + $0xf0] sm:$0xf]
      %v1134 = vld [vmem:[%s1072 + $0xf4] sm:$0xf]
      %v1135 = vld [vmem:[%s1072 + $0xf8] sm:$0xf]
      %v1136 = vld [vmem:[%s1072 + $0xfc] sm:$0xf]
      %v1141 = vunpack.c.l.b16 %v1068
      %v1142 = vunpack.c.h.b16 %v1068
      %v1143 = vunpack.c.l.b16 %v1069
      %v1144 = vunpack.c.h.b16 %v1069
      %v1145 = vunpack.c.l.b16 %v1070
      %v1146 = vunpack.c.h.b16 %v1070
      %v1147 = vunpack.c.l.b16 %v1071
      %v1148 = vunpack.c.h.b16 %v1071
      %v1149 = vpack.c.b16 %v363, %v1141
      %v1150 = vpack.c.b16 %v364, %v1142
      %v1151 = vpack.c.b16 %v365, %v1143
      %v1152 = vpack.c.b16 %v366, %v1144
      %v1153 = vpack.c.b16 %v1145, %v1145
      %v1154 = vpack.c.b16 %v1146, %v1146
      %v1155 = vpack.c.b16 %v1147, %v1147
      %v1156 = vpack.c.b16 %v1148, %v1148
      %vm1157 = vsmask.f32 5376
      %v1159 = vshrl.u32 %v1149, 16
      %v1161 = vrot.slane %v1159, 2
      %v1162 = vshll.u32 %v1149, 16
      %v1164 = vrot.slane %v1162, 3
      %v1165 = vor.u32 %v1161, %v1164
      %v1166 = vrot.slane %v440, 2
      %v1167 = vrot.slane %v400, 3
      %v1168 = vor.u32 %v1166, %v1167
      %v1169 = vsel %vm1157, %v1165, %v1168
      %v1171 = vshrl.u32 %v1150, 16
      %v1173 = vrot.slane %v1171, 2
      %v1174 = vshll.u32 %v1150, 16
      %v1176 = vrot.slane %v1174, 3
      %v1177 = vor.u32 %v1173, %v1176
      %v1178 = vrot.slane %v448, 2
      %v1179 = vrot.slane %v412, 3
      %v1180 = vor.u32 %v1178, %v1179
      %v1181 = vsel %vm1157, %v1177, %v1180
      %v1183 = vshrl.u32 %v1151, 16
      %v1185 = vrot.slane %v1183, 2
      %v1186 = vshll.u32 %v1151, 16
      %v1188 = vrot.slane %v1186, 3
      %v1189 = vor.u32 %v1185, %v1188
      %v1190 = vrot.slane %v456, 2
      %v1191 = vrot.slane %v424, 3
      %v1192 = vor.u32 %v1190, %v1191
      %v1193 = vsel %vm1157, %v1189, %v1192
      %v1195 = vshrl.u32 %v1152, 16
      %v1197 = vrot.slane %v1195, 2
      %v1198 = vshll.u32 %v1152, 16
      %v1200 = vrot.slane %v1198, 3
      %v1201 = vor.u32 %v1197, %v1200
      %v1202 = vrot.slane %v464, 2
      %v1203 = vrot.slane %v436, 3
      %v1204 = vor.u32 %v1202, %v1203
      %v1205 = vsel %vm1157, %v1201, %v1204
      %v1207 = vshrl.u32 %v1153, 16
      %v1209 = vrot.slane %v1207, 2
      %v1210 = vshll.u32 %v1153, 16
      %v1212 = vrot.slane %v1210, 3
      %v1213 = vor.u32 %v1209, %v1212
      %v1214 = vsel %vm1157, %v1168, %v1213
      %v1216 = vshrl.u32 %v1154, 16
      %v1218 = vrot.slane %v1216, 2
      %v1219 = vshll.u32 %v1154, 16
      %v1221 = vrot.slane %v1219, 3
      %v1222 = vor.u32 %v1218, %v1221
      %v1223 = vsel %vm1157, %v1180, %v1222
      %v1225 = vshrl.u32 %v1155, 16
      %v1227 = vrot.slane %v1225, 2
      %v1228 = vshll.u32 %v1155, 16
      %v1230 = vrot.slane %v1228, 3
      %v1231 = vor.u32 %v1227, %v1230
      %v1232 = vsel %vm1157, %v1192, %v1231
      %v1234 = vshrl.u32 %v1156, 16
      %v1236 = vrot.slane %v1234, 2
      %v1237 = vshll.u32 %v1156, 16
      %v1239 = vrot.slane %v1237, 3
      %v1240 = vor.u32 %v1236, %v1239
      %v1241 = vsel %vm1157, %v1204, %v1240
      %v1314 = vunpack.c.l.b16 %v1073
      %v1315 = vunpack.c.l.b16 %v1074
      %v1316 = vunpack.c.l.b16 %v1075
      %v1317 = vunpack.c.l.b16 %v1076
      %v1318 = vunpack.c.l.b16 %v1077
      %v1319 = vunpack.c.l.b16 %v1078
      %v1320 = vunpack.c.l.b16 %v1079
      %v1321 = vunpack.c.l.b16 %v1080
      %v1322 = vunpack.c.l.b16 %v1081
      %v1323 = vunpack.c.l.b16 %v1082
      %v1324 = vunpack.c.l.b16 %v1083
      %v1325 = vunpack.c.l.b16 %v1084
      %v1326 = vunpack.c.l.b16 %v1085
      %v1327 = vunpack.c.l.b16 %v1086
      %v1328 = vunpack.c.l.b16 %v1087
      %v1329 = vunpack.c.l.b16 %v1088
      %v1330 = vunpack.c.l.b16 %v1089
      %v1331 = vunpack.c.l.b16 %v1090
      %v1332 = vunpack.c.l.b16 %v1091
      %v1333 = vunpack.c.l.b16 %v1092
      %v1334 = vunpack.c.l.b16 %v1093
      %v1335 = vunpack.c.l.b16 %v1094
      %v1336 = vunpack.c.l.b16 %v1095
      %v1337 = vunpack.c.l.b16 %v1096
      %v1338 = vunpack.c.l.b16 %v1097
      %v1339 = vunpack.c.l.b16 %v1098
      %v1340 = vunpack.c.l.b16 %v1099
      %v1341 = vunpack.c.l.b16 %v1100
      %v1342 = vunpack.c.l.b16 %v1101
      %v1343 = vunpack.c.l.b16 %v1102
      %v1344 = vunpack.c.l.b16 %v1103
      %v1345 = vunpack.c.l.b16 %v1104
      %v1346 = vunpack.c.l.b16 %v1105
      %v1347 = vunpack.c.l.b16 %v1106
      %v1348 = vunpack.c.l.b16 %v1107
      %v1349 = vunpack.c.l.b16 %v1108
      %v1350 = vunpack.c.l.b16 %v1109
      %v1351 = vunpack.c.l.b16 %v1110
      %v1352 = vunpack.c.l.b16 %v1111
      %v1353 = vunpack.c.l.b16 %v1112
      %v1354 = vunpack.c.l.b16 %v1113
      %v1355 = vunpack.c.l.b16 %v1114
      %v1356 = vunpack.c.l.b16 %v1115
      %v1357 = vunpack.c.l.b16 %v1116
      %v1358 = vunpack.c.l.b16 %v1117
      %v1359 = vunpack.c.l.b16 %v1118
      %v1360 = vunpack.c.l.b16 %v1119
      %v1361 = vunpack.c.l.b16 %v1120
      %v1362 = vunpack.c.l.b16 %v1121
      %v1363 = vunpack.c.l.b16 %v1122
      %v1364 = vunpack.c.l.b16 %v1123
      %v1365 = vunpack.c.l.b16 %v1124
      %v1366 = vunpack.c.l.b16 %v1125
      %v1367 = vunpack.c.l.b16 %v1126
      %v1368 = vunpack.c.l.b16 %v1127
      %v1369 = vunpack.c.l.b16 %v1128
      %v1370 = vunpack.c.l.b16 %v1129
      %v1371 = vunpack.c.l.b16 %v1130
      %v1372 = vunpack.c.l.b16 %v1131
      %v1373 = vunpack.c.l.b16 %v1132
      %v1374 = vunpack.c.l.b16 %v1133
      %v1375 = vunpack.c.l.b16 %v1134
      %v1376 = vunpack.c.l.b16 %v1135
      %v1377 = vunpack.c.l.b16 %v1136
      %v1378 = vpack.c.b16 %v1315, %v1314
      %v1379 = vpack.c.b16 %v1317, %v1316
      %v1380 = vpack.c.b16 %v1319, %v1318
      %v1381 = vpack.c.b16 %v1321, %v1320
      %v1382 = vpack.c.b16 %v1323, %v1322
      %v1383 = vpack.c.b16 %v1325, %v1324
      %v1384 = vpack.c.b16 %v1327, %v1326
      %v1385 = vpack.c.b16 %v1329, %v1328
      %v1386 = vpack.c.b16 %v1331, %v1330
      %v1387 = vpack.c.b16 %v1333, %v1332
      %v1388 = vpack.c.b16 %v1335, %v1334
      %v1389 = vpack.c.b16 %v1337, %v1336
      %v1390 = vpack.c.b16 %v1339, %v1338
      %v1391 = vpack.c.b16 %v1341, %v1340
      %v1392 = vpack.c.b16 %v1343, %v1342
      %v1393 = vpack.c.b16 %v1345, %v1344
      %v1394 = vpack.c.b16 %v1347, %v1346
      %v1395 = vpack.c.b16 %v1349, %v1348
      %v1396 = vpack.c.b16 %v1351, %v1350
      %v1397 = vpack.c.b16 %v1353, %v1352
      %v1398 = vpack.c.b16 %v1355, %v1354
      %v1399 = vpack.c.b16 %v1357, %v1356
      %v1400 = vpack.c.b16 %v1359, %v1358
      %v1401 = vpack.c.b16 %v1361, %v1360
      %v1402 = vpack.c.b16 %v1363, %v1362
      %v1403 = vpack.c.b16 %v1365, %v1364
      %v1404 = vpack.c.b16 %v1367, %v1366
      %v1405 = vpack.c.b16 %v1369, %v1368
      %v1406 = vpack.c.b16 %v1371, %v1370
      %v1407 = vpack.c.b16 %v1373, %v1372
      %v1408 = vpack.c.b16 %v1375, %v1374
      %v1409 = vpack.c.b16 %v1377, %v1376
      %1442 = vmatprep.subr.bf16.mxu0 0
      %1443 = vmatpush1.bf16.msra.mxu0 %v1378
      %1444 = vmatprep.subr.bf16.mxu0 0
      %1445 = vmatpush1.bf16.msra.mxu0 %v1379
      %1446 = vmatprep.subr.bf16.mxu0 0
      %1447 = vmatpush1.bf16.msra.mxu0 %v1380
      %1448 = vmatprep.subr.bf16.mxu0 0
      %1449 = vmatpush1.bf16.msra.mxu0 %v1381
      %1450 = vmatprep.subr.bf16.mxu0 0
      %1451 = vmatpush1.bf16.msra.mxu0 %v1382
      %1452 = vmatprep.subr.bf16.mxu0 0
      %1453 = vmatpush1.bf16.msra.mxu0 %v1383
      %1454 = vmatprep.subr.bf16.mxu0 0
      %1455 = vmatpush1.bf16.msra.mxu0 %v1384
      %1456 = vmatprep.subr.bf16.mxu0 0
      %1457 = vmatpush1.bf16.msra.mxu0 %v1385
      %1458 = vmatprep.subr.bf16.mxu0 0
      %1459 = vmatpush1.bf16.msra.mxu0 %v1386
      %1460 = vmatprep.subr.bf16.mxu0 0
      %1461 = vmatpush1.bf16.msra.mxu0 %v1387
      %1462 = vmatprep.subr.bf16.mxu0 0
      %1463 = vmatpush1.bf16.msra.mxu0 %v1388
      %1464 = vmatprep.subr.bf16.mxu0 0
      %1465 = vmatpush1.bf16.msra.mxu0 %v1389
      %1466 = vmatprep.subr.bf16.mxu0 0
      %1467 = vmatpush1.bf16.msra.mxu0 %v1390
      %1468 = vmatprep.subr.bf16.mxu0 0
      %1469 = vmatpush1.bf16.msra.mxu0 %v1391
      %1470 = vmatprep.subr.bf16.mxu0 0
      %1471 = vmatpush1.bf16.msra.mxu0 %v1392
      %1472 = vmatprep.subr.bf16.mxu0 0
      %1473 = vmatpush1.bf16.msra.mxu0 %v1393
      %1474 = vmatprep.mubr.bf16.mxu0 %v1181
      %1475 = vmatmul.mubr.bf16.gmra.mrb[0].mxu0 %v1169
      %v1476 = vpop.f32.mrb[0].mxu0
      %v1477 = vadd.f32 0.0, %v1476
      %v1478 = vpop.f32.mrb[0].mxu0
      %v1479 = vpop.f32.mrb[0].mxu0
      %v1480 = vadd.f32 0.0, %v1479
      %v1481 = vpop.f32.mrb[0].mxu0
      %1482 = vmatprep.mubr.bf16.mxu0 %v1223
      %1483 = vmatmul.mubr.bf16.gmra.mrb[0].mxu0 %v1214
      %v1484 = vpop.f32.mrb[0].mxu0
      %v1485 = vadd.f32 0.0, %v1484
      %v1486 = vpop.f32.mrb[0].mxu0
      %v1487 = vpop.f32.mrb[0].mxu0
      %v1488 = vadd.f32 0.0, %v1487
      %v1489 = vpop.f32.mrb[0].mxu0
      %1490 = vdwg.mxu0
      %1491 = vmatprep.subr.bf16.mxu0 0
      %1492 = vmatpush1.bf16.msra.mxu0 %v1394
      %1493 = vmatprep.subr.bf16.mxu0 0
      %1494 = vmatpush1.bf16.msra.mxu0 %v1395
      %1495 = vmatprep.subr.bf16.mxu0 0
      %1496 = vmatpush1.bf16.msra.mxu0 %v1396
      %1497 = vmatprep.subr.bf16.mxu0 0
      %1498 = vmatpush1.bf16.msra.mxu0 %v1397
      %1499 = vmatprep.subr.bf16.mxu0 0
      %1500 = vmatpush1.bf16.msra.mxu0 %v1398
      %1501 = vmatprep.subr.bf16.mxu0 0
      %1502 = vmatpush1.bf16.msra.mxu0 %v1399
      %1503 = vmatprep.subr.bf16.mxu0 0
      %1504 = vmatpush1.bf16.msra.mxu0 %v1400
      %1505 = vmatprep.subr.bf16.mxu0 0
      %1506 = vmatpush1.bf16.msra.mxu0 %v1401
      %1507 = vmatprep.subr.bf16.mxu0 0
      %1508 = vmatpush1.bf16.msra.mxu0 %v1402
      %1509 = vmatprep.subr.bf16.mxu0 0
      %1510 = vmatpush1.bf16.msra.mxu0 %v1403
      %1511 = vmatprep.subr.bf16.mxu0 0
      %1512 = vmatpush1.bf16.msra.mxu0 %v1404
      %1513 = vmatprep.subr.bf16.mxu0 0
      %1514 = vmatpush1.bf16.msra.mxu0 %v1405
      %1515 = vmatprep.subr.bf16.mxu0 0
      %1516 = vmatpush1.bf16.msra.mxu0 %v1406
      %1517 = vmatprep.subr.bf16.mxu0 0
      %1518 = vmatpush1.bf16.msra.mxu0 %v1407
      %1519 = vmatprep.subr.bf16.mxu0 0
      %1520 = vmatpush1.bf16.msra.mxu0 %v1408
      %1521 = vmatprep.subr.bf16.mxu0 0
      %1522 = vmatpush1.bf16.msra.mxu0 %v1409
      %1523 = vmatprep.mubr.bf16.mxu0 %v1205
      %1524 = vmatmul.mubr.bf16.gmra.mrb[0].mxu0 %v1193
      %v1525 = vpop.f32.mrb[0].mxu0
      %v1526 = vadd.f32 %v1477, %v1525
      %v1527 = vpop.f32.mrb[0].mxu0
      %v1528 = vpop.f32.mrb[0].mxu0
      %v1529 = vadd.f32 %v1480, %v1528
      %v1530 = vpop.f32.mrb[0].mxu0
      %1531 = vmatprep.mubr.bf16.mxu0 %v1241
      %1532 = vmatmul.mubr.bf16.gmra.mrb[0].mxu0 %v1232
      %v1533 = vpop.f32.mrb[0].mxu0
      %v1534 = vadd.f32 %v1485, %v1533
      %v1535 = vpop.f32.mrb[0].mxu0
      %v1536 = vpop.f32.mrb[0].mxu0
      %v1537 = vadd.f32 %v1488, %v1536
      %v1538 = vpop.f32.mrb[0].mxu0
      %1539 = vdwg.mxu0
      %v1540 = vadd.f32 %v1054, %v1526
      %v1541 = vadd.f32 %v1057, %v1529
      %v1542 = vadd.f32 %v1062, %v1534
      %v1543 = vadd.f32 %v1065, %v1537
      %v1544 = vld [vmem:[%s199] sm:$0x88]
      %v1545 = vld [vmem:[%s199 + $0x8] sm:$0x88]
      %s1546 = scalar_lea.vmem %s1, 768
      %v1547 = vld [vmem:[%s1546] sm:$0xf]
      %v1548 = vld [vmem:[%s1546 + $0x4] sm:$0xf]
      %v1549 = vld [vmem:[%s1546 + $0x8] sm:$0xf]
      %v1550 = vld [vmem:[%s1546 + $0xc] sm:$0xf]
      %v1551 = vld [vmem:[%s1546 + $0x10] sm:$0xf]
      %v1552 = vld [vmem:[%s1546 + $0x14] sm:$0xf]
      %v1553 = vld [vmem:[%s1546 + $0x18] sm:$0xf]
      %v1554 = vld [vmem:[%s1546 + $0x1c] sm:$0xf]
      %v1555 = vld [vmem:[%s1546 + $0x20] sm:$0xf]
      %v1556 = vld [vmem:[%s1546 + $0x24] sm:$0xf]
      %v1557 = vld [vmem:[%s1546 + $0x28] sm:$0xf]
      %v1558 = vld [vmem:[%s1546 + $0x2c] sm:$0xf]
      %v1559 = vld [vmem:[%s1546 + $0x30] sm:$0xf]
      %v1560 = vld [vmem:[%s1546 + $0x34] sm:$0xf]
      %v1561 = vld [vmem:[%s1546 + $0x38] sm:$0xf]
      %v1562 = vld [vmem:[%s1546 + $0x3c] sm:$0xf]
      %v1563 = vld [vmem:[%s1546 + $0x40] sm:$0xf]
      %v1564 = vld [vmem:[%s1546 + $0x44] sm:$0xf]
      %v1565 = vld [vmem:[%s1546 + $0x48] sm:$0xf]
      %v1566 = vld [vmem:[%s1546 + $0x4c] sm:$0xf]
      %v1567 = vld [vmem:[%s1546 + $0x50] sm:$0xf]
      %v1568 = vld [vmem:[%s1546 + $0x54] sm:$0xf]
      %v1569 = vld [vmem:[%s1546 + $0x58] sm:$0xf]
      %v1570 = vld [vmem:[%s1546 + $0x5c] sm:$0xf]
      %v1571 = vld [vmem:[%s1546 + $0x60] sm:$0xf]
      %v1572 = vld [vmem:[%s1546 + $0x64] sm:$0xf]
      %v1573 = vld [vmem:[%s1546 + $0x68] sm:$0xf]
      %v1574 = vld [vmem:[%s1546 + $0x6c] sm:$0xf]
      %v1575 = vld [vmem:[%s1546 + $0x70] sm:$0xf]
      %v1576 = vld [vmem:[%s1546 + $0x74] sm:$0xf]
      %v1577 = vld [vmem:[%s1546 + $0x78] sm:$0xf]
      %v1578 = vld [vmem:[%s1546 + $0x7c] sm:$0xf]
      %v1579 = vld [vmem:[%s1546 + $0x80] sm:$0xf]
      %v1580 = vld [vmem:[%s1546 + $0x84] sm:$0xf]
      %v1581 = vld [vmem:[%s1546 + $0x88] sm:$0xf]
      %v1582 = vld [vmem:[%s1546 + $0x8c] sm:$0xf]
      %v1583 = vld [vmem:[%s1546 + $0x90] sm:$0xf]
      %v1584 = vld [vmem:[%s1546 + $0x94] sm:$0xf]
      %v1585 = vld [vmem:[%s1546 + $0x98] sm:$0xf]
      %v1586 = vld [vmem:[%s1546 + $0x9c] sm:$0xf]
      %v1587 = vld [vmem:[%s1546 + $0xa0] sm:$0xf]
      %v1588 = vld [vmem:[%s1546 + $0xa4] sm:$0xf]
      %v1589 = vld [vmem:[%s1546 + $0xa8] sm:$0xf]
      %v1590 = vld [vmem:[%s1546 + $0xac] sm:$0xf]
      %v1591 = vld [vmem:[%s1546 + $0xb0] sm:$0xf]
      %v1592 = vld [vmem:[%s1546 + $0xb4] sm:$0xf]
      %v1593 = vld [vmem:[%s1546 + $0xb8] sm:$0xf]
      %v1594 = vld [vmem:[%s1546 + $0xbc] sm:$0xf]
      %v1595 = vld [vmem:[%s1546 + $0xc0] sm:$0xf]
      %v1596 = vld [vmem:[%s1546 + $0xc4] sm:$0xf]
      %v1597 = vld [vmem:[%s1546 + $0xc8] sm:$0xf]
      %v1598 = vld [vmem:[%s1546 + $0xcc] sm:$0xf]
      %v1599 = vld [vmem:[%s1546 + $0xd0] sm:$0xf]
      %v1600 = vld [vmem:[%s1546 + $0xd4] sm:$0xf]
      %v1601 = vld [vmem:[%s1546 + $0xd8] sm:$0xf]
      %v1602 = vld [vmem:[%s1546 + $0xdc] sm:$0xf]
      %v1603 = vld [vmem:[%s1546 + $0xe0] sm:$0xf]
      %v1604 = vld [vmem:[%s1546 + $0xe4] sm:$0xf]
      %v1605 = vld [vmem:[%s1546 + $0xe8] sm:$0xf]
      %v1606 = vld [vmem:[%s1546 + $0xec] sm:$0xf]
      %v1607 = vld [vmem:[%s1546 + $0xf0] sm:$0xf]
      %v1608 = vld [vmem:[%s1546 + $0xf4] sm:$0xf]
      %v1609 = vld [vmem:[%s1546 + $0xf8] sm:$0xf]
      %v1610 = vld [vmem:[%s1546 + $0xfc] sm:$0xf]
      %v1613 = vunpack.c.l.b16 %v1544
      %v1614 = vunpack.c.h.b16 %v1544
      %v1615 = vunpack.c.l.b16 %v1545
      %v1616 = vunpack.c.h.b16 %v1545
      %v1617 = vpack.c.b16 %v363, %v1613
      %v1618 = vpack.c.b16 %v364, %v1614
      %v1619 = vpack.c.b16 %v365, %v1615
      %v1620 = vpack.c.b16 %v366, %v1616
      %vm1621 = vcmask 1044480
      %v1622 = vrot.slane %v1617, 3
      %v1623 = vrot.slane %v383, 3
      %v1624 = vsel %vm1621, %v1622, %v1623
      %v1625 = vrot.slane %v1618, 3
      %v1626 = vrot.slane %v384, 3
      %v1627 = vsel %vm1621, %v1625, %v1626
      %v1628 = vrot.slane %v1619, 3
      %v1629 = vrot.slane %v385, 3
      %v1630 = vsel %vm1621, %v1628, %v1629
      %v1631 = vrot.slane %v1620, 3
      %v1632 = vrot.slane %v386, 3
      %v1633 = vsel %vm1621, %v1631, %v1632
      %v1634 = vrot.slane %v1153, 3
      %v1635 = vsel %vm1621, %v1623, %v1634
      %v1636 = vrot.slane %v1154, 3
      %v1637 = vsel %vm1621, %v1626, %v1636
      %v1638 = vrot.slane %v1155, 3
      %v1639 = vsel %vm1621, %v1629, %v1638
      %v1640 = vrot.slane %v1156, 3
      %v1641 = vsel %vm1621, %v1632, %v1640
      %v1714 = vunpack.c.l.b16 %v1547
      %v1715 = vunpack.c.l.b16 %v1548
      %v1716 = vunpack.c.l.b16 %v1549
      %v1717 = vunpack.c.l.b16 %v1550
      %v1718 = vunpack.c.l.b16 %v1551
      %v1719 = vunpack.c.l.b16 %v1552
      %v1720 = vunpack.c.l.b16 %v1553
      %v1721 = vunpack.c.l.b16 %v1554
      %v1722 = vunpack.c.l.b16 %v1555
      %v1723 = vunpack.c.l.b16 %v1556
      %v1724 = vunpack.c.l.b16 %v1557
      %v1725 = vunpack.c.l.b16 %v1558
      %v1726 = vunpack.c.l.b16 %v1559
      %v1727 = vunpack.c.l.b16 %v1560
      %v1728 = vunpack.c.l.b16 %v1561
      %v1729 = vunpack.c.l.b16 %v1562
      %v1730 = vunpack.c.l.b16 %v1563
      %v1731 = vunpack.c.l.b16 %v1564
      %v1732 = vunpack.c.l.b16 %v1565
      %v1733 = vunpack.c.l.b16 %v1566
      %v1734 = vunpack.c.l.b16 %v1567
      %v1735 = vunpack.c.l.b16 %v1568
      %v1736 = vunpack.c.l.b16 %v1569
      %v1737 = vunpack.c.l.b16 %v1570
      %v1738 = vunpack.c.l.b16 %v1571
      %v1739 = vunpack.c.l.b16 %v1572
      %v1740 = vunpack.c.l.b16 %v1573
      %v1741 = vunpack.c.l.b16 %v1574
      %v1742 = vunpack.c.l.b16 %v1575
      %v1743 = vunpack.c.l.b16 %v1576
      %v1744 = vunpack.c.l.b16 %v1577
      %v1745 = vunpack.c.l.b16 %v1578
      %v1746 = vunpack.c.l.b16 %v1579
      %v1747 = vunpack.c.l.b16 %v1580
      %v1748 = vunpack.c.l.b16 %v1581
      %v1749 = vunpack.c.l.b16 %v1582
      %v1750 = vunpack.c.l.b16 %v1583
      %v1751 = vunpack.c.l.b16 %v1584
      %v1752 = vunpack.c.l.b16 %v1585
      %v1753 = vunpack.c.l.b16 %v1586
      %v1754 = vunpack.c.l.b16 %v1587
      %v1755 = vunpack.c.l.b16 %v1588
      %v1756 = vunpack.c.l.b16 %v1589
      %v1757 = vunpack.c.l.b16 %v1590
      %v1758 = vunpack.c.l.b16 %v1591
      %v1759 = vunpack.c.l.b16 %v1592
      %v1760 = vunpack.c.l.b16 %v1593
      %v1761 = vunpack.c.l.b16 %v1594
      %v1762 = vunpack.c.l.b16 %v1595
      %v1763 = vunpack.c.l.b16 %v1596
      %v1764 = vunpack.c.l.b16 %v1597
      %v1765 = vunpack.c.l.b16 %v1598
      %v1766 = vunpack.c.l.b16 %v1599
      %v1767 = vunpack.c.l.b16 %v1600
      %v1768 = vunpack.c.l.b16 %v1601
      %v1769 = vunpack.c.l.b16 %v1602
      %v1770 = vunpack.c.l.b16 %v1603
      %v1771 = vunpack.c.l.b16 %v1604
      %v1772 = vunpack.c.l.b16 %v1605
      %v1773 = vunpack.c.l.b16 %v1606
      %v1774 = vunpack.c.l.b16 %v1607
      %v1775 = vunpack.c.l.b16 %v1608
      %v1776 = vunpack.c.l.b16 %v1609
      %v1777 = vunpack.c.l.b16 %v1610
      %v1778 = vpack.c.b16 %v1715, %v1714
      %v1779 = vpack.c.b16 %v1717, %v1716
      %v1780 = vpack.c.b16 %v1719, %v1718
      %v1781 = vpack.c.b16 %v1721, %v1720
      %v1782 = vpack.c.b16 %v1723, %v1722
      %v1783 = vpack.c.b16 %v1725, %v1724
      %v1784 = vpack.c.b16 %v1727, %v1726
      %v1785 = vpack.c.b16 %v1729, %v1728
      %v1786 = vpack.c.b16 %v1731, %v1730
      %v1787 = vpack.c.b16 %v1733, %v1732
      %v1788 = vpack.c.b16 %v1735, %v1734
      %v1789 = vpack.c.b16 %v1737, %v1736
      %v1790 = vpack.c.b16 %v1739, %v1738
      %v1791 = vpack.c.b16 %v1741, %v1740
      %v1792 = vpack.c.b16 %v1743, %v1742
      %v1793 = vpack.c.b16 %v1745, %v1744
      %v1794 = vpack.c.b16 %v1747, %v1746
      %v1795 = vpack.c.b16 %v1749, %v1748
      %v1796 = vpack.c.b16 %v1751, %v1750
      %v1797 = vpack.c.b16 %v1753, %v1752
      %v1798 = vpack.c.b16 %v1755, %v1754
      %v1799 = vpack.c.b16 %v1757, %v1756
      %v1800 = vpack.c.b16 %v1759, %v1758
      %v1801 = vpack.c.b16 %v1761, %v1760
      %v1802 = vpack.c.b16 %v1763, %v1762
      %v1803 = vpack.c.b16 %v1765, %v1764
      %v1804 = vpack.c.b16 %v1767, %v1766
      %v1805 = vpack.c.b16 %v1769, %v1768
      %v1806 = vpack.c.b16 %v1771, %v1770
      %v1807 = vpack.c.b16 %v1773, %v1772
      %v1808 = vpack.c.b16 %v1775, %v1774
      %v1809 = vpack.c.b16 %v1777, %v1776
      %1842 = vmatprep.subr.bf16.mxu0 0
      %1843 = vmatpush1.bf16.msra.mxu0 %v1778
      %1844 = vmatprep.subr.bf16.mxu0 0
      %1845 = vmatpush1.bf16.msra.mxu0 %v1779
      %1846 = vmatprep.subr.bf16.mxu0 0
      %1847 = vmatpush1.bf16.msra.mxu0 %v1780
      %1848 = vmatprep.subr.bf16.mxu0 0
      %1849 = vmatpush1.bf16.msra.mxu0 %v1781
      %1850 = vmatprep.subr.bf16.mxu0 0
      %1851 = vmatpush1.bf16.msra.mxu0 %v1782
      %1852 = vmatprep.subr.bf16.mxu0 0
      %1853 = vmatpush1.bf16.msra.mxu0 %v1783
      %1854 = vmatprep.subr.bf16.mxu0 0
      %1855 = vmatpush1.bf16.msra.mxu0 %v1784
      %1856 = vmatprep.subr.bf16.mxu0 0
      %1857 = vmatpush1.bf16.msra.mxu0 %v1785
      %1858 = vmatprep.subr.bf16.mxu0 0
      %1859 = vmatpush1.bf16.msra.mxu0 %v1786
      %1860 = vmatprep.subr.bf16.mxu0 0
      %1861 = vmatpush1.bf16.msra.mxu0 %v1787
      %1862 = vmatprep.subr.bf16.mxu0 0
      %1863 = vmatpush1.bf16.msra.mxu0 %v1788
      %1864 = vmatprep.subr.bf16.mxu0 0
      %1865 = vmatpush1.bf16.msra.mxu0 %v1789
      %1866 = vmatprep.subr.bf16.mxu0 0
      %1867 = vmatpush1.bf16.msra.mxu0 %v1790
      %1868 = vmatprep.subr.bf16.mxu0 0
      %1869 = vmatpush1.bf16.msra.mxu0 %v1791
      %1870 = vmatprep.subr.bf16.mxu0 0
      %1871 = vmatpush1.bf16.msra.mxu0 %v1792
      %1872 = vmatprep.subr.bf16.mxu0 0
      %1873 = vmatpush1.bf16.msra.mxu0 %v1793
      %1874 = vmatprep.mubr.bf16.mxu0 %v1627
      %1875 = vmatmul.mubr.bf16.gmra.mrb[0].mxu0 %v1624
      %v1876 = vpop.f32.mrb[0].mxu0
      %v1877 = vadd.f32 0.0, %v1876
      %v1878 = vpop.f32.mrb[0].mxu0
      %v1879 = vpop.f32.mrb[0].mxu0
      %v1880 = vadd.f32 0.0, %v1879
      %v1881 = vpop.f32.mrb[0].mxu0
      %1882 = vmatprep.mubr.bf16.mxu0 %v1637
      %1883 = vmatmul.mubr.bf16.gmra.mrb[0].mxu0 %v1635
      %v1884 = vpop.f32.mrb[0].mxu0
      %v1885 = vadd.f32 0.0, %v1884
      %v1886 = vpop.f32.mrb[0].mxu0
      %v1887 = vpop.f32.mrb[0].mxu0
      %v1888 = vadd.f32 0.0, %v1887
      %v1889 = vpop.f32.mrb[0].mxu0
      %1890 = vdwg.mxu0
      %1891 = vmatprep.subr.bf16.mxu0 0
      %1892 = vmatpush1.bf16.msra.mxu0 %v1794
      %1893 = vmatprep.subr.bf16.mxu0 0
      %1894 = vmatpush1.bf16.msra.mxu0 %v1795
      %1895 = vmatprep.subr.bf16.mxu0 0
      %1896 = vmatpush1.bf16.msra.mxu0 %v1796
      %1897 = vmatprep.subr.bf16.mxu0 0
      %1898 = vmatpush1.bf16.msra.mxu0 %v1797
      %1899 = vmatprep.subr.bf16.mxu0 0
      %1900 = vmatpush1.bf16.msra.mxu0 %v1798
      %1901 = vmatprep.subr.bf16.mxu0 0
      %1902 = vmatpush1.bf16.msra.mxu0 %v1799
      %1903 = vmatprep.subr.bf16.mxu0 0
      %1904 = vmatpush1.bf16.msra.mxu0 %v1800
      %1905 = vmatprep.subr.bf16.mxu0 0
      %1906 = vmatpush1.bf16.msra.mxu0 %v1801
      %1907 = vmatprep.subr.bf16.mxu0 0
      %1908 = vmatpush1.bf16.msra.mxu0 %v1802
      %1909 = vmatprep.subr.bf16.mxu0 0
      %1910 = vmatpush1.bf16.msra.mxu0 %v1803
      %1911 = vmatprep.subr.bf16.mxu0 0
      %1912 = vmatpush1.bf16.msra.mxu0 %v1804
      %1913 = vmatprep.subr.bf16.mxu0 0
      %1914 = vmatpush1.bf16.msra.mxu0 %v1805
      %1915 = vmatprep.subr.bf16.mxu0 0
      %1916 = vmatpush1.bf16.msra.mxu0 %v1806
      %1917 = vmatprep.subr.bf16.mxu0 0
      %1918 = vmatpush1.bf16.msra.mxu0 %v1807
      %1919 = vmatprep.subr.bf16.mxu0 0
      %1920 = vmatpush1.bf16.msra.mxu0 %v1808
      %1921 = vmatprep.subr.bf16.mxu0 0
      %1922 = vmatpush1.bf16.msra.mxu0 %v1809
      %1923 = vmatprep.mubr.bf16.mxu0 %v1633
      %1924 = vmatmul.mubr.bf16.gmra.mrb[0].mxu0 %v1630
      %v1925 = vpop.f32.mrb[0].mxu0
      %v1926 = vadd.f32 %v1877, %v1925
      %v1927 = vpop.f32.mrb[0].mxu0
      %v1928 = vpop.f32.mrb[0].mxu0
      %v1929 = vadd.f32 %v1880, %v1928
      %v1930 = vpop.f32.mrb[0].mxu0
      %1931 = vmatprep.mubr.bf16.mxu0 %v1641
      %1932 = vmatmul.mubr.bf16.gmra.mrb[0].mxu0 %v1639
      %v1933 = vpop.f32.mrb[0].mxu0
      %v1934 = vadd.f32 %v1885, %v1933
      %v1935 = vpop.f32.mrb[0].mxu0
      %v1936 = vpop.f32.mrb[0].mxu0
      %v1937 = vadd.f32 %v1888, %v1936
      %v1938 = vpop.f32.mrb[0].mxu0
      %1939 = vdwg.mxu0
      %v1940 = vadd.f32 %v1540, %v1926
      %v1941 = vadd.f32 %v1541, %v1929
      %v1942 = vadd.f32 %v1542, %v1934
      %v1943 = vadd.f32 %v1543, %v1937
      %v1944 = vpack.c.bf16 %v1941, %v1940
      %v1945 = vpack.c.bf16 %v1943, %v1942
      %v1948 = vunpack.c.l.b16 %v1944
      %v1949 = vunpack.c.h.b16 %v1944
      %v1950 = vunpack.c.l.b16 %v1945
      %v1951 = vunpack.c.h.b16 %v1945
      %v1952 = vpack.c.b16 %v1948, %v1948
      %v1953 = vpack.c.b16 %v1949, %v1949
      %v1954 = vpack.c.b16 %v1950, %v1950
      %v1955 = vpack.c.b16 %v1951, %v1951
      %1960 = vst [vmem:[%s204] sm:$0xf] %v1952
      %1961 = vst [vmem:[%s204 + $0x4] sm:$0xf] %v1953
      %1962 = vst [vmem:[%s204 + $0x8] sm:$0xf] %v1954
      %1963 = vst [vmem:[%s204 + $0xc] sm:$0xf] %v1955
      %v1964 = vld [vmem:[%s2] sm:$0xff]
      %v1965 = vld [vmem:[%s2 + $0x8] sm:$0xff]
      %v1966 = vld [vmem:[%s2 + $0x10] sm:$0xff]
      %v1967 = vld [vmem:[%s2 + $0x18] sm:$0xff]
      %1969 = vset.pattern.permute.xlu0 0
      %1970 = vperm.xlu0 %1969, %v1964
      %v1971 = vpop.permute.xlu0 %1970
      %1974 = vset.pattern.permute.xlu0 0
      %1975 = vperm.xlu0 %1974, %v1965
      %v1976 = vpop.permute.xlu0 %1975
      %1979 = vset.pattern.permute.xlu0 0
      %1980 = vperm.xlu0 %1979, %v1966
      %v1981 = vpop.permute.xlu0 %1980
      %1984 = vset.pattern.permute.xlu0 0
      %1985 = vperm.xlu0 %1984, %v1967
      %v1986 = vpop.permute.xlu0 %1985
      %v1988 = vmul.f32 %v1940, %v1971
      %v1989 = vmul.f32 %v1941, %v1976
      %v1990 = vmul.f32 %v1942, %v1981
      %v1991 = vmul.f32 %v1943, %v1986
      %v1992 = vadd.f32 %v1988, %v1989
      %v1993 = vadd.f32 %v1992, %v1990
      %v1994 = vadd.f32 %v1993, %v1991
      %v1995 = vrot.slane %v1994, 4
      %v1996 = vadd.f32 %v1994, %v1995
      %v1997 = vrot.slane %v1996, 2
      %v1998 = vadd.f32 %v1996, %v1997
      %v1999 = vrot.slane %v1998, 1
      %v2000 = vadd.f32 %v1998, %v1999
      %2001 = vst [vmem:[%s208] sm:$0x1] %v2000
      %v2002 = vmul.f32 %v1988, %v1940
      %v2003 = vmul.f32 %v1989, %v1941
      %v2004 = vmul.f32 %v1990, %v1942
      %v2005 = vmul.f32 %v1991, %v1943
      %v2006 = vadd.f32 %v2002, %v2003
      %v2007 = vadd.f32 %v2006, %v2004
      %v2008 = vadd.f32 %v2007, %v2005
      %v2009 = vrot.slane %v2008, 4
      %v2010 = vadd.f32 %v2008, %v2009
      %v2011 = vrot.slane %v2010, 2
      %v2012 = vadd.f32 %v2010, %v2011
      %v2013 = vrot.slane %v2012, 1
      %v2014 = vadd.f32 %v2012, %v2013
      %2015 = vst [vmem:[%s208 + $0x1] sm:$0x1] %v2014
      %p2016 = scmp.lt.s32.totalorder %s16, 1
      %s2017 = scalar_select %p2016, %s16, 1
      %s2018 = smul.addr %s2017, 4
      %s2019 = smul.addr %s2018, 4
      %s2020 = scalar_lea.vmem %s3, %s2019
      %p2021 = scmp.lt.s32.totalorder %s16, 1
      %s2022 = scalar_select %p2021, %s16, 1
      %s2023 = smul.addr %s2022, 8
      %s2024 = scalar_lea.vmem %s4, %s2023
      // Predicated region
      $region33: #{a_call__.5} parent=31 // pred_check
        %p2025 = pneg %p102
      $region34: #{a_call__.5} parent=31 // pred_check_branch
        %2027 = sbr.rel (%p2025) target = $region36
      $region35: #{a_call__.5} parent=31 // pred_region
        _
      $region36: #{a_call__.5} parent=31 // pred_fallthru
        _
      // Predicated region
      $region37: #{a_call__.5} parent=31 // pred_check
        %p2028 = pneg %p128
      $region38: #{a_call__.5} parent=31 // pred_check_branch
        %2030 = sbr.rel (%p2028) target = $region40
      $region39: #{a_call__.5} parent=31 // pred_region
        _
      $region40: #{a_call__.5} parent=31 // pred_fallthru
        _
    $region32: #{a_call__.5} parent=5 // pred_fallthru
      _
    %p2031 = scmp.le.s32.totalorder 2, %s11
    // Predicated region
    $region41: #{a_call__.5} parent=5 // pred_check
      %p2032 = pneg %p2031
    $region42: #{a_call__.5} parent=5 // pred_check_branch
      %2034 = sbr.rel (%p2032) target = $region44
    $region43: #{a_call__.5} parent=5 // pred_region
      %s2035 = ssub.s32 %s11, 2
      // Predicated region
      $region45: #{a_call__.5} parent=43 // pred_check
        %p2036 = pneg %p108
      $region46: #{a_call__.5} parent=43 // pred_check_branch
        %2038 = sbr.rel (%p2036) target = $region48
      $region47: #{a_call__.5} parent=43 // pred_region
        %p2039 = scmp.lt.s32.totalorder %s17, 1
        %s2040 = scalar_select %p2039, %s17, 1
        %s2041 = smul.addr %s2040, 4
        %s2042 = smul.addr %s2041, 4
        %s2043 = scalar_lea.vmem %s3, %s2042
      $region48: #{a_call__.5} parent=43 // pred_fallthru
        _
      // Predicated region
      $region49: #{a_call__.5} parent=43 // pred_check
        %p2044 = pneg %p134
      $region50: #{a_call__.5} parent=43 // pred_check_branch
        %2046 = sbr.rel (%p2044) target = $region52
      $region51: #{a_call__.5} parent=43 // pred_region
        %p2047 = scmp.lt.s32.totalorder %s17, 1
        %s2048 = scalar_select %p2047, %s17, 1
        %s2049 = smul.addr %s2048, 8
        %s2050 = scalar_lea.vmem %s4, %s2049
      $region52: #{a_call__.5} parent=43 // pred_fallthru
        _
    $region44: #{a_call__.5} parent=5 // pred_fallthru
      _
  $region6: #{a_call__.5} parent=0 // loop_footer
    %s15 = sadd.s32 1, %s11
  $region7: #{a_call__.5} parent=0 // loop_footer_branch
    %10 = sbr.rel target = $region3
  $region8: #{a_call__.5} parent=0 // loop_exit
    _

// kernel: a_call__.7
$region0: #{a_call__.7}
  #allocation0 [shape = 'u32[]', space=smem, size = 0x4, offset = 0x4, fixed_abs, tag = 'smem constant byte address 0x4 - core index']
  #allocation1 [shape = 'u32[144,128]{1,0:T(1,128)}', space=vmem, size = 0x12000, scoped, tag = 'internal scratch']
  %s0 = inlined_call_operand.vmem [shape: bf16[2,32,128], index: 0, kind: input, shape index: {}]
  %s1 = inlined_call_operand.vmem [shape: bf16[16,128,128], index: 1, kind: input, shape index: {}]
  %s2 = inlined_call_operand.vmem [shape: f32[1,128], index: 2, kind: input, shape index: {}]
  %s3 = inlined_call_operand.vmem [shape: f32[2,16,128], index: 3, kind: output, shape index: {}]
  %s4 = sld [smem:[#allocation0]]
  $region45: #{a_call__.7} parent=0
    _
  %s6 = ssub.s32 1, %s4
  %s7 = scalar_select 0, %s6, %s4
  loop: start=0, step=1, limit=4
  $region2: #{a_call__.7} parent=0 // loop_pre_header
    _
  $region3: #{a_call__.7} parent=0 // loop_header
    %s9 = sphi 0, %s13
    %p10 = scmp.ge.s32.totalorder %s9, 4
    %s19 = sphi 0, %s21
    %s22 = sphi 0, %s19
    %s23 = sphi 0, %s22
    %s39 = sphi 0, %s23
    %s43 = sphi 0, %s43
    %s45 = sphi 0, %s43
    %s46 = sphi 0, %s45
    %s60 = sphi 0, %s46
    %s64 = sphi 0, %s64
    %s66 = sphi 0, %s64
    %s67 = sphi 0, %s66
    %s81 = sphi 0, %s67
    %s87 = sphi 0, %s89
    %s90 = sphi 0, %s87
    %s91 = sphi 0, %s90
    %s107 = sphi 0, %s91
  $region4: #{a_call__.7} parent=0 // loop_header_branch
    %12 = sbr.rel (%p10) target = $region8
  $region5: #{a_call__.7} parent=0 // loop_body
    %s14 = ssub.s32 %s9, 1
    %s15 = ssub.s32 %s9, 2
    %s16 = sadd.s32 %s9, 1
    %s17 = ssub.s32 %s9, %s16
    %p18 = scmp.eq.s32.totalorder %s17, 0
    %s20 = sadd.s32 %s19, 1
    %s21 = scalar_select %p18, %s19, %s20
    %p24 = pneg %p18
    %p25 = scmp.eq.s32.totalorder %s9, 1
    %p26 = por %p24, %p25
    %p27 = scmp.ne.s32.totalorder %s19, %s22
    %p28 = scmp.eq.s32.totalorder %s9, 0
    %p29 = por %p27, %p28
    %p30 = scmp.ne.s32.totalorder %s19, %s22
    %p31 = scmp.eq.s32.totalorder %s14, 1
    %p32 = por %p30, %p31
    %p33 = scmp.ne.s32.totalorder %s22, %s23
    %p34 = scmp.eq.s32.totalorder %s14, 0
    %p35 = por %p33, %p34
    %p36 = scmp.ne.s32.totalorder %s22, %s23
    %p37 = scmp.eq.s32.totalorder %s15, 1
    %p38 = por %p36, %p37
    %p40 = scmp.ne.s32.totalorder %s23, %s39
    %p41 = scmp.eq.s32.totalorder %s15, 0
    %p42 = por %p40, %p41
    %s44 = sadd.s32 %s43, 1
    %p47 = scmp.eq.s32.totalorder %s9, 1
    %p48 = scmp.ne.s32.totalorder %s43, %s45
    %p49 = scmp.eq.s32.totalorder %s9, 0
    %p50 = por %p48, %p49
    %p51 = scmp.ne.s32.totalorder %s43, %s45
    %p52 = scmp.eq.s32.totalorder %s14, 1
    %p53 = por %p51, %p52
    %p54 = scmp.ne.s32.totalorder %s45, %s46
    %p55 = scmp.eq.s32.totalorder %s14, 0
    %p56 = por %p54, %p55
    %p57 = scmp.ne.s32.totalorder %s45, %s46
    %p58 = scmp.eq.s32.totalorder %s15, 1
    %p59 = por %p57, %p58
    %p61 = scmp.ne.s32.totalorder %s46, %s60
    %p62 = scmp.eq.s32.totalorder %s15, 0
    %p63 = por %p61, %p62
    %s65 = sadd.s32 %s64, 1
    %p68 = scmp.eq.s32.totalorder %s9, 1
    %p69 = scmp.ne.s32.totalorder %s64, %s66
    %p70 = scmp.eq.s32.totalorder %s9, 0
    %p71 = por %p69, %p70
    %p72 = scmp.ne.s32.totalorder %s64, %s66
    %p73 = scmp.eq.s32.totalorder %s14, 1
    %p74 = por %p72, %p73
    %p75 = scmp.ne.s32.totalorder %s66, %s67
    %p76 = scmp.eq.s32.totalorder %s14, 0
    %p77 = por %p75, %p76
    %p78 = scmp.ne.s32.totalorder %s66, %s67
    %p79 = scmp.eq.s32.totalorder %s15, 1
    %p80 = por %p78, %p79
    %p82 = scmp.ne.s32.totalorder %s67, %s81
    %p83 = scmp.eq.s32.totalorder %s15, 0
    %p84 = por %p82, %p83
    %s85 = ssub.s32 %s9, %s16
    %p86 = scmp.eq.s32.totalorder %s85, 0
    %s88 = sadd.s32 %s87, 1
    %s89 = scalar_select %p86, %s87, %s88
    %p92 = pneg %p86
    %p93 = scmp.eq.s32.totalorder %s9, 1
    %p94 = por %p92, %p93
    %p95 = scmp.ne.s32.totalorder %s87, %s90
    %p96 = scmp.eq.s32.totalorder %s9, 0
    %p97 = por %p95, %p96
    %p98 = scmp.ne.s32.totalorder %s87, %s90
    %p99 = scmp.eq.s32.totalorder %s14, 1
    %p100 = por %p98, %p99
    %p101 = scmp.ne.s32.totalorder %s90, %s91
    %p102 = scmp.eq.s32.totalorder %s14, 0
    %p103 = por %p101, %p102
    %p104 = scmp.ne.s32.totalorder %s90, %s91
    %p105 = scmp.eq.s32.totalorder %s15, 1
    %p106 = por %p104, %p105
    %p108 = scmp.ne.s32.totalorder %s91, %s107
    %p109 = scmp.eq.s32.totalorder %s15, 0
    %p110 = por %p108, %p109
    %p111 = scmp.le.s32.totalorder 1, %s9
    %p112 = scmp.lt.s32.totalorder %s9, 3
    %p113 = pnand %p111, %p112
    %p114 = pneg %p113
    // Predicated region
    $region9: #{a_call__.7} parent=5 // pred_check
      _
    $region10: #{a_call__.7} parent=5 // pred_check_branch
      %116 = sbr.rel (%p113) target = $region12
    $region11: #{a_call__.7} parent=5 // pred_region
      %s117 = ssub.s32 %s9, 1
      // Predicated region
      $region13: #{a_call__.7} parent=11 // pred_check
        %p118 = pneg %p56
      $region14: #{a_call__.7} parent=11 // pred_check_branch
        %120 = sbr.rel (%p118) target = $region16
      $region15: #{a_call__.7} parent=11 // pred_region
        _
      $region16: #{a_call__.7} parent=11 // pred_fallthru
        _
      // Predicated region
      $region17: #{a_call__.7} parent=11 // pred_check
        %p121 = pneg %p77
      $region18: #{a_call__.7} parent=11 // pred_check_branch
        %123 = sbr.rel (%p121) target = $region20
      $region19: #{a_call__.7} parent=11 // pred_region
        _
      $region20: #{a_call__.7} parent=11 // pred_fallthru
        _
    $region12: #{a_call__.7} parent=5 // pred_fallthru
      _
    %p124 = scmp.lt.s32.totalorder %s9, 2
    // Predicated region
    $region21: #{a_call__.7} parent=5 // pred_check
      %p125 = pneg %p124
    $region22: #{a_call__.7} parent=5 // pred_check_branch
      %127 = sbr.rel (%p125) target = $region24
    $region23: #{a_call__.7} parent=5 // pred_region
      // Predicated region
      $region25: #{a_call__.7} parent=23 // pred_check
        %p128 = pneg %p29
      $region26: #{a_call__.7} parent=23 // pred_check_branch
        %130 = sbr.rel (%p128) target = $region28
      $region27: #{a_call__.7} parent=23 // pred_region
        %p131 = scmp.lt.s32.totalorder %s9, 1
        %s132 = scalar_select %p131, %s9, 1
        %s133 = smul.addr %s132, 4
        %s134 = smul.addr %s133, 4
        %s135 = scalar_lea.vmem %s0, %s134
      $region28: #{a_call__.7} parent=23 // pred_fallthru
        _
    $region24: #{a_call__.7} parent=5 // pred_fallthru
      _
    %p136 = scmp.le.s32.totalorder 1, %s9
    %p137 = scmp.lt.s32.totalorder %s9, 3
    %p138 = pnand %p136, %p137
    %p139 = pneg %p138
    // Predicated region
    $region29: #{a_call__.7} parent=5 // pred_check
      _
    $region30: #{a_call__.7} parent=5 // pred_check_branch
      %141 = sbr.rel (%p138) target = $region32
    $region31: #{a_call__.7} parent=5 // pred_region
      %s142 = ssub.s32 %s9, 1
      %p143 = scmp.lt.s32.totalorder %s14, 1
      %s144 = scalar_select %p143, %s14, 1
      %s145 = smul.addr %s144, 4
      %s146 = smul.addr %s145, 4
      %s147 = scalar_lea.vmem %s0, %s146
      %p148 = pneg %p35
      %p149 = pneg %p32
      %p150 = pneg %p56
      %p151 = pneg %p53
      %p152 = pneg %p77
      %p153 = pneg %p74
      %p154 = pneg %p103
      %p155 = pneg %p100
      %p156 = scmp.lt.s32.totalorder %s14, 1
      %s157 = scalar_select %p156, %s14, 1
      %s158 = smul.addr %s157, 2
      %s159 = smul.addr %s158, 8
      %s160 = scalar_lea.vmem %s3, %s159
      %p161 = scmp.lt.s32.totalorder %s14, 1
      %s162 = scalar_select %p161, %s14, 1
      %s163 = smul.addr %s162, 4
      %s164 = smul.addr %s163, 4
      %s165 = scalar_lea.vmem %s0, %s164
      %p166 = scmp.lt.s32.totalorder %s14, 1
      %s167 = scalar_select %p166, %s14, 1
      %s168 = smul.addr %s167, 2
      %s169 = smul.addr %s168, 8
      %s170 = scalar_lea.vmem %s3, %s169
      %v172 = vld [vmem:[%s165] sm:$0xf]
      %v173 = vld [vmem:[%s165 + $0x4] sm:$0xf]
      %v174 = vld [vmem:[%s1] sm:$0xf]
      %v175 = vld [vmem:[%s1 + $0x4] sm:$0xf]
      %v176 = vld [vmem:[%s1 + $0x8] sm:$0xf]
      %v177 = vld [vmem:[%s1 + $0xc] sm:$0xf]
      %v178 = vld [vmem:[%s1 + $0x10] sm:$0xf]
      %v179 = vld [vmem:[%s1 + $0x14] sm:$0xf]
      %v180 = vld [vmem:[%s1 + $0x18] sm:$0xf]
      %v181 = vld [vmem:[%s1 + $0x1c] sm:$0xf]
      %v182 = vld [vmem:[%s1 + $0x20] sm:$0xf]
      %v183 = vld [vmem:[%s1 + $0x24] sm:$0xf]
      %v184 = vld [vmem:[%s1 + $0x28] sm:$0xf]
      %v185 = vld [vmem:[%s1 + $0x2c] sm:$0xf]
      %v186 = vld [vmem:[%s1 + $0x30] sm:$0xf]
      %v187 = vld [vmem:[%s1 + $0x34] sm:$0xf]
      %v188 = vld [vmem:[%s1 + $0x38] sm:$0xf]
      %v189 = vld [vmem:[%s1 + $0x3c] sm:$0xf]
      %v190 = vld [vmem:[%s165 + $0x8] sm:$0x1]
      %s191 = scalar_lea.vmem %s1, 64
      %v192 = vld [vmem:[%s191] sm:$0xf]
      %v193 = vld [vmem:[%s191 + $0x4] sm:$0xf]
      %v194 = vld [vmem:[%s191 + $0x8] sm:$0xf]
      %v195 = vld [vmem:[%s191 + $0xc] sm:$0xf]
      %v196 = vld [vmem:[%s191 + $0x10] sm:$0xf]
      %v197 = vld [vmem:[%s191 + $0x14] sm:$0xf]
      %v198 = vld [vmem:[%s191 + $0x18] sm:$0xf]
      %v199 = vld [vmem:[%s191 + $0x1c] sm:$0xf]
      %v200 = vld [vmem:[%s191 + $0x20] sm:$0xf]
      %v201 = vld [vmem:[%s191 + $0x24] sm:$0xf]
      %v202 = vld [vmem:[%s191 + $0x28] sm:$0xf]
      %v203 = vld [vmem:[%s191 + $0x2c] sm:$0xf]
      %v204 = vld [vmem:[%s191 + $0x30] sm:$0xf]
      %v205 = vld [vmem:[%s191 + $0x34] sm:$0xf]
      %v206 = vld [vmem:[%s191 + $0x38] sm:$0xf]
      %v207 = vld [vmem:[%s191 + $0x3c] sm:$0xf]
      %v211 = vunpack.c.l.b16 %v172
      %v212 = vunpack.c.l.b16 %v173
      %v213 = vunpack.c.l.b16 %v190
      %v214 = vpack.c.b16 %v212, %v211
      %v215 = vpack.c.b16 %v213, %v213
      %vm216 = vsmask.f32 7424
      %v218 = vshrl.u32 %v214, 16
      %v220 = vshll.u32 %v214, 16
      %v222 = vrot.slane %v220, 1
      %v223 = vor.u32 %v218, %v222
      %v225 = vshll.u32 %v215, 16
      %v227 = vrot.slane %v225, 1
      %v228 = vsel %vm216, %v223, %v227
      %v246 = vunpack.c.l.b16 %v192
      %v247 = vunpack.c.l.b16 %v193
      %v248 = vunpack.c.l.b16 %v194
      %v249 = vunpack.c.l.b16 %v195
      %v250 = vunpack.c.l.b16 %v196
      %v251 = vunpack.c.l.b16 %v197
      %v252 = vunpack.c.l.b16 %v198
      %v253 = vunpack.c.l.b16 %v199
      %v254 = vunpack.c.l.b16 %v200
      %v255 = vunpack.c.l.b16 %v201
      %v256 = vunpack.c.l.b16 %v202
      %v257 = vunpack.c.l.b16 %v203
      %v258 = vunpack.c.l.b16 %v204
      %v259 = vunpack.c.l.b16 %v205
      %v260 = vunpack.c.l.b16 %v206
      %v261 = vunpack.c.l.b16 %v207
      %v262 = vpack.c.b16 %v247, %v246
      %v263 = vpack.c.b16 %v249, %v248
      %v264 = vpack.c.b16 %v251, %v250
      %v265 = vpack.c.b16 %v253, %v252
      %v266 = vpack.c.b16 %v255, %v254
      %v267 = vpack.c.b16 %v257, %v256
      %v268 = vpack.c.b16 %v259, %v258
      %v269 = vpack.c.b16 %v261, %v260
      %278 = vmatprep.subr.bf16.mxu0 0
      %279 = vmatpush1.bf16.msra.mxu0 %v262
      %280 = vmatprep.subr.bf16.mxu0 0
      %281 = vmatpush1.bf16.msra.mxu0 %v263
      %282 = vmatprep.subr.bf16.mxu0 0
      %283 = vmatpush1.bf16.msra.mxu0 %v264
      %284 = vmatprep.subr.bf16.mxu0 0
      %285 = vmatpush1.bf16.msra.mxu0 %v265
      %286 = vmatprep.subr.bf16.mxu0 0
      %287 = vmatpush1.bf16.msra.mxu0 %v266
      %288 = vmatprep.subr.bf16.mxu0 0
      %289 = vmatpush1.bf16.msra.mxu0 %v267
      %290 = vmatprep.subr.bf16.mxu0 0
      %291 = vmatpush1.bf16.msra.mxu0 %v268
      %292 = vmatprep.subr.bf16.mxu0 0
      %293 = vmatpush1.bf16.msra.mxu0 %v269
      %294 = vmatprep.subr.bf16.mxu0 0
      %295 = vmatpush1.bf16.msra.mxu0 0
      %296 = vmatprep.subr.bf16.mxu0 0
      %297 = vmatpush1.bf16.msra.mxu0 0
      %298 = vmatprep.subr.bf16.mxu0 0
      %299 = vmatpush1.bf16.msra.mxu0 0
      %300 = vmatprep.subr.bf16.mxu0 0
      %301 = vmatpush1.bf16.msra.mxu0 0
      %302 = vmatprep.subr.bf16.mxu0 0
      %303 = vmatpush1.bf16.msra.mxu0 0
      %304 = vmatprep.subr.bf16.mxu0 0
      %305 = vmatpush1.bf16.msra.mxu0 0
      %306 = vmatprep.subr.bf16.mxu0 0
      %307 = vmatpush1.bf16.msra.mxu0 0
      %308 = vmatprep.subr.bf16.mxu0 0
      %309 = vmatpush1.bf16.msra.mxu0 0
      %310 = vmatprep.mubr.bf16.mxu0 0
      %311 = vmatmul.mubr.bf16.gmra.mrb[0].mxu0 %v228
      %v312 = vpop.f32.mrb[0].mxu0
      %v313 = vadd.f32 0.0, %v312
      %v314 = vpop.f32.mrb[0].mxu0
      %v315 = vpop.f32.mrb[0].mxu0
      %v316 = vadd.f32 0.0, %v315
      %v317 = vpop.f32.mrb[0].mxu0
      %318 = vdwg.mxu0
      %v336 = vunpack.c.l.b16 %v174
      %v337 = vunpack.c.l.b16 %v175
      %v338 = vunpack.c.l.b16 %v176
      %v339 = vunpack.c.l.b16 %v177
      %v340 = vunpack.c.l.b16 %v178
      %v341 = vunpack.c.l.b16 %v179
      %v342 = vunpack.c.l.b16 %v180
      %v343 = vunpack.c.l.b16 %v181
      %v344 = vunpack.c.l.b16 %v182
      %v345 = vunpack.c.l.b16 %v183
      %v346 = vunpack.c.l.b16 %v184
      %v347 = vunpack.c.l.b16 %v185
      %v348 = vunpack.c.l.b16 %v186
      %v349 = vunpack.c.l.b16 %v187
      %v350 = vunpack.c.l.b16 %v188
      %v351 = vunpack.c.l.b16 %v189
      %v352 = vpack.c.b16 %v337, %v336
      %v353 = vpack.c.b16 %v339, %v338
      %v354 = vpack.c.b16 %v341, %v340
      %v355 = vpack.c.b16 %v343, %v342
      %v356 = vpack.c.b16 %v345, %v344
      %v357 = vpack.c.b16 %v347, %v346
      %v358 = vpack.c.b16 %v349, %v348
      %v359 = vpack.c.b16 %v351, %v350
      %368 = vmatprep.subr.bf16.mxu0 0
      %369 = vmatpush1.bf16.msra.mxu0 %v352
      %370 = vmatprep.subr.bf16.mxu0 0
      %371 = vmatpush1.bf16.msra.mxu0 %v353
      %372 = vmatprep.subr.bf16.mxu0 0
      %373 = vmatpush1.bf16.msra.mxu0 %v354
      %374 = vmatprep.subr.bf16.mxu0 0
      %375 = vmatpush1.bf16.msra.mxu0 %v355
      %376 = vmatprep.subr.bf16.mxu0 0
      %377 = vmatpush1.bf16.msra.mxu0 %v356
      %378 = vmatprep.subr.bf16.mxu0 0
      %379 = vmatpush1.bf16.msra.mxu0 %v357
      %380 = vmatprep.subr.bf16.mxu0 0
      %381 = vmatpush1.bf16.msra.mxu0 %v358
      %382 = vmatprep.subr.bf16.mxu0 0
      %383 = vmatpush1.bf16.msra.mxu0 %v359
      %384 = vmatprep.subr.bf16.mxu0 0
      %385 = vmatpush1.bf16.msra.mxu0 0
      %386 = vmatprep.subr.bf16.mxu0 0
      %387 = vmatpush1.bf16.msra.mxu0 0
      %388 = vmatprep.subr.bf16.mxu0 0
      %389 = vmatpush1.bf16.msra.mxu0 0
      %390 = vmatprep.subr.bf16.mxu0 0
      %391 = vmatpush1.bf16.msra.mxu0 0
      %392 = vmatprep.subr.bf16.mxu0 0
      %393 = vmatpush1.bf16.msra.mxu0 0
      %394 = vmatprep.subr.bf16.mxu0 0
      %395 = vmatpush1.bf16.msra.mxu0 0
      %396 = vmatprep.subr.bf16.mxu0 0
      %397 = vmatpush1.bf16.msra.mxu0 0
      %398 = vmatprep.subr.bf16.mxu0 0
      %399 = vmatpush1.bf16.msra.mxu0 0
      %400 = vmatprep.mubr.bf16.mxu0 0
      %401 = vmatmul.mubr.bf16.gmra.mrb[0].mxu0 %v214
      %v402 = vpop.f32.mrb[0].mxu0
      %v403 = vadd.f32 %v313, %v402
      %v404 = vpop.f32.mrb[0].mxu0
      %v405 = vpop.f32.mrb[0].mxu0
      %v406 = vadd.f32 %v316, %v405
      %v407 = vpop.f32.mrb[0].mxu0
      %408 = vdwg.mxu0
      %v409 = vld [vmem:[%s165] sm:$0xe]
      %s410 = scalar_lea.vmem %s1, 128
      %v411 = vld [vmem:[%s410] sm:$0xf]
      %v412 = vld [vmem:[%s410 + $0x4] sm:$0xf]
      %v413 = vld [vmem:[%s410 + $0x8] sm:$0xf]
      %v414 = vld [vmem:[%s410 + $0xc] sm:$0xf]
      %v415 = vld [vmem:[%s410 + $0x10] sm:$0xf]
      %v416 = vld [vmem:[%s410 + $0x14] sm:$0xf]
      %v417 = vld [vmem:[%s410 + $0x18] sm:$0xf]
      %v418 = vld [vmem:[%s410 + $0x1c] sm:$0xf]
      %v419 = vld [vmem:[%s410 + $0x20] sm:$0xf]
      %v420 = vld [vmem:[%s410 + $0x24] sm:$0xf]
      %v421 = vld [vmem:[%s410 + $0x28] sm:$0xf]
      %v422 = vld [vmem:[%s410 + $0x2c] sm:$0xf]
      %v423 = vld [vmem:[%s410 + $0x30] sm:$0xf]
      %v424 = vld [vmem:[%s410 + $0x34] sm:$0xf]
      %v425 = vld [vmem:[%s410 + $0x38] sm:$0xf]
      %v426 = vld [vmem:[%s410 + $0x3c] sm:$0xf]
      %v428 = vunpack.c.l.b16 %v409
      %v429 = vpack.c.b16 %v212, %v428
      %vm430 = vcmask 1046528
      %v431 = vrot.slane %v429, 1
      %v432 = vrot.slane %v215, 1
      %v433 = vsel %vm430, %v431, %v432
      %v451 = vunpack.c.l.b16 %v411
      %v452 = vunpack.c.l.b16 %v412
      %v453 = vunpack.c.l.b16 %v413
      %v454 = vunpack.c.l.b16 %v414
      %v455 = vunpack.c.l.b16 %v415
      %v456 = vunpack.c.l.b16 %v416
      %v457 = vunpack.c.l.b16 %v417
      %v458 = vunpack.c.l.b16 %v418
      %v459 = vunpack.c.l.b16 %v419
      %v460 = vunpack.c.l.b16 %v420
      %v461 = vunpack.c.l.b16 %v421
      %v462 = vunpack.c.l.b16 %v422
      %v463 = vunpack.c.l.b16 %v423
      %v464 = vunpack.c.l.b16 %v424
      %v465 = vunpack.c.l.b16 %v425
      %v466 = vunpack.c.l.b16 %v426
      %v467 = vpack.c.b16 %v452, %v451
      %v468 = vpack.c.b16 %v454, %v453
      %v469 = vpack.c.b16 %v456, %v455
      %v470 = vpack.c.b16 %v458, %v457
      %v471 = vpack.c.b16 %v460, %v459
      %v472 = vpack.c.b16 %v462, %v461
      %v473 = vpack.c.b16 %v464, %v463
      %v474 = vpack.c.b16 %v466, %v465
      %483 = vmatprep.subr.bf16.mxu0 0
      %484 = vmatpush1.bf16.msra.mxu0 %v467
      %485 = vmatprep.subr.bf16.mxu0 0
      %486 = vmatpush1.bf16.msra.mxu0 %v468
      %487 = vmatprep.subr.bf16.mxu0 0
      %488 = vmatpush1.bf16.msra.mxu0 %v469
      %489 = vmatprep.subr.bf16.mxu0 0
      %490 = vmatpush1.bf16.msra.mxu0 %v470
      %491 = vmatprep.subr.bf16.mxu0 0
      %492 = vmatpush1.bf16.msra.mxu0 %v471
      %493 = vmatprep.subr.bf16.mxu0 0
      %494 = vmatpush1.bf16.msra.mxu0 %v472
      %495 = vmatprep.subr.bf16.mxu0 0
      %496 = vmatpush1.bf16.msra.mxu0 %v473
      %497 = vmatprep.subr.bf16.mxu0 0
      %498 = vmatpush1.bf16.msra.mxu0 %v474
      %499 = vmatprep.subr.bf16.mxu0 0
      %500 = vmatpush1.bf16.msra.mxu0 0
      %501 = vmatprep.subr.bf16.mxu0 0
      %502 = vmatpush1.bf16.msra.mxu0 0
      %503 = vmatprep.subr.bf16.mxu0 0
      %504 = vmatpush1.bf16.msra.mxu0 0
      %505 = vmatprep.subr.bf16.mxu0 0
      %506 = vmatpush1.bf16.msra.mxu0 0
      %507 = vmatprep.subr.bf16.mxu0 0
      %508 = vmatpush1.bf16.msra.mxu0 0
      %509 = vmatprep.subr.bf16.mxu0 0
      %510 = vmatpush1.bf16.msra.mxu0 0
      %511 = vmatprep.subr.bf16.mxu0 0
      %512 = vmatpush1.bf16.msra.mxu0 0
      %513 = vmatprep.subr.bf16.mxu0 0
      %514 = vmatpush1.bf16.msra.mxu0 0
      %515 = vmatprep.mubr.bf16.mxu0 0
      %516 = vmatmul.mubr.bf16.gmra.mrb[0].mxu0 %v433
      %v517 = vpop.f32.mrb[0].mxu0
      %v518 = vadd.f32 0.0, %v517
      %v519 = vpop.f32.mrb[0].mxu0
      %v520 = vpop.f32.mrb[0].mxu0
      %v521 = vadd.f32 0.0, %v520
      %v522 = vpop.f32.mrb[0].mxu0
      %523 = vdwg.mxu0
      %v524 = vadd.f32 %v403, %v518
      %v525 = vadd.f32 %v406, %v521
      %v526 = vld [vmem:[%s165 + $0x8] sm:$0x3]
      %s527 = scalar_lea.vmem %s1, 192
      %v528 = vld [vmem:[%s527] sm:$0xf]
      %v529 = vld [vmem:[%s527 + $0x4] sm:$0xf]
      %v530 = vld [vmem:[%s527 + $0x8] sm:$0xf]
      %v531 = vld [vmem:[%s527 + $0xc] sm:$0xf]
      %v532 = vld [vmem:[%s527 + $0x10] sm:$0xf]
      %v533 = vld [vmem:[%s527 + $0x14] sm:$0xf]
      %v534 = vld [vmem:[%s527 + $0x18] sm:$0xf]
      %v535 = vld [vmem:[%s527 + $0x1c] sm:$0xf]
      %v536 = vld [vmem:[%s527 + $0x20] sm:$0xf]
      %v537 = vld [vmem:[%s527 + $0x24] sm:$0xf]
      %v538 = vld [vmem:[%s527 + $0x28] sm:$0xf]
      %v539 = vld [vmem:[%s527 + $0x2c] sm:$0xf]
      %v540 = vld [vmem:[%s527 + $0x30] sm:$0xf]
      %v541 = vld [vmem:[%s527 + $0x34] sm:$0xf]
      %v542 = vld [vmem:[%s527 + $0x38] sm:$0xf]
      %v543 = vld [vmem:[%s527 + $0x3c] sm:$0xf]
      %v545 = vunpack.c.l.b16 %v526
      %v546 = vpack.c.b16 %v545, %v545
      %vm547 = vsmask.f32 6400
      %v549 = vshrl.u32 %v429, 16
      %v551 = vrot.slane %v549, 1
      %v552 = vshll.u32 %v429, 16
      %v554 = vrot.slane %v552, 2
      %v555 = vor.u32 %v551, %v554
      %v557 = vshrl.u32 %v546, 16
      %v559 = vrot.slane %v557, 1
      %v560 = vshll.u32 %v546, 16
      %v562 = vrot.slane %v560, 2
      %v563 = vor.u32 %v559, %v562
      %v564 = vsel %vm547, %v555, %v563
      %v582 = vunpack.c.l.b16 %v528
      %v583 = vunpack.c.l.b16 %v529
      %v584 = vunpack.c.l.b16 %v530
      %v585 = vunpack.c.l.b16 %v531
      %v586 = vunpack.c.l.b16 %v532
      %v587 = vunpack.c.l.b16 %v533
      %v588 = vunpack.c.l.b16 %v534
      %v589 = vunpack.c.l.b16 %v535
      %v590 = vunpack.c.l.b16 %v536
      %v591 = vunpack.c.l.b16 %v537
      %v592 = vunpack.c.l.b16 %v538
      %v593 = vunpack.c.l.b16 %v539
      %v594 = vunpack.c.l.b16 %v540
      %v595 = vunpack.c.l.b16 %v541
      %v596 = vunpack.c.l.b16 %v542
      %v597 = vunpack.c.l.b16 %v543
      %v598 = vpack.c.b16 %v583, %v582
      %v599 = vpack.c.b16 %v585, %v584
      %v600 = vpack.c.b16 %v587, %v586
      %v601 = vpack.c.b16 %v589, %v588
      %v602 = vpack.c.b16 %v591, %v590
      %v603 = vpack.c.b16 %v593, %v592
      %v604 = vpack.c.b16 %v595, %v594
      %v605 = vpack.c.b16 %v597, %v596
      %614 = vmatprep.subr.bf16.mxu0 0
      %615 = vmatpush1.bf16.msra.mxu0 %v598
      %616 = vmatprep.subr.bf16.mxu0 0
      %617 = vmatpush1.bf16.msra.mxu0 %v599
      %618 = vmatprep.subr.bf16.mxu0 0
      %619 = vmatpush1.bf16.msra.mxu0 %v600
      %620 = vmatprep.subr.bf16.mxu0 0
      %621 = vmatpush1.bf16.msra.mxu0 %v601
      %622 = vmatprep.subr.bf16.mxu0 0
      %623 = vmatpush1.bf16.msra.mxu0 %v602
      %624 = vmatprep.subr.bf16.mxu0 0
      %625 = vmatpush1.bf16.msra.mxu0 %v603
      %626 = vmatprep.subr.bf16.mxu0 0
      %627 = vmatpush1.bf16.msra.mxu0 %v604
      %628 = vmatprep.subr.bf16.mxu0 0
      %629 = vmatpush1.bf16.msra.mxu0 %v605
      %630 = vmatprep.subr.bf16.mxu0 0
      %631 = vmatpush1.bf16.msra.mxu0 0
      %632 = vmatprep.subr.bf16.mxu0 0
      %633 = vmatpush1.bf16.msra.mxu0 0
      %634 = vmatprep.subr.bf16.mxu0 0
      %635 = vmatpush1.bf16.msra.mxu0 0
      %636 = vmatprep.subr.bf16.mxu0 0
      %637 = vmatpush1.bf16.msra.mxu0 0
      %638 = vmatprep.subr.bf16.mxu0 0
      %639 = vmatpush1.bf16.msra.mxu0 0
      %640 = vmatprep.subr.bf16.mxu0 0
      %641 = vmatpush1.bf16.msra.mxu0 0
      %642 = vmatprep.subr.bf16.mxu0 0
      %643 = vmatpush1.bf16.msra.mxu0 0
      %644 = vmatprep.subr.bf16.mxu0 0
      %645 = vmatpush1.bf16.msra.mxu0 0
      %646 = vmatprep.mubr.bf16.mxu0 0
      %647 = vmatmul.mubr.bf16.gmra.mrb[0].mxu0 %v564
      %v648 = vpop.f32.mrb[0].mxu0
      %v649 = vadd.f32 0.0, %v648
      %v650 = vpop.f32.mrb[0].mxu0
      %v651 = vpop.f32.mrb[0].mxu0
      %v652 = vadd.f32 0.0, %v651
      %v653 = vpop.f32.mrb[0].mxu0
      %654 = vdwg.mxu0
      %v655 = vadd.f32 %v524, %v649
      %v656 = vadd.f32 %v525, %v652
      %v657 = vld [vmem:[%s165] sm:$0xc]
      %s658 = scalar_lea.vmem %s1, 256
      %v659 = vld [vmem:[%s658] sm:$0xf]
      %v660 = vld [vmem:[%s658 + $0x4] sm:$0xf]
      %v661 = vld [vmem:[%s658 + $0x8] sm:$0xf]
      %v662 = vld [vmem:[%s658 + $0xc] sm:$0xf]
      %v663 = vld [vmem:[%s658 + $0x10] sm:$0xf]
      %v664 = vld [vmem:[%s658 + $0x14] sm:$0xf]
      %v665 = vld [vmem:[%s658 + $0x18] sm:$0xf]
      %v666 = vld [vmem:[%s658 + $0x1c] sm:$0xf]
      %v667 = vld [vmem:[%s658 + $0x20] sm:$0xf]
      %v668 = vld [vmem:[%s658 + $0x24] sm:$0xf]
      %v669 = vld [vmem:[%s658 + $0x28] sm:$0xf]
      %v670 = vld [vmem:[%s658 + $0x2c] sm:$0xf]
      %v671 = vld [vmem:[%s658 + $0x30] sm:$0xf]
      %v672 = vld [vmem:[%s658 + $0x34] sm:$0xf]
      %v673 = vld [vmem:[%s658 + $0x38] sm:$0xf]
      %v674 = vld [vmem:[%s658 + $0x3c] sm:$0xf]
      %v676 = vunpack.c.l.b16 %v657
      %v677 = vpack.c.b16 %v212, %v676
      %vm678 = vcmask 1045504
      %v679 = vrot.slane %v677, 2
      %v680 = vrot.slane %v546, 2
      %v681 = vsel %vm678, %v679, %v680
      %v699 = vunpack.c.l.b16 %v659
      %v700 = vunpack.c.l.b16 %v660
      %v701 = vunpack.c.l.b16 %v661
      %v702 = vunpack.c.l.b16 %v662
      %v703 = vunpack.c.l.b16 %v663
      %v704 = vunpack.c.l.b16 %v664
      %v705 = vunpack.c.l.b16 %v665
      %v706 = vunpack.c.l.b16 %v666
      %v707 = vunpack.c.l.b16 %v667
      %v708 = vunpack.c.l.b16 %v668
      %v709 = vunpack.c.l.b16 %v669
      %v710 = vunpack.c.l.b16 %v670
      %v711 = vunpack.c.l.b16 %v671
      %v712 = vunpack.c.l.b16 %v672
      %v713 = vunpack.c.l.b16 %v673
      %v714 = vunpack.c.l.b16 %v674
      %v715 = vpack.c.b16 %v700, %v699
      %v716 = vpack.c.b16 %v702, %v701
      %v717 = vpack.c.b16 %v704, %v703
      %v718 = vpack.c.b16 %v706, %v705
      %v719 = vpack.c.b16 %v708, %v707
      %v720 = vpack.c.b16 %v710, %v709
      %v721 = vpack.c.b16 %v712, %v711
      %v722 = vpack.c.b16 %v714, %v713
      %731 = vmatprep.subr.bf16.mxu0 0
      %732 = vmatpush1.bf16.msra.mxu0 %v715
      %733 = vmatprep.subr.bf16.mxu0 0
      %734 = vmatpush1.bf16.msra.mxu0 %v716
      %735 = vmatprep.subr.bf16.mxu0 0
      %736 = vmatpush1.bf16.msra.mxu0 %v717
      %737 = vmatprep.subr.bf16.mxu0 0
      %738 = vmatpush1.bf16.msra.mxu0 %v718
      %739 = vmatprep.subr.bf16.mxu0 0
      %740 = vmatpush1.bf16.msra.mxu0 %v719
      %741 = vmatprep.subr.bf16.mxu0 0
      %742 = vmatpush1.bf16.msra.mxu0 %v720
      %743 = vmatprep.subr.bf16.mxu0 0
      %744 = vmatpush1.bf16.msra.mxu0 %v721
      %745 = vmatprep.subr.bf16.mxu0 0
      %746 = vmatpush1.bf16.msra.mxu0 %v722
      %747 = vmatprep.subr.bf16.mxu0 0
      %748 = vmatpush1.bf16.msra.mxu0 0
      %749 = vmatprep.subr.bf16.mxu0 0
      %750 = vmatpush1.bf16.msra.mxu0 0
      %751 = vmatprep.subr.bf16.mxu0 0
      %752 = vmatpush1.bf16.msra.mxu0 0
      %753 = vmatprep.subr.bf16.mxu0 0
      %754 = vmatpush1.bf16.msra.mxu0 0
      %755 = vmatprep.subr.bf16.mxu0 0
      %756 = vmatpush1.bf16.msra.mxu0 0
      %757 = vmatprep.subr.bf16.mxu0 0
      %758 = vmatpush1.bf16.msra.mxu0 0
      %759 = vmatprep.subr.bf16.mxu0 0
      %760 = vmatpush1.bf16.msra.mxu0 0
      %761 = vmatprep.subr.bf16.mxu0 0
      %762 = vmatpush1.bf16.msra.mxu0 0
      %763 = vmatprep.mubr.bf16.mxu0 0
      %764 = vmatmul.mubr.bf16.gmra.mrb[0].mxu0 %v681
      %v765 = vpop.f32.mrb[0].mxu0
      %v766 = vadd.f32 0.0, %v765
      %v767 = vpop.f32.mrb[0].mxu0
      %v768 = vpop.f32.mrb[0].mxu0
      %v769 = vadd.f32 0.0, %v768
      %v770 = vpop.f32.mrb[0].mxu0
      %771 = vdwg.mxu0
      %v772 = vadd.f32 %v655, %v766
      %v773 = vadd.f32 %v656, %v769
      %v774 = vld [vmem:[%s165 + $0x8] sm:$0x7]
      %s775 = scalar_lea.vmem %s1, 320
      %v776 = vld [vmem:[%s775] sm:$0xf]
      %v777 = vld [vmem:[%s775 + $0x4] sm:$0xf]
      %v778 = vld [vmem:[%s775 + $0x8] sm:$0xf]
      %v779 = vld [vmem:[%s775 + $0xc] sm:$0xf]
      %v780 = vld [vmem:[%s775 + $0x10] sm:$0xf]
      %v781 = vld [vmem:[%s775 + $0x14] sm:$0xf]
      %v782 = vld [vmem:[%s775 + $0x18] sm:$0xf]
      %v783 = vld [vmem:[%s775 + $0x1c] sm:$0xf]
      %v784 = vld [vmem:[%s775 + $0x20] sm:$0xf]
      %v785 = vld [vmem:[%s775 + $0x24] sm:$0xf]
      %v786 = vld [vmem:[%s775 + $0x28] sm:$0xf]
      %v787 = vld [vmem:[%s775 + $0x2c] sm:$0xf]
      %v788 = vld [vmem:[%s775 + $0x30] sm:$0xf]
      %v789 = vld [vmem:[%s775 + $0x34] sm:$0xf]
      %v790 = vld [vmem:[%s775 + $0x38] sm:$0xf]
      %v791 = vld [vmem:[%s775 + $0x3c] sm:$0xf]
      %v793 = vunpack.c.l.b16 %v774
      %v794 = vpack.c.b16 %v793, %v793
      %vm795 = vsmask.f32 5376
      %v797 = vshrl.u32 %v677, 16
      %v799 = vrot.slane %v797, 2
      %v800 = vshll.u32 %v677, 16
      %v802 = vrot.slane %v800, 3
      %v803 = vor.u32 %v799, %v802
      %v805 = vshrl.u32 %v794, 16
      %v807 = vrot.slane %v805, 2
      %v808 = vshll.u32 %v794, 16
      %v810 = vrot.slane %v808, 3
      %v811 = vor.u32 %v807, %v810
      %v812 = vsel %vm795, %v803, %v811
      %v830 = vunpack.c.l.b16 %v776
      %v831 = vunpack.c.l.b16 %v777
      %v832 = vunpack.c.l.b16 %v778
      %v833 = vunpack.c.l.b16 %v779
      %v834 = vunpack.c.l.b16 %v780
      %v835 = vunpack.c.l.b16 %v781
      %v836 = vunpack.c.l.b16 %v782
      %v837 = vunpack.c.l.b16 %v783
      %v838 = vunpack.c.l.b16 %v784
      %v839 = vunpack.c.l.b16 %v785
      %v840 = vunpack.c.l.b16 %v786
      %v841 = vunpack.c.l.b16 %v787
      %v842 = vunpack.c.l.b16 %v788
      %v843 = vunpack.c.l.b16 %v789
      %v844 = vunpack.c.l.b16 %v790
      %v845 = vunpack.c.l.b16 %v791
      %v846 = vpack.c.b16 %v831, %v830
      %v847 = vpack.c.b16 %v833, %v832
      %v848 = vpack.c.b16 %v835, %v834
      %v849 = vpack.c.b16 %v837, %v836
      %v850 = vpack.c.b16 %v839, %v838
      %v851 = vpack.c.b16 %v841, %v840
      %v852 = vpack.c.b16 %v843, %v842
      %v853 = vpack.c.b16 %v845, %v844
      %862 = vmatprep.subr.bf16.mxu0 0
      %863 = vmatpush1.bf16.msra.mxu0 %v846
      %864 = vmatprep.subr.bf16.mxu0 0
      %865 = vmatpush1.bf16.msra.mxu0 %v847
      %866 = vmatprep.subr.bf16.mxu0 0
      %867 = vmatpush1.bf16.msra.mxu0 %v848
      %868 = vmatprep.subr.bf16.mxu0 0
      %869 = vmatpush1.bf16.msra.mxu0 %v849
      %870 = vmatprep.subr.bf16.mxu0 0
      %871 = vmatpush1.bf16.msra.mxu0 %v850
      %872 = vmatprep.subr.bf16.mxu0 0
      %873 = vmatpush1.bf16.msra.mxu0 %v851
      %874 = vmatprep.subr.bf16.mxu0 0
      %875 = vmatpush1.bf16.msra.mxu0 %v852
      %876 = vmatprep.subr.bf16.mxu0 0
      %877 = vmatpush1.bf16.msra.mxu0 %v853
      %878 = vmatprep.subr.bf16.mxu0 0
      %879 = vmatpush1.bf16.msra.mxu0 0
      %880 = vmatprep.subr.bf16.mxu0 0
      %881 = vmatpush1.bf16.msra.mxu0 0
      %882 = vmatprep.subr.bf16.mxu0 0
      %883 = vmatpush1.bf16.msra.mxu0 0
      %884 = vmatprep.subr.bf16.mxu0 0
      %885 = vmatpush1.bf16.msra.mxu0 0
      %886 = vmatprep.subr.bf16.mxu0 0
      %887 = vmatpush1.bf16.msra.mxu0 0
      %888 = vmatprep.subr.bf16.mxu0 0
      %889 = vmatpush1.bf16.msra.mxu0 0
      %890 = vmatprep.subr.bf16.mxu0 0
      %891 = vmatpush1.bf16.msra.mxu0 0
      %892 = vmatprep.subr.bf16.mxu0 0
      %893 = vmatpush1.bf16.msra.mxu0 0
      %894 = vmatprep.mubr.bf16.mxu0 0
      %895 = vmatmul.mubr.bf16.gmra.mrb[0].mxu0 %v812
      %v896 = vpop.f32.mrb[0].mxu0
      %v897 = vadd.f32 0.0, %v896
      %v898 = vpop.f32.mrb[0].mxu0
      %v899 = vpop.f32.mrb[0].mxu0
      %v900 = vadd.f32 0.0, %v899
      %v901 = vpop.f32.mrb[0].mxu0
      %902 = vdwg.mxu0
      %v903 = vadd.f32 %v772, %v897
      %v904 = vadd.f32 %v773, %v900
      %v905 = vld [vmem:[%s165] sm:$0x8]
      %s906 = scalar_lea.vmem %s1, 384
      %v907 = vld [vmem:[%s906] sm:$0xf]
      %v908 = vld [vmem:[%s906 + $0x4] sm:$0xf]
      %v909 = vld [vmem:[%s906 + $0x8] sm:$0xf]
      %v910 = vld [vmem:[%s906 + $0xc] sm:$0xf]
      %v911 = vld [vmem:[%s906 + $0x10] sm:$0xf]
      %v912 = vld [vmem:[%s906 + $0x14] sm:$0xf]
      %v913 = vld [vmem:[%s906 + $0x18] sm:$0xf]
      %v914 = vld [vmem:[%s906 + $0x1c] sm:$0xf]
      %v915 = vld [vmem:[%s906 + $0x20] sm:$0xf]
      %v916 = vld [vmem:[%s906 + $0x24] sm:$0xf]
      %v917 = vld [vmem:[%s906 + $0x28] sm:$0xf]
      %v918 = vld [vmem:[%s906 + $0x2c] sm:$0xf]
      %v919 = vld [vmem:[%s906 + $0x30] sm:$0xf]
      %v920 = vld [vmem:[%s906 + $0x34] sm:$0xf]
      %v921 = vld [vmem:[%s906 + $0x38] sm:$0xf]
      %v922 = vld [vmem:[%s906 + $0x3c] sm:$0xf]
      %v924 = vunpack.c.l.b16 %v905
      %v925 = vpack.c.b16 %v212, %v924
      %vm926 = vcmask 1044480
      %v927 = vrot.slane %v925, 3
      %v928 = vrot.slane %v794, 3
      %v929 = vsel %vm926, %v927, %v928
      %v947 = vunpack.c.l.b16 %v907
      %v948 = vunpack.c.l.b16 %v908
      %v949 = vunpack.c.l.b16 %v909
      %v950 = vunpack.c.l.b16 %v910
      %v951 = vunpack.c.l.b16 %v911
      %v952 = vunpack.c.l.b16 %v912
      %v953 = vunpack.c.l.b16 %v913
      %v954 = vunpack.c.l.b16 %v914
      %v955 = vunpack.c.l.b16 %v915
      %v956 = vunpack.c.l.b16 %v916
      %v957 = vunpack.c.l.b16 %v917
      %v958 = vunpack.c.l.b16 %v918
      %v959 = vunpack.c.l.b16 %v919
      %v960 = vunpack.c.l.b16 %v920
      %v961 = vunpack.c.l.b16 %v921
      %v962 = vunpack.c.l.b16 %v922
      %v963 = vpack.c.b16 %v948, %v947
      %v964 = vpack.c.b16 %v950, %v949
      %v965 = vpack.c.b16 %v952, %v951
      %v966 = vpack.c.b16 %v954, %v953
      %v967 = vpack.c.b16 %v956, %v955
      %v968 = vpack.c.b16 %v958, %v957
      %v969 = vpack.c.b16 %v960, %v959
      %v970 = vpack.c.b16 %v962, %v961
      %979 = vmatprep.subr.bf16.mxu0 0
      %980 = vmatpush1.bf16.msra.mxu0 %v963
      %981 = vmatprep.subr.bf16.mxu0 0
      %982 = vmatpush1.bf16.msra.mxu0 %v964
      %983 = vmatprep.subr.bf16.mxu0 0
      %984 = vmatpush1.bf16.msra.mxu0 %v965
      %985 = vmatprep.subr.bf16.mxu0 0
      %986 = vmatpush1.bf16.msra.mxu0 %v966
      %987 = vmatprep.subr.bf16.mxu0 0
      %988 = vmatpush1.bf16.msra.mxu0 %v967
      %989 = vmatprep.subr.bf16.mxu0 0
      %990 = vmatpush1.bf16.msra.mxu0 %v968
      %991 = vmatprep.subr.bf16.mxu0 0
      %992 = vmatpush1.bf16.msra.mxu0 %v969
      %993 = vmatprep.subr.bf16.mxu0 0
      %994 = vmatpush1.bf16.msra.mxu0 %v970
      %995 = vmatprep.subr.bf16.mxu0 0
      %996 = vmatpush1.bf16.msra.mxu0 0
      %997 = vmatprep.subr.bf16.mxu0 0
      %998 = vmatpush1.bf16.msra.mxu0 0
      %999 = vmatprep.subr.bf16.mxu0 0
      %1000 = vmatpush1.bf16.msra.mxu0 0
      %1001 = vmatprep.subr.bf16.mxu0 0
      %1002 = vmatpush1.bf16.msra.mxu0 0
      %1003 = vmatprep.subr.bf16.mxu0 0
      %1004 = vmatpush1.bf16.msra.mxu0 0
      %1005 = vmatprep.subr.bf16.mxu0 0
      %1006 = vmatpush1.bf16.msra.mxu0 0
      %1007 = vmatprep.subr.bf16.mxu0 0
      %1008 = vmatpush1.bf16.msra.mxu0 0
      %1009 = vmatprep.subr.bf16.mxu0 0
      %1010 = vmatpush1.bf16.msra.mxu0 0
      %1011 = vmatprep.mubr.bf16.mxu0 0
      %1012 = vmatmul.mubr.bf16.gmra.mrb[0].mxu0 %v929
      %v1013 = vpop.f32.mrb[0].mxu0
      %v1014 = vadd.f32 0.0, %v1013
      %v1015 = vpop.f32.mrb[0].mxu0
      %v1016 = vpop.f32.mrb[0].mxu0
      %v1017 = vadd.f32 0.0, %v1016
      %v1018 = vpop.f32.mrb[0].mxu0
      %1019 = vdwg.mxu0
      %v1020 = vadd.f32 %v903, %v1014
      %v1021 = vadd.f32 %v904, %v1017
      %v1022 = vld [vmem:[%s165 + $0x8] sm:$0xf]
      %s1023 = scalar_lea.vmem %s1, 448
      %v1024 = vld [vmem:[%s1023] sm:$0xf]
      %v1025 = vld [vmem:[%s1023 + $0x4] sm:$0xf]
      %v1026 = vld [vmem:[%s1023 + $0x8] sm:$0xf]
      %v1027 = vld [vmem:[%s1023 + $0xc] sm:$0xf]
      %v1028 = vld [vmem:[%s1023 + $0x10] sm:$0xf]
      %v1029 = vld [vmem:[%s1023 + $0x14] sm:$0xf]
      %v1030 = vld [vmem:[%s1023 + $0x18] sm:$0xf]
      %v1031 = vld [vmem:[%s1023 + $0x1c] sm:$0xf]
      %v1032 = vld [vmem:[%s1023 + $0x20] sm:$0xf]
      %v1033 = vld [vmem:[%s1023 + $0x24] sm:$0xf]
      %v1034 = vld [vmem:[%s1023 + $0x28] sm:$0xf]
      %v1035 = vld [vmem:[%s1023 + $0x2c] sm:$0xf]
      %v1036 = vld [vmem:[%s1023 + $0x30] sm:$0xf]
      %v1037 = vld [vmem:[%s1023 + $0x34] sm:$0xf]
      %v1038 = vld [vmem:[%s1023 + $0x38] sm:$0xf]
      %v1039 = vld [vmem:[%s1023 + $0x3c] sm:$0xf]
      %v1041 = vunpack.c.l.b16 %v1022
      %v1042 = vpack.c.b16 %v1041, %v1041
      %vm1043 = vsmask.f32 4352
      %v1045 = vshrl.u32 %v925, 16
      %v1047 = vrot.slane %v1045, 3
      %v1048 = vshll.u32 %v925, 16
      %v1050 = vrot.slane %v1048, 4
      %v1051 = vor.u32 %v1047, %v1050
      %v1053 = vshrl.u32 %v1042, 16
      %v1055 = vrot.slane %v1053, 3
      %v1056 = vshll.u32 %v1042, 16
      %v1058 = vrot.slane %v1056, 4
      %v1059 = vor.u32 %v1055, %v1058
      %v1060 = vsel %vm1043, %v1051, %v1059
      %v1078 = vunpack.c.l.b16 %v1024
      %v1079 = vunpack.c.l.b16 %v1025
      %v1080 = vunpack.c.l.b16 %v1026
      %v1081 = vunpack.c.l.b16 %v1027
      %v1082 = vunpack.c.l.b16 %v1028
      %v1083 = vunpack.c.l.b16 %v1029
      %v1084 = vunpack.c.l.b16 %v1030
      %v1085 = vunpack.c.l.b16 %v1031
      %v1086 = vunpack.c.l.b16 %v1032
      %v1087 = vunpack.c.l.b16 %v1033
      %v1088 = vunpack.c.l.b16 %v1034
      %v1089 = vunpack.c.l.b16 %v1035
      %v1090 = vunpack.c.l.b16 %v1036
      %v1091 = vunpack.c.l.b16 %v1037
      %v1092 = vunpack.c.l.b16 %v1038
      %v1093 = vunpack.c.l.b16 %v1039
      %v1094 = vpack.c.b16 %v1079, %v1078
      %v1095 = vpack.c.b16 %v1081, %v1080
      %v1096 = vpack.c.b16 %v1083, %v1082
      %v1097 = vpack.c.b16 %v1085, %v1084
      %v1098 = vpack.c.b16 %v1087, %v1086
      %v1099 = vpack.c.b16 %v1089, %v1088
      %v1100 = vpack.c.b16 %v1091, %v1090
      %v1101 = vpack.c.b16 %v1093, %v1092
      %1110 = vmatprep.subr.bf16.mxu0 0
      %1111 = vmatpush1.bf16.msra.mxu0 %v1094
      %1112 = vmatprep.subr.bf16.mxu0 0
      %1113 = vmatpush1.bf16.msra.mxu0 %v1095
      %1114 = vmatprep.subr.bf16.mxu0 0
      %1115 = vmatpush1.bf16.msra.mxu0 %v1096
      %1116 = vmatprep.subr.bf16.mxu0 0
      %1117 = vmatpush1.bf16.msra.mxu0 %v1097
      %1118 = vmatprep.subr.bf16.mxu0 0
      %1119 = vmatpush1.bf16.msra.mxu0 %v1098
      %1120 = vmatprep.subr.bf16.mxu0 0
      %1121 = vmatpush1.bf16.msra.mxu0 %v1099
      %1122 = vmatprep.subr.bf16.mxu0 0
      %1123 = vmatpush1.bf16.msra.mxu0 %v1100
      %1124 = vmatprep.subr.bf16.mxu0 0
      %1125 = vmatpush1.bf16.msra.mxu0 %v1101
      %1126 = vmatprep.subr.bf16.mxu0 0
      %1127 = vmatpush1.bf16.msra.mxu0 0
      %1128 = vmatprep.subr.bf16.mxu0 0
      %1129 = vmatpush1.bf16.msra.mxu0 0
      %1130 = vmatprep.subr.bf16.mxu0 0
      %1131 = vmatpush1.bf16.msra.mxu0 0
      %1132 = vmatprep.subr.bf16.mxu0 0
      %1133 = vmatpush1.bf16.msra.mxu0 0
      %1134 = vmatprep.subr.bf16.mxu0 0
      %1135 = vmatpush1.bf16.msra.mxu0 0
      %1136 = vmatprep.subr.bf16.mxu0 0
      %1137 = vmatpush1.bf16.msra.mxu0 0
      %1138 = vmatprep.subr.bf16.mxu0 0
      %1139 = vmatpush1.bf16.msra.mxu0 0
      %1140 = vmatprep.subr.bf16.mxu0 0
      %1141 = vmatpush1.bf16.msra.mxu0 0
      %1142 = vmatprep.mubr.bf16.mxu0 0
      %1143 = vmatmul.mubr.bf16.gmra.mrb[0].mxu0 %v1060
      %v1144 = vpop.f32.mrb[0].mxu0
      %v1145 = vadd.f32 0.0, %v1144
      %v1146 = vpop.f32.mrb[0].mxu0
      %v1147 = vpop.f32.mrb[0].mxu0
      %v1148 = vadd.f32 0.0, %v1147
      %v1149 = vpop.f32.mrb[0].mxu0
      %1150 = vdwg.mxu0
      %v1151 = vadd.f32 %v1020, %v1145
      %v1152 = vadd.f32 %v1021, %v1148
      %s1153 = scalar_lea.vmem %s1, 512
      %v1154 = vld [vmem:[%s1153] sm:$0xf]
      %v1155 = vld [vmem:[%s1153 + $0x4] sm:$0xf]
      %v1156 = vld [vmem:[%s1153 + $0x8] sm:$0xf]
      %v1157 = vld [vmem:[%s1153 + $0xc] sm:$0xf]
      %v1158 = vld [vmem:[%s1153 + $0x10] sm:$0xf]
      %v1159 = vld [vmem:[%s1153 + $0x14] sm:$0xf]
      %v1160 = vld [vmem:[%s1153 + $0x18] sm:$0xf]
      %v1161 = vld [vmem:[%s1153 + $0x1c] sm:$0xf]
      %v1162 = vld [vmem:[%s1153 + $0x20] sm:$0xf]
      %v1163 = vld [vmem:[%s1153 + $0x24] sm:$0xf]
      %v1164 = vld [vmem:[%s1153 + $0x28] sm:$0xf]
      %v1165 = vld [vmem:[%s1153 + $0x2c] sm:$0xf]
      %v1166 = vld [vmem:[%s1153 + $0x30] sm:$0xf]
      %v1167 = vld [vmem:[%s1153 + $0x34] sm:$0xf]
      %v1168 = vld [vmem:[%s1153 + $0x38] sm:$0xf]
      %v1169 = vld [vmem:[%s1153 + $0x3c] sm:$0xf]
      %v1170 = vpack.c.b16 %v1041, %v212
      %v1188 = vunpack.c.l.b16 %v1154
      %v1189 = vunpack.c.l.b16 %v1155
      %v1190 = vunpack.c.l.b16 %v1156
      %v1191 = vunpack.c.l.b16 %v1157
      %v1192 = vunpack.c.l.b16 %v1158
      %v1193 = vunpack.c.l.b16 %v1159
      %v1194 = vunpack.c.l.b16 %v1160
      %v1195 = vunpack.c.l.b16 %v1161
      %v1196 = vunpack.c.l.b16 %v1162
      %v1197 = vunpack.c.l.b16 %v1163
      %v1198 = vunpack.c.l.b16 %v1164
      %v1199 = vunpack.c.l.b16 %v1165
      %v1200 = vunpack.c.l.b16 %v1166
      %v1201 = vunpack.c.l.b16 %v1167
      %v1202 = vunpack.c.l.b16 %v1168
      %v1203 = vunpack.c.l.b16 %v1169
      %v1204 = vpack.c.b16 %v1189, %v1188
      %v1205 = vpack.c.b16 %v1191, %v1190
      %v1206 = vpack.c.b16 %v1193, %v1192
      %v1207 = vpack.c.b16 %v1195, %v1194
      %v1208 = vpack.c.b16 %v1197, %v1196
      %v1209 = vpack.c.b16 %v1199, %v1198
      %v1210 = vpack.c.b16 %v1201, %v1200
      %v1211 = vpack.c.b16 %v1203, %v1202
      %1220 = vmatprep.subr.bf16.mxu0 0
      %1221 = vmatpush1.bf16.msra.mxu0 %v1204
      %1222 = vmatprep.subr.bf16.mxu0 0
      %1223 = vmatpush1.bf16.msra.mxu0 %v1205
      %1224 = vmatprep.subr.bf16.mxu0 0
      %1225 = vmatpush1.bf16.msra.mxu0 %v1206
      %1226 = vmatprep.subr.bf16.mxu0 0
      %1227 = vmatpush1.bf16.msra.mxu0 %v1207
      %1228 = vmatprep.subr.bf16.mxu0 0
      %1229 = vmatpush1.bf16.msra.mxu0 %v1208
      %1230 = vmatprep.subr.bf16.mxu0 0
      %1231 = vmatpush1.bf16.msra.mxu0 %v1209
      %1232 = vmatprep.subr.bf16.mxu0 0
      %1233 = vmatpush1.bf16.msra.mxu0 %v1210
      %1234 = vmatprep.subr.bf16.mxu0 0
      %1235 = vmatpush1.bf16.msra.mxu0 %v1211
      %1236 = vmatprep.subr.bf16.mxu0 0
      %1237 = vmatpush1.bf16.msra.mxu0 0
      %1238 = vmatprep.subr.bf16.mxu0 0
      %1239 = vmatpush1.bf16.msra.mxu0 0
      %1240 = vmatprep.subr.bf16.mxu0 0
      %1241 = vmatpush1.bf16.msra.mxu0 0
      %1242 = vmatprep.subr.bf16.mxu0 0
      %1243 = vmatpush1.bf16.msra.mxu0 0
      %1244 = vmatprep.subr.bf16.mxu0 0
      %1245 = vmatpush1.bf16.msra.mxu0 0
      %1246 = vmatprep.subr.bf16.mxu0 0
      %1247 = vmatpush1.bf16.msra.mxu0 0
      %1248 = vmatprep.subr.bf16.mxu0 0
      %1249 = vmatpush1.bf16.msra.mxu0 0
      %1250 = vmatprep.subr.bf16.mxu0 0
      %1251 = vmatpush1.bf16.msra.mxu0 0
      %1252 = vmatprep.mubr.bf16.mxu0 0
      %1253 = vmatmul.mubr.bf16.gmra.mrb[0].mxu0 %v1170
      %v1254 = vpop.f32.mrb[0].mxu0
      %v1255 = vadd.f32 0.0, %v1254
      %v1256 = vpop.f32.mrb[0].mxu0
      %v1257 = vpop.f32.mrb[0].mxu0
      %v1258 = vadd.f32 0.0, %v1257
      %v1259 = vpop.f32.mrb[0].mxu0
      %1260 = vdwg.mxu0
      %v1261 = vadd.f32 %v1151, %v1255
      %v1262 = vadd.f32 %v1152, %v1258
      %v1263 = vld [vmem:[%s165 + $0x4] sm:$0xf]
      %v1264 = vld [vmem:[%s165 + $0x8] sm:$0xf]
      %v1265 = vld [vmem:[%s165 + $0xc] sm:$0x1]
      %s1266 = scalar_lea.vmem %s1, 576
      %v1267 = vld [vmem:[%s1266] sm:$0xf]
      %v1268 = vld [vmem:[%s1266 + $0x4] sm:$0xf]
      %v1269 = vld [vmem:[%s1266 + $0x8] sm:$0xf]
      %v1270 = vld [vmem:[%s1266 + $0xc] sm:$0xf]
      %v1271 = vld [vmem:[%s1266 + $0x10] sm:$0xf]
      %v1272 = vld [vmem:[%s1266 + $0x14] sm:$0xf]
      %v1273 = vld [vmem:[%s1266 + $0x18] sm:$0xf]
      %v1274 = vld [vmem:[%s1266 + $0x1c] sm:$0xf]
      %v1275 = vld [vmem:[%s1266 + $0x20] sm:$0xf]
      %v1276 = vld [vmem:[%s1266 + $0x24] sm:$0xf]
      %v1277 = vld [vmem:[%s1266 + $0x28] sm:$0xf]
      %v1278 = vld [vmem:[%s1266 + $0x2c] sm:$0xf]
      %v1279 = vld [vmem:[%s1266 + $0x30] sm:$0xf]
      %v1280 = vld [vmem:[%s1266 + $0x34] sm:$0xf]
      %v1281 = vld [vmem:[%s1266 + $0x38] sm:$0xf]
      %v1282 = vld [vmem:[%s1266 + $0x3c] sm:$0xf]
      %v1286 = vunpack.c.l.b16 %v1263
      %v1287 = vunpack.c.l.b16 %v1264
      %v1288 = vunpack.c.l.b16 %v1265
      %v1289 = vpack.c.b16 %v1287, %v1286
      %v1290 = vpack.c.b16 %v1288, %v1288
      %v1292 = vshrl.u32 %v1289, 16
      %v1294 = vshll.u32 %v1289, 16
      %v1296 = vrot.slane %v1294, 1
      %v1297 = vor.u32 %v1292, %v1296
      %v1299 = vshll.u32 %v1290, 16
      %v1301 = vrot.slane %v1299, 1
      %v1302 = vsel %vm216, %v1297, %v1301
      %v1320 = vunpack.c.l.b16 %v1267
      %v1321 = vunpack.c.l.b16 %v1268
      %v1322 = vunpack.c.l.b16 %v1269
      %v1323 = vunpack.c.l.b16 %v1270
      %v1324 = vunpack.c.l.b16 %v1271
      %v1325 = vunpack.c.l.b16 %v1272
      %v1326 = vunpack.c.l.b16 %v1273
      %v1327 = vunpack.c.l.b16 %v1274
      %v1328 = vunpack.c.l.b16 %v1275
      %v1329 = vunpack.c.l.b16 %v1276
      %v1330 = vunpack.c.l.b16 %v1277
      %v1331 = vunpack.c.l.b16 %v1278
      %v1332 = vunpack.c.l.b16 %v1279
      %v1333 = vunpack.c.l.b16 %v1280
      %v1334 = vunpack.c.l.b16 %v1281
      %v1335 = vunpack.c.l.b16 %v1282
      %v1336 = vpack.c.b16 %v1321, %v1320
      %v1337 = vpack.c.b16 %v1323, %v1322
      %v1338 = vpack.c.b16 %v1325, %v1324
      %v1339 = vpack.c.b16 %v1327, %v1326
      %v1340 = vpack.c.b16 %v1329, %v1328
      %v1341 = vpack.c.b16 %v1331, %v1330
      %v1342 = vpack.c.b16 %v1333, %v1332
      %v1343 = vpack.c.b16 %v1335, %v1334
      %1352 = vmatprep.subr.bf16.mxu0 0
      %1353 = vmatpush1.bf16.msra.mxu0 %v1336
      %1354 = vmatprep.subr.bf16.mxu0 0
      %1355 = vmatpush1.bf16.msra.mxu0 %v1337
      %1356 = vmatprep.subr.bf16.mxu0 0
      %1357 = vmatpush1.bf16.msra.mxu0 %v1338
      %1358 = vmatprep.subr.bf16.mxu0 0
      %1359 = vmatpush1.bf16.msra.mxu0 %v1339
      %1360 = vmatprep.subr.bf16.mxu0 0
      %1361 = vmatpush1.bf16.msra.mxu0 %v1340
      %1362 = vmatprep.subr.bf16.mxu0 0
      %1363 = vmatpush1.bf16.msra.mxu0 %v1341
      %1364 = vmatprep.subr.bf16.mxu0 0
      %1365 = vmatpush1.bf16.msra.mxu0 %v1342
      %1366 = vmatprep.subr.bf16.mxu0 0
      %1367 = vmatpush1.bf16.msra.mxu0 %v1343
      %1368 = vmatprep.subr.bf16.mxu0 0
      %1369 = vmatpush1.bf16.msra.mxu0 0
      %1370 = vmatprep.subr.bf16.mxu0 0
      %1371 = vmatpush1.bf16.msra.mxu0 0
      %1372 = vmatprep.subr.bf16.mxu0 0
      %1373 = vmatpush1.bf16.msra.mxu0 0
      %1374 = vmatprep.subr.bf16.mxu0 0
      %1375 = vmatpush1.bf16.msra.mxu0 0
      %1376 = vmatprep.subr.bf16.mxu0 0
      %1377 = vmatpush1.bf16.msra.mxu0 0
      %1378 = vmatprep.subr.bf16.mxu0 0
      %1379 = vmatpush1.bf16.msra.mxu0 0
      %1380 = vmatprep.subr.bf16.mxu0 0
      %1381 = vmatpush1.bf16.msra.mxu0 0
      %1382 = vmatprep.subr.bf16.mxu0 0
      %1383 = vmatpush1.bf16.msra.mxu0 0
      %1384 = vmatprep.mubr.bf16.mxu0 0
      %1385 = vmatmul.mubr.bf16.gmra.mrb[0].mxu0 %v1302
      %v1386 = vpop.f32.mrb[0].mxu0
      %v1387 = vadd.f32 0.0, %v1386
      %v1388 = vpop.f32.mrb[0].mxu0
      %v1389 = vpop.f32.mrb[0].mxu0
      %v1390 = vadd.f32 0.0, %v1389
      %v1391 = vpop.f32.mrb[0].mxu0
      %1392 = vdwg.mxu0
      %v1393 = vadd.f32 %v1261, %v1387
      %v1394 = vadd.f32 %v1262, %v1390
      %v1395 = vld [vmem:[%s165 + $0x4] sm:$0xe]
      %s1396 = scalar_lea.vmem %s1, 640
      %v1397 = vld [vmem:[%s1396] sm:$0xf]
      %v1398 = vld [vmem:[%s1396 + $0x4] sm:$0xf]
      %v1399 = vld [vmem:[%s1396 + $0x8] sm:$0xf]
      %v1400 = vld [vmem:[%s1396 + $0xc] sm:$0xf]
      %v1401 = vld [vmem:[%s1396 + $0x10] sm:$0xf]
      %v1402 = vld [vmem:[%s1396 + $0x14] sm:$0xf]
      %v1403 = vld [vmem:[%s1396 + $0x18] sm:$0xf]
      %v1404 = vld [vmem:[%s1396 + $0x1c] sm:$0xf]
      %v1405 = vld [vmem:[%s1396 + $0x20] sm:$0xf]
      %v1406 = vld [vmem:[%s1396 + $0x24] sm:$0xf]
      %v1407 = vld [vmem:[%s1396 + $0x28] sm:$0xf]
      %v1408 = vld [vmem:[%s1396 + $0x2c] sm:$0xf]
      %v1409 = vld [vmem:[%s1396 + $0x30] sm:$0xf]
      %v1410 = vld [vmem:[%s1396 + $0x34] sm:$0xf]
      %v1411 = vld [vmem:[%s1396 + $0x38] sm:$0xf]
      %v1412 = vld [vmem:[%s1396 + $0x3c] sm:$0xf]
      %v1414 = vunpack.c.l.b16 %v1395
      %v1415 = vpack.c.b16 %v1287, %v1414
      %v1416 = vrot.slane %v1415, 1
      %v1417 = vrot.slane %v1290, 1
      %v1418 = vsel %vm430, %v1416, %v1417
      %v1436 = vunpack.c.l.b16 %v1397
      %v1437 = vunpack.c.l.b16 %v1398
      %v1438 = vunpack.c.l.b16 %v1399
      %v1439 = vunpack.c.l.b16 %v1400
      %v1440 = vunpack.c.l.b16 %v1401
      %v1441 = vunpack.c.l.b16 %v1402
      %v1442 = vunpack.c.l.b16 %v1403
      %v1443 = vunpack.c.l.b16 %v1404
      %v1444 = vunpack.c.l.b16 %v1405
      %v1445 = vunpack.c.l.b16 %v1406
      %v1446 = vunpack.c.l.b16 %v1407
      %v1447 = vunpack.c.l.b16 %v1408
      %v1448 = vunpack.c.l.b16 %v1409
      %v1449 = vunpack.c.l.b16 %v1410
      %v1450 = vunpack.c.l.b16 %v1411
      %v1451 = vunpack.c.l.b16 %v1412
      %v1452 = vpack.c.b16 %v1437, %v1436
      %v1453 = vpack.c.b16 %v1439, %v1438
      %v1454 = vpack.c.b16 %v1441, %v1440
      %v1455 = vpack.c.b16 %v1443, %v1442
      %v1456 = vpack.c.b16 %v1445, %v1444
      %v1457 = vpack.c.b16 %v1447, %v1446
      %v1458 = vpack.c.b16 %v1449, %v1448
      %v1459 = vpack.c.b16 %v1451, %v1450
      %1468 = vmatprep.subr.bf16.mxu0 0
      %1469 = vmatpush1.bf16.msra.mxu0 %v1452
      %1470 = vmatprep.subr.bf16.mxu0 0
      %1471 = vmatpush1.bf16.msra.mxu0 %v1453
      %1472 = vmatprep.subr.bf16.mxu0 0
      %1473 = vmatpush1.bf16.msra.mxu0 %v1454
      %1474 = vmatprep.subr.bf16.mxu0 0
      %1475 = vmatpush1.bf16.msra.mxu0 %v1455
      %1476 = vmatprep.subr.bf16.mxu0 0
      %1477 = vmatpush1.bf16.msra.mxu0 %v1456
      %1478 = vmatprep.subr.bf16.mxu0 0
      %1479 = vmatpush1.bf16.msra.mxu0 %v1457
      %1480 = vmatprep.subr.bf16.mxu0 0
      %1481 = vmatpush1.bf16.msra.mxu0 %v1458
      %1482 = vmatprep.subr.bf16.mxu0 0
      %1483 = vmatpush1.bf16.msra.mxu0 %v1459
      %1484 = vmatprep.subr.bf16.mxu0 0
      %1485 = vmatpush1.bf16.msra.mxu0 0
      %1486 = vmatprep.subr.bf16.mxu0 0
      %1487 = vmatpush1.bf16.msra.mxu0 0
      %1488 = vmatprep.subr.bf16.mxu0 0
      %1489 = vmatpush1.bf16.msra.mxu0 0
      %1490 = vmatprep.subr.bf16.mxu0 0
      %1491 = vmatpush1.bf16.msra.mxu0 0
      %1492 = vmatprep.subr.bf16.mxu0 0
      %1493 = vmatpush1.bf16.msra.mxu0 0
      %1494 = vmatprep.subr.bf16.mxu0 0
      %1495 = vmatpush1.bf16.msra.mxu0 0
      %1496 = vmatprep.subr.bf16.mxu0 0
      %1497 = vmatpush1.bf16.msra.mxu0 0
      %1498 = vmatprep.subr.bf16.mxu0 0
      %1499 = vmatpush1.bf16.msra.mxu0 0
      %1500 = vmatprep.mubr.bf16.mxu0 0
      %1501 = vmatmul.mubr.bf16.gmra.mrb[0].mxu0 %v1418
      %v1502 = vpop.f32.mrb[0].mxu0
      %v1503 = vadd.f32 0.0, %v1502
      %v1504 = vpop.f32.mrb[0].mxu0
      %v1505 = vpop.f32.mrb[0].mxu0
      %v1506 = vadd.f32 0.0, %v1505
      %v1507 = vpop.f32.mrb[0].mxu0
      %1508 = vdwg.mxu0
      %v1509 = vadd.f32 %v1393, %v1503
      %v1510 = vadd.f32 %v1394, %v1506
      %v1511 = vld [vmem:[%s165 + $0xc] sm:$0x3]
      %s1512 = scalar_lea.vmem %s1, 704
      %v1513 = vld [vmem:[%s1512] sm:$0xf]
      %v1514 = vld [vmem:[%s1512 + $0x4] sm:$0xf]
      %v1515 = vld [vmem:[%s1512 + $0x8] sm:$0xf]
      %v1516 = vld [vmem:[%s1512 + $0xc] sm:$0xf]
      %v1517 = vld [vmem:[%s1512 + $0x10] sm:$0xf]
      %v1518 = vld [vmem:[%s1512 + $0x14] sm:$0xf]
      %v1519 = vld [vmem:[%s1512 + $0x18] sm:$0xf]
      %v1520 = vld [vmem:[%s1512 + $0x1c] sm:$0xf]
      %v1521 = vld [vmem:[%s1512 + $0x20] sm:$0xf]
      %v1522 = vld [vmem:[%s1512 + $0x24] sm:$0xf]
      %v1523 = vld [vmem:[%s1512 + $0x28] sm:$0xf]
      %v1524 = vld [vmem:[%s1512 + $0x2c] sm:$0xf]
      %v1525 = vld [vmem:[%s1512 + $0x30] sm:$0xf]
      %v1526 = vld [vmem:[%s1512 + $0x34] sm:$0xf]
      %v1527 = vld [vmem:[%s1512 + $0x38] sm:$0xf]
      %v1528 = vld [vmem:[%s1512 + $0x3c] sm:$0xf]
      %v1530 = vunpack.c.l.b16 %v1511
      %v1531 = vpack.c.b16 %v1530, %v1530
      %v1533 = vshrl.u32 %v1415, 16
      %v1535 = vrot.slane %v1533, 1
      %v1536 = vshll.u32 %v1415, 16
      %v1538 = vrot.slane %v1536, 2
      %v1539 = vor.u32 %v1535, %v1538
      %v1541 = vshrl.u32 %v1531, 16
      %v1543 = vrot.slane %v1541, 1
      %v1544 = vshll.u32 %v1531, 16
      %v1546 = vrot.slane %v1544, 2
      %v1547 = vor.u32 %v1543, %v1546
      %v1548 = vsel %vm547, %v1539, %v1547
      %v1566 = vunpack.c.l.b16 %v1513
      %v1567 = vunpack.c.l.b16 %v1514
      %v1568 = vunpack.c.l.b16 %v1515
      %v1569 = vunpack.c.l.b16 %v1516
      %v1570 = vunpack.c.l.b16 %v1517
      %v1571 = vunpack.c.l.b16 %v1518
      %v1572 = vunpack.c.l.b16 %v1519
      %v1573 = vunpack.c.l.b16 %v1520
      %v1574 = vunpack.c.l.b16 %v1521
      %v1575 = vunpack.c.l.b16 %v1522
      %v1576 = vunpack.c.l.b16 %v1523
      %v1577 = vunpack.c.l.b16 %v1524
      %v1578 = vunpack.c.l.b16 %v1525
      %v1579 = vunpack.c.l.b16 %v1526
      %v1580 = vunpack.c.l.b16 %v1527
      %v1581 = vunpack.c.l.b16 %v1528
      %v1582 = vpack.c.b16 %v1567, %v1566
      %v1583 = vpack.c.b16 %v1569, %v1568
      %v1584 = vpack.c.b16 %v1571, %v1570
      %v1585 = vpack.c.b16 %v1573, %v1572
      %v1586 = vpack.c.b16 %v1575, %v1574
      %v1587 = vpack.c.b16 %v1577, %v1576
      %v1588 = vpack.c.b16 %v1579, %v1578
      %v1589 = vpack.c.b16 %v1581, %v1580
      %1598 = vmatprep.subr.bf16.mxu0 0
      %1599 = vmatpush1.bf16.msra.mxu0 %v1582
      %1600 = vmatprep.subr.bf16.mxu0 0
      %1601 = vmatpush1.bf16.msra.mxu0 %v1583
      %1602 = vmatprep.subr.bf16.mxu0 0
      %1603 = vmatpush1.bf16.msra.mxu0 %v1584
      %1604 = vmatprep.subr.bf16.mxu0 0
      %1605 = vmatpush1.bf16.msra.mxu0 %v1585
      %1606 = vmatprep.subr.bf16.mxu0 0
      %1607 = vmatpush1.bf16.msra.mxu0 %v1586
      %1608 = vmatprep.subr.bf16.mxu0 0
      %1609 = vmatpush1.bf16.msra.mxu0 %v1587
      %1610 = vmatprep.subr.bf16.mxu0 0
      %1611 = vmatpush1.bf16.msra.mxu0 %v1588
      %1612 = vmatprep.subr.bf16.mxu0 0
      %1613 = vmatpush1.bf16.msra.mxu0 %v1589
      %1614 = vmatprep.subr.bf16.mxu0 0
      %1615 = vmatpush1.bf16.msra.mxu0 0
      %1616 = vmatprep.subr.bf16.mxu0 0
      %1617 = vmatpush1.bf16.msra.mxu0 0
      %1618 = vmatprep.subr.bf16.mxu0 0
      %1619 = vmatpush1.bf16.msra.mxu0 0
      %1620 = vmatprep.subr.bf16.mxu0 0
      %1621 = vmatpush1.bf16.msra.mxu0 0
      %1622 = vmatprep.subr.bf16.mxu0 0
      %1623 = vmatpush1.bf16.msra.mxu0 0
      %1624 = vmatprep.subr.bf16.mxu0 0
      %1625 = vmatpush1.bf16.msra.mxu0 0
      %1626 = vmatprep.subr.bf16.mxu0 0
      %1627 = vmatpush1.bf16.msra.mxu0 0
      %1628 = vmatprep.subr.bf16.mxu0 0
      %1629 = vmatpush1.bf16.msra.mxu0 0
      %1630 = vmatprep.mubr.bf16.mxu0 0
      %1631 = vmatmul.mubr.bf16.gmra.mrb[0].mxu0 %v1548
      %v1632 = vpop.f32.mrb[0].mxu0
      %v1633 = vadd.f32 0.0, %v1632
      %v1634 = vpop.f32.mrb[0].mxu0
      %v1635 = vpop.f32.mrb[0].mxu0
      %v1636 = vadd.f32 0.0, %v1635
      %v1637 = vpop.f32.mrb[0].mxu0
      %1638 = vdwg.mxu0
      %v1639 = vadd.f32 %v1509, %v1633
      %v1640 = vadd.f32 %v1510, %v1636
      %v1641 = vld [vmem:[%s165 + $0x4] sm:$0xc]
      %s1642 = scalar_lea.vmem %s1, 768
      %v1643 = vld [vmem:[%s1642] sm:$0xf]
      %v1644 = vld [vmem:[%s1642 + $0x4] sm:$0xf]
      %v1645 = vld [vmem:[%s1642 + $0x8] sm:$0xf]
      %v1646 = vld [vmem:[%s1642 + $0xc] sm:$0xf]
      %v1647 = vld [vmem:[%s1642 + $0x10] sm:$0xf]
      %v1648 = vld [vmem:[%s1642 + $0x14] sm:$0xf]
      %v1649 = vld [vmem:[%s1642 + $0x18] sm:$0xf]
      %v1650 = vld [vmem:[%s1642 + $0x1c] sm:$0xf]
      %v1651 = vld [vmem:[%s1642 + $0x20] sm:$0xf]
      %v1652 = vld [vmem:[%s1642 + $0x24] sm:$0xf]
      %v1653 = vld [vmem:[%s1642 + $0x28] sm:$0xf]
      %v1654 = vld [vmem:[%s1642 + $0x2c] sm:$0xf]
      %v1655 = vld [vmem:[%s1642 + $0x30] sm:$0xf]
      %v1656 = vld [vmem:[%s1642 + $0x34] sm:$0xf]
      %v1657 = vld [vmem:[%s1642 + $0x38] sm:$0xf]
      %v1658 = vld [vmem:[%s1642 + $0x3c] sm:$0xf]
      %v1660 = vunpack.c.l.b16 %v1641
      %v1661 = vpack.c.b16 %v1287, %v1660
      %v1662 = vrot.slane %v1661, 2
      %v1663 = vrot.slane %v1531, 2
      %v1664 = vsel %vm678, %v1662, %v1663
      %v1682 = vunpack.c.l.b16 %v1643
      %v1683 = vunpack.c.l.b16 %v1644
      %v1684 = vunpack.c.l.b16 %v1645
      %v1685 = vunpack.c.l.b16 %v1646
      %v1686 = vunpack.c.l.b16 %v1647
      %v1687 = vunpack.c.l.b16 %v1648
      %v1688 = vunpack.c.l.b16 %v1649
      %v1689 = vunpack.c.l.b16 %v1650
      %v1690 = vunpack.c.l.b16 %v1651
      %v1691 = vunpack.c.l.b16 %v1652
      %v1692 = vunpack.c.l.b16 %v1653
      %v1693 = vunpack.c.l.b16 %v1654
      %v1694 = vunpack.c.l.b16 %v1655
      %v1695 = vunpack.c.l.b16 %v1656
      %v1696 = vunpack.c.l.b16 %v1657
      %v1697 = vunpack.c.l.b16 %v1658
      %v1698 = vpack.c.b16 %v1683, %v1682
      %v1699 = vpack.c.b16 %v1685, %v1684
      %v1700 = vpack.c.b16 %v1687, %v1686
      %v1701 = vpack.c.b16 %v1689, %v1688
      %v1702 = vpack.c.b16 %v1691, %v1690
      %v1703 = vpack.c.b16 %v1693, %v1692
      %v1704 = vpack.c.b16 %v1695, %v1694
      %v1705 = vpack.c.b16 %v1697, %v1696
      %1714 = vmatprep.subr.bf16.mxu0 0
      %1715 = vmatpush1.bf16.msra.mxu0 %v1698
      %1716 = vmatprep.subr.bf16.mxu0 0
      %1717 = vmatpush1.bf16.msra.mxu0 %v1699
      %1718 = vmatprep.subr.bf16.mxu0 0
      %1719 = vmatpush1.bf16.msra.mxu0 %v1700
      %1720 = vmatprep.subr.bf16.mxu0 0
      %1721 = vmatpush1.bf16.msra.mxu0 %v1701
      %1722 = vmatprep.subr.bf16.mxu0 0
      %1723 = vmatpush1.bf16.msra.mxu0 %v1702
      %1724 = vmatprep.subr.bf16.mxu0 0
      %1725 = vmatpush1.bf16.msra.mxu0 %v1703
      %1726 = vmatprep.subr.bf16.mxu0 0
      %1727 = vmatpush1.bf16.msra.mxu0 %v1704
      %1728 = vmatprep.subr.bf16.mxu0 0
      %1729 = vmatpush1.bf16.msra.mxu0 %v1705
      %1730 = vmatprep.subr.bf16.mxu0 0
      %1731 = vmatpush1.bf16.msra.mxu0 0
      %1732 = vmatprep.subr.bf16.mxu0 0
      %1733 = vmatpush1.bf16.msra.mxu0 0
      %1734 = vmatprep.subr.bf16.mxu0 0
      %1735 = vmatpush1.bf16.msra.mxu0 0
      %1736 = vmatprep.subr.bf16.mxu0 0
      %1737 = vmatpush1.bf16.msra.mxu0 0
      %1738 = vmatprep.subr.bf16.mxu0 0
      %1739 = vmatpush1.bf16.msra.mxu0 0
      %1740 = vmatprep.subr.bf16.mxu0 0
      %1741 = vmatpush1.bf16.msra.mxu0 0
      %1742 = vmatprep.subr.bf16.mxu0 0
      %1743 = vmatpush1.bf16.msra.mxu0 0
      %1744 = vmatprep.subr.bf16.mxu0 0
      %1745 = vmatpush1.bf16.msra.mxu0 0
      %1746 = vmatprep.mubr.bf16.mxu0 0
      %1747 = vmatmul.mubr.bf16.gmra.mrb[0].mxu0 %v1664
      %v1748 = vpop.f32.mrb[0].mxu0
      %v1749 = vadd.f32 0.0, %v1748
      %v1750 = vpop.f32.mrb[0].mxu0
      %v1751 = vpop.f32.mrb[0].mxu0
      %v1752 = vadd.f32 0.0, %v1751
      %v1753 = vpop.f32.mrb[0].mxu0
      %1754 = vdwg.mxu0
      %v1755 = vadd.f32 %v1639, %v1749
      %v1756 = vadd.f32 %v1640, %v1752
      %v1757 = vld [vmem:[%s165 + $0xc] sm:$0x7]
      %s1758 = scalar_lea.vmem %s1, 832
      %v1759 = vld [vmem:[%s1758] sm:$0xf]
      %v1760 = vld [vmem:[%s1758 + $0x4] sm:$0xf]
      %v1761 = vld [vmem:[%s1758 + $0x8] sm:$0xf]
      %v1762 = vld [vmem:[%s1758 + $0xc] sm:$0xf]
      %v1763 = vld [vmem:[%s1758 + $0x10] sm:$0xf]
      %v1764 = vld [vmem:[%s1758 + $0x14] sm:$0xf]
      %v1765 = vld [vmem:[%s1758 + $0x18] sm:$0xf]
      %v1766 = vld [vmem:[%s1758 + $0x1c] sm:$0xf]
      %v1767 = vld [vmem:[%s1758 + $0x20] sm:$0xf]
      %v1768 = vld [vmem:[%s1758 + $0x24] sm:$0xf]
      %v1769 = vld [vmem:[%s1758 + $0x28] sm:$0xf]
      %v1770 = vld [vmem:[%s1758 + $0x2c] sm:$0xf]
      %v1771 = vld [vmem:[%s1758 + $0x30] sm:$0xf]
      %v1772 = vld [vmem:[%s1758 + $0x34] sm:$0xf]
      %v1773 = vld [vmem:[%s1758 + $0x38] sm:$0xf]
      %v1774 = vld [vmem:[%s1758 + $0x3c] sm:$0xf]
      %v1776 = vunpack.c.l.b16 %v1757
      %v1777 = vpack.c.b16 %v1776, %v1776
      %v1779 = vshrl.u32 %v1661, 16
      %v1781 = vrot.slane %v1779, 2
      %v1782 = vshll.u32 %v1661, 16
      %v1784 = vrot.slane %v1782, 3
      %v1785 = vor.u32 %v1781, %v1784
      %v1787 = vshrl.u32 %v1777, 16
      %v1789 = vrot.slane %v1787, 2
      %v1790 = vshll.u32 %v1777, 16
      %v1792 = vrot.slane %v1790, 3
      %v1793 = vor.u32 %v1789, %v1792
      %v1794 = vsel %vm795, %v1785, %v1793
      %v1812 = vunpack.c.l.b16 %v1759
      %v1813 = vunpack.c.l.b16 %v1760
      %v1814 = vunpack.c.l.b16 %v1761
      %v1815 = vunpack.c.l.b16 %v1762
      %v1816 = vunpack.c.l.b16 %v1763
      %v1817 = vunpack.c.l.b16 %v1764
      %v1818 = vunpack.c.l.b16 %v1765
      %v1819 = vunpack.c.l.b16 %v1766
      %v1820 = vunpack.c.l.b16 %v1767
      %v1821 = vunpack.c.l.b16 %v1768
      %v1822 = vunpack.c.l.b16 %v1769
      %v1823 = vunpack.c.l.b16 %v1770
      %v1824 = vunpack.c.l.b16 %v1771
      %v1825 = vunpack.c.l.b16 %v1772
      %v1826 = vunpack.c.l.b16 %v1773
      %v1827 = vunpack.c.l.b16 %v1774
      %v1828 = vpack.c.b16 %v1813, %v1812
      %v1829 = vpack.c.b16 %v1815, %v1814
      %v1830 = vpack.c.b16 %v1817, %v1816
      %v1831 = vpack.c.b16 %v1819, %v1818
      %v1832 = vpack.c.b16 %v1821, %v1820
      %v1833 = vpack.c.b16 %v1823, %v1822
      %v1834 = vpack.c.b16 %v1825, %v1824
      %v1835 = vpack.c.b16 %v1827, %v1826
      %1844 = vmatprep.subr.bf16.mxu0 0
      %1845 = vmatpush1.bf16.msra.mxu0 %v1828
      %1846 = vmatprep.subr.bf16.mxu0 0
      %1847 = vmatpush1.bf16.msra.mxu0 %v1829
      %1848 = vmatprep.subr.bf16.mxu0 0
      %1849 = vmatpush1.bf16.msra.mxu0 %v1830
      %1850 = vmatprep.subr.bf16.mxu0 0
      %1851 = vmatpush1.bf16.msra.mxu0 %v1831
      %1852 = vmatprep.subr.bf16.mxu0 0
      %1853 = vmatpush1.bf16.msra.mxu0 %v1832
      %1854 = vmatprep.subr.bf16.mxu0 0
      %1855 = vmatpush1.bf16.msra.mxu0 %v1833
      %1856 = vmatprep.subr.bf16.mxu0 0
      %1857 = vmatpush1.bf16.msra.mxu0 %v1834
      %1858 = vmatprep.subr.bf16.mxu0 0
      %1859 = vmatpush1.bf16.msra.mxu0 %v1835
      %1860 = vmatprep.subr.bf16.mxu0 0
      %1861 = vmatpush1.bf16.msra.mxu0 0
      %1862 = vmatprep.subr.bf16.mxu0 0
      %1863 = vmatpush1.bf16.msra.mxu0 0
      %1864 = vmatprep.subr.bf16.mxu0 0
      %1865 = vmatpush1.bf16.msra.mxu0 0
      %1866 = vmatprep.subr.bf16.mxu0 0
      %1867 = vmatpush1.bf16.msra.mxu0 0
      %1868 = vmatprep.subr.bf16.mxu0 0
      %1869 = vmatpush1.bf16.msra.mxu0 0
      %1870 = vmatprep.subr.bf16.mxu0 0
      %1871 = vmatpush1.bf16.msra.mxu0 0
      %1872 = vmatprep.subr.bf16.mxu0 0
      %1873 = vmatpush1.bf16.msra.mxu0 0
      %1874 = vmatprep.subr.bf16.mxu0 0
      %1875 = vmatpush1.bf16.msra.mxu0 0
      %1876 = vmatprep.mubr.bf16.mxu0 0
      %1877 = vmatmul.mubr.bf16.gmra.mrb[0].mxu0 %v1794
      %v1878 = vpop.f32.mrb[0].mxu0
      %v1879 = vadd.f32 0.0, %v1878
      %v1880 = vpop.f32.mrb[0].mxu0
      %v1881 = vpop.f32.mrb[0].mxu0
      %v1882 = vadd.f32 0.0, %v1881
      %v1883 = vpop.f32.mrb[0].mxu0
      %1884 = vdwg.mxu0
      %v1885 = vadd.f32 %v1755, %v1879
      %v1886 = vadd.f32 %v1756, %v1882
      %v1887 = vld [vmem:[%s165 + $0x4] sm:$0x8]
      %s1888 = scalar_lea.vmem %s1, 896
      %v1889 = vld [vmem:[%s1888] sm:$0xf]
      %v1890 = vld [vmem:[%s1888 + $0x4] sm:$0xf]
      %v1891 = vld [vmem:[%s1888 + $0x8] sm:$0xf]
      %v1892 = vld [vmem:[%s1888 + $0xc] sm:$0xf]
      %v1893 = vld [vmem:[%s1888 + $0x10] sm:$0xf]
      %v1894 = vld [vmem:[%s1888 + $0x14] sm:$0xf]
      %v1895 = vld [vmem:[%s1888 + $0x18] sm:$0xf]
      %v1896 = vld [vmem:[%s1888 + $0x1c] sm:$0xf]
      %v1897 = vld [vmem:[%s1888 + $0x20] sm:$0xf]
      %v1898 = vld [vmem:[%s1888 + $0x24] sm:$0xf]
      %v1899 = vld [vmem:[%s1888 + $0x28] sm:$0xf]
      %v1900 = vld [vmem:[%s1888 + $0x2c] sm:$0xf]
      %v1901 = vld [vmem:[%s1888 + $0x30] sm:$0xf]
      %v1902 = vld [vmem:[%s1888 + $0x34] sm:$0xf]
      %v1903 = vld [vmem:[%s1888 + $0x38] sm:$0xf]
      %v1904 = vld [vmem:[%s1888 + $0x3c] sm:$0xf]
      %v1906 = vunpack.c.l.b16 %v1887
      %v1907 = vpack.c.b16 %v1287, %v1906
      %v1908 = vrot.slane %v1907, 3
      %v1909 = vrot.slane %v1777, 3
      %v1910 = vsel %vm926, %v1908, %v1909
      %v1928 = vunpack.c.l.b16 %v1889
      %v1929 = vunpack.c.l.b16 %v1890
      %v1930 = vunpack.c.l.b16 %v1891
      %v1931 = vunpack.c.l.b16 %v1892
      %v1932 = vunpack.c.l.b16 %v1893
      %v1933 = vunpack.c.l.b16 %v1894
      %v1934 = vunpack.c.l.b16 %v1895
      %v1935 = vunpack.c.l.b16 %v1896
      %v1936 = vunpack.c.l.b16 %v1897
      %v1937 = vunpack.c.l.b16 %v1898
      %v1938 = vunpack.c.l.b16 %v1899
      %v1939 = vunpack.c.l.b16 %v1900
      %v1940 = vunpack.c.l.b16 %v1901
      %v1941 = vunpack.c.l.b16 %v1902
      %v1942 = vunpack.c.l.b16 %v1903
      %v1943 = vunpack.c.l.b16 %v1904
      %v1944 = vpack.c.b16 %v1929, %v1928
      %v1945 = vpack.c.b16 %v1931, %v1930
      %v1946 = vpack.c.b16 %v1933, %v1932
      %v1947 = vpack.c.b16 %v1935, %v1934
      %v1948 = vpack.c.b16 %v1937, %v1936
      %v1949 = vpack.c.b16 %v1939, %v1938
      %v1950 = vpack.c.b16 %v1941, %v1940
      %v1951 = vpack.c.b16 %v1943, %v1942
      %1960 = vmatprep.subr.bf16.mxu0 0
      %1961 = vmatpush1.bf16.msra.mxu0 %v1944
      %1962 = vmatprep.subr.bf16.mxu0 0
      %1963 = vmatpush1.bf16.msra.mxu0 %v1945
      %1964 = vmatprep.subr.bf16.mxu0 0
      %1965 = vmatpush1.bf16.msra.mxu0 %v1946
      %1966 = vmatprep.subr.bf16.mxu0 0
      %1967 = vmatpush1.bf16.msra.mxu0 %v1947
      %1968 = vmatprep.subr.bf16.mxu0 0
      %1969 = vmatpush1.bf16.msra.mxu0 %v1948
      %1970 = vmatprep.subr.bf16.mxu0 0
      %1971 = vmatpush1.bf16.msra.mxu0 %v1949
      %1972 = vmatprep.subr.bf16.mxu0 0
      %1973 = vmatpush1.bf16.msra.mxu0 %v1950
      %1974 = vmatprep.subr.bf16.mxu0 0
      %1975 = vmatpush1.bf16.msra.mxu0 %v1951
      %1976 = vmatprep.subr.bf16.mxu0 0
      %1977 = vmatpush1.bf16.msra.mxu0 0
      %1978 = vmatprep.subr.bf16.mxu0 0
      %1979 = vmatpush1.bf16.msra.mxu0 0
      %1980 = vmatprep.subr.bf16.mxu0 0
      %1981 = vmatpush1.bf16.msra.mxu0 0
      %1982 = vmatprep.subr.bf16.mxu0 0
      %1983 = vmatpush1.bf16.msra.mxu0 0
      %1984 = vmatprep.subr.bf16.mxu0 0
      %1985 = vmatpush1.bf16.msra.mxu0 0
      %1986 = vmatprep.subr.bf16.mxu0 0
      %1987 = vmatpush1.bf16.msra.mxu0 0
      %1988 = vmatprep.subr.bf16.mxu0 0
      %1989 = vmatpush1.bf16.msra.mxu0 0
      %1990 = vmatprep.subr.bf16.mxu0 0
      %1991 = vmatpush1.bf16.msra.mxu0 0
      %1992 = vmatprep.mubr.bf16.mxu0 0
      %1993 = vmatmul.mubr.bf16.gmra.mrb[0].mxu0 %v1910
      %v1994 = vpop.f32.mrb[0].mxu0
      %v1995 = vadd.f32 0.0, %v1994
      %v1996 = vpop.f32.mrb[0].mxu0
      %v1997 = vpop.f32.mrb[0].mxu0
      %v1998 = vadd.f32 0.0, %v1997
      %v1999 = vpop.f32.mrb[0].mxu0
      %2000 = vdwg.mxu0
      %v2001 = vadd.f32 %v1885, %v1995
      %v2002 = vadd.f32 %v1886, %v1998
      %v2003 = vld [vmem:[%s165 + $0xc] sm:$0xf]
      %s2004 = scalar_lea.vmem %s1, 960
      %v2005 = vld [vmem:[%s2004] sm:$0xf]
      %v2006 = vld [vmem:[%s2004 + $0x4] sm:$0xf]
      %v2007 = vld [vmem:[%s2004 + $0x8] sm:$0xf]
      %v2008 = vld [vmem:[%s2004 + $0xc] sm:$0xf]
      %v2009 = vld [vmem:[%s2004 + $0x10] sm:$0xf]
      %v2010 = vld [vmem:[%s2004 + $0x14] sm:$0xf]
      %v2011 = vld [vmem:[%s2004 + $0x18] sm:$0xf]
      %v2012 = vld [vmem:[%s2004 + $0x1c] sm:$0xf]
      %v2013 = vld [vmem:[%s2004 + $0x20] sm:$0xf]
      %v2014 = vld [vmem:[%s2004 + $0x24] sm:$0xf]
      %v2015 = vld [vmem:[%s2004 + $0x28] sm:$0xf]
      %v2016 = vld [vmem:[%s2004 + $0x2c] sm:$0xf]
      %v2017 = vld [vmem:[%s2004 + $0x30] sm:$0xf]
      %v2018 = vld [vmem:[%s2004 + $0x34] sm:$0xf]
      %v2019 = vld [vmem:[%s2004 + $0x38] sm:$0xf]
      %v2020 = vld [vmem:[%s2004 + $0x3c] sm:$0xf]
      %v2022 = vunpack.c.l.b16 %v2003
      %v2023 = vpack.c.b16 %v2022, %v2022
      %v2025 = vshrl.u32 %v1907, 16
      %v2027 = vrot.slane %v2025, 3
      %v2028 = vshll.u32 %v1907, 16
      %v2030 = vrot.slane %v2028, 4
      %v2031 = vor.u32 %v2027, %v2030
      %v2033 = vshrl.u32 %v2023, 16
      %v2035 = vrot.slane %v2033, 3
      %v2036 = vshll.u32 %v2023, 16
      %v2038 = vrot.slane %v2036, 4
      %v2039 = vor.u32 %v2035, %v2038
      %v2040 = vsel %vm1043, %v2031, %v2039
      %v2058 = vunpack.c.l.b16 %v2005
      %v2059 = vunpack.c.l.b16 %v2006
      %v2060 = vunpack.c.l.b16 %v2007
      %v2061 = vunpack.c.l.b16 %v2008
      %v2062 = vunpack.c.l.b16 %v2009
      %v2063 = vunpack.c.l.b16 %v2010
      %v2064 = vunpack.c.l.b16 %v2011
      %v2065 = vunpack.c.l.b16 %v2012
      %v2066 = vunpack.c.l.b16 %v2013
      %v2067 = vunpack.c.l.b16 %v2014
      %v2068 = vunpack.c.l.b16 %v2015
      %v2069 = vunpack.c.l.b16 %v2016
      %v2070 = vunpack.c.l.b16 %v2017
      %v2071 = vunpack.c.l.b16 %v2018
      %v2072 = vunpack.c.l.b16 %v2019
      %v2073 = vunpack.c.l.b16 %v2020
      %v2074 = vpack.c.b16 %v2059, %v2058
      %v2075 = vpack.c.b16 %v2061, %v2060
      %v2076 = vpack.c.b16 %v2063, %v2062
      %v2077 = vpack.c.b16 %v2065, %v2064
      %v2078 = vpack.c.b16 %v2067, %v2066
      %v2079 = vpack.c.b16 %v2069, %v2068
      %v2080 = vpack.c.b16 %v2071, %v2070
      %v2081 = vpack.c.b16 %v2073, %v2072
      %2090 = vmatprep.subr.bf16.mxu0 0
      %2091 = vmatpush1.bf16.msra.mxu0 %v2074
      %2092 = vmatprep.subr.bf16.mxu0 0
      %2093 = vmatpush1.bf16.msra.mxu0 %v2075
      %2094 = vmatprep.subr.bf16.mxu0 0
      %2095 = vmatpush1.bf16.msra.mxu0 %v2076
      %2096 = vmatprep.subr.bf16.mxu0 0
      %2097 = vmatpush1.bf16.msra.mxu0 %v2077
      %2098 = vmatprep.subr.bf16.mxu0 0
      %2099 = vmatpush1.bf16.msra.mxu0 %v2078
      %2100 = vmatprep.subr.bf16.mxu0 0
      %2101 = vmatpush1.bf16.msra.mxu0 %v2079
      %2102 = vmatprep.subr.bf16.mxu0 0
      %2103 = vmatpush1.bf16.msra.mxu0 %v2080
      %2104 = vmatprep.subr.bf16.mxu0 0
      %2105 = vmatpush1.bf16.msra.mxu0 %v2081
      %2106 = vmatprep.subr.bf16.mxu0 0
      %2107 = vmatpush1.bf16.msra.mxu0 0
      %2108 = vmatprep.subr.bf16.mxu0 0
      %2109 = vmatpush1.bf16.msra.mxu0 0
      %2110 = vmatprep.subr.bf16.mxu0 0
      %2111 = vmatpush1.bf16.msra.mxu0 0
      %2112 = vmatprep.subr.bf16.mxu0 0
      %2113 = vmatpush1.bf16.msra.mxu0 0
      %2114 = vmatprep.subr.bf16.mxu0 0
      %2115 = vmatpush1.bf16.msra.mxu0 0
      %2116 = vmatprep.subr.bf16.mxu0 0
      %2117 = vmatpush1.bf16.msra.mxu0 0
      %2118 = vmatprep.subr.bf16.mxu0 0
      %2119 = vmatpush1.bf16.msra.mxu0 0
      %2120 = vmatprep.subr.bf16.mxu0 0
      %2121 = vmatpush1.bf16.msra.mxu0 0
      %2122 = vmatprep.mubr.bf16.mxu0 0
      %2123 = vmatmul.mubr.bf16.gmra.mrb[0].mxu0 %v2040
      %v2124 = vpop.f32.mrb[0].mxu0
      %v2125 = vadd.f32 0.0, %v2124
      %v2126 = vpop.f32.mrb[0].mxu0
      %v2127 = vpop.f32.mrb[0].mxu0
      %v2128 = vadd.f32 0.0, %v2127
      %v2129 = vpop.f32.mrb[0].mxu0
      %2130 = vdwg.mxu0
      %v2131 = vadd.f32 %v2001, %v2125
      %v2132 = vadd.f32 %v2002, %v2128
      %v2133 = vld [vmem:[%s2] sm:$0x1]
      %v2135 = vlaneseq
      %v2136 = vshrl.u32 %v2135, 7
      %v2137 = vsub.s32 0, %v2136
      %v2138 = vrot.slane %v2133, %v2137
      %v2140 = vadd.f32 %v2131, %v2138
      %v2141 = vadd.f32 %v2132, %v2138
      %2142 = vst [vmem:[%s170] sm:$0xff] %v2140
      %2143 = vst [vmem:[%s170 + $0x8] sm:$0xff] %v2141
      %p2144 = scmp.lt.s32.totalorder %s14, 1
      %s2145 = scalar_select %p2144, %s14, 1
      %s2146 = smul.addr %s2145, 2
      %s2147 = smul.addr %s2146, 8
      %s2148 = scalar_lea.vmem %s3, %s2147
      // Predicated region
      $region33: #{a_call__.7} parent=31 // pred_check
        %p2149 = pneg %p100
      $region34: #{a_call__.7} parent=31 // pred_check_branch
        %2151 = sbr.rel (%p2149) target = $region36
      $region35: #{a_call__.7} parent=31 // pred_region
        _
      $region36: #{a_call__.7} parent=31 // pred_fallthru
        _
    $region32: #{a_call__.7} parent=5 // pred_fallthru
      _
    %p2152 = scmp.le.s32.totalorder 2, %s9
    // Predicated region
    $region37: #{a_call__.7} parent=5 // pred_check
      %p2153 = pneg %p2152
    $region38: #{a_call__.7} parent=5 // pred_check_branch
      %2155 = sbr.rel (%p2153) target = $region40
    $region39: #{a_call__.7} parent=5 // pred_region
      %s2156 = ssub.s32 %s9, 2
      // Predicated region
      $region41: #{a_call__.7} parent=39 // pred_check
        %p2157 = pneg %p106
      $region42: #{a_call__.7} parent=39 // pred_check_branch
        %2159 = sbr.rel (%p2157) target = $region44
      $region43: #{a_call__.7} parent=39 // pred_region
        %p2160 = scmp.lt.s32.totalorder %s15, 1
        %s2161 = scalar_select %p2160, %s15, 1
        %s2162 = smul.addr %s2161, 2
        %s2163 = smul.addr %s2162, 8
        %s2164 = scalar_lea.vmem %s3, %s2163
      $region44: #{a_call__.7} parent=39 // pred_fallthru
        _
    $region40: #{a_call__.7} parent=5 // pred_fallthru
      _
  $region6: #{a_call__.7} parent=0 // loop_footer
    %s13 = sadd.s32 1, %s9
  $region7: #{a_call__.7} parent=0 // loop_footer_branch
    %8 = sbr.rel target = $region3
  $region8: #{a_call__.7} parent=0 // loop_exit
    _

</llo_original>
